<compile_context>
chip_gen: v5e
topology: v5e:2x2
jax: 0.10.0
libtpu: 0.0.40
codegen_flags: <defaults>
</compile_context>

<pallas_src>
import functools

import jax
import jax.numpy as jnp
from jax.experimental import pallas as pl
from jax.experimental.pallas import tpu as pltpu


# -----------------------------------------------------------------------------
# Helpers
# -----------------------------------------------------------------------------
def _layer_norm(x, gamma, beta, eps=1e-5):
    # nn.LayerNorm over the last dim; elementwise math kept in f32 on the VPU.
    mu = jnp.mean(x, axis=-1, keepdims=True)
    xc = x - mu
    var = jnp.mean(xc * xc, axis=-1, keepdims=True)
    return xc * jax.lax.rsqrt(var + eps) * gamma + beta


def _mm(a, b):
    # 2-D matmul: bf16 operands on the MXU, f32 accumulation.
    return jnp.dot(a.astype(jnp.bfloat16), b.astype(jnp.bfloat16),
                   preferred_element_type=jnp.float32)


_EXACT_GELU = None


def _exact_gelu_supported():
    """Probe (once) whether exact-erf GELU lowers through Mosaic on this TPU."""
    global _EXACT_GELU
    if _EXACT_GELU is None:
        def probe(x_ref, o_ref):
            o_ref[...] = jax.nn.gelu(x_ref[...], approximate=False)
        try:
            xp = jnp.zeros((8, 128), jnp.float32)
            jax.block_until_ready(
                pl.pallas_call(
                    probe,
                    out_shape=jax.ShapeDtypeStruct((8, 128), jnp.float32))(xp))
            _EXACT_GELU = True
        except Exception:
            # TODO(synk): erf does not lower on this Mosaic version; tanh-GELU
            # fallback deviates slightly from nn.GELU()'s exact-erf output.
            _EXACT_GELU = False
    return _EXACT_GELU


def _vmem_limit_bytes():
    # Generation-aware VMEM budget: ~3/4 of physical, capped at 96 MiB.
    # v5e/v6e (128 MiB physical) -> 96 MiB; v7x (64 MiB physical) -> 48 MiB.
    try:
        cap = int(pltpu.get_tpu_info().vmem_capacity_bytes)
    except Exception:
        cap = 64 * 1024 * 1024
    return int(min(cap * 3 // 4, 96 * 1024 * 1024))


def _const_spec(shape, single_buffer):
    # Weight/bias block: constant index map, optionally single-buffered
    # (no point double-buffering operands that never change across the grid).
    index_map = lambda b: (0,) * len(shape)
    if single_buffer:
        try:
            return pl.BlockSpec(shape, index_map,
                                pipeline_mode=pl.Buffered(buffer_count=1))
        except Exception:
            pass
    return pl.BlockSpec(shape, index_map)


# -----------------------------------------------------------------------------
# Kernel (one batch element per grid step)
# -----------------------------------------------------------------------------
def hybrid_transformer_kernel(
    x_ref,                                   # (1, S, D)  f32
    g1_ref, b1_ref,                          # (1, D)     LayerNorm1
    wq_ref, bq_ref,                          # (H, D, hd) bf16, (H, 1, hd) f32
    wk_ref, bk_ref,
    wv_ref, bv_ref,
    wo_ref, bo_ref,                          # (H, hd, D) bf16, (1, D) f32
    g2_ref, b2_ref,                          # (1, D)     LayerNorm2
    w1_ref, bm1_ref,                         # (D, 4D) bf16, (1, 4D) f32
    w2_ref, bm2_ref,                         # (4D, D) bf16, (1, D) f32
    o_ref,                                   # (1, S, D)  f32
    *, n_heads: int, exact_gelu: bool,
):
    S, D = x_ref.shape[1], x_ref.shape[2]
    hd = D // n_heads
    scale = 1.0 / float(hd) ** 0.5
    bf16 = jnp.bfloat16

    x = x_ref[0]                                         # (S, D)

    # ---- LayerNorm 1 ----
    x1 = _layer_norm(x, g1_ref[0], b1_ref[0])

    # ---- head-major Q/K/V projections: one batched MXU einsum each ----
    x1h = jnp.broadcast_to(x1.astype(bf16)[None], (n_heads, S, D))
    q = jnp.einsum("hnd,hde->hne", x1h, wq_ref[...],
                   preferred_element_type=jnp.float32)
    q = (q + bq_ref[...]) * scale            # fold 1/sqrt(hd) into q once
    k = jnp.einsum("hnd,hde->hne", x1h, wk_ref[...],
                   preferred_element_type=jnp.float32) + bk_ref[...]
    v = jnp.einsum("hnd,hde->hne", x1h, wv_ref[...],
                   preferred_element_type=jnp.float32) + bv_ref[...]

    # ---- attention: single batched-over-heads einsum chain ----
    s = jnp.einsum("hqe,hke->hqk", q.astype(bf16), k.astype(bf16),
                   preferred_element_type=jnp.float32)   # (H, S, S)
    s = s - jnp.max(s, axis=-1, keepdims=True)
    p = jnp.exp(s)
    denom = jnp.sum(p, axis=-1, keepdims=True)           # (H, S, 1)
    pv = jnp.einsum("hqk,hke->hqe", p.astype(bf16), v.astype(bf16),
                    preferred_element_type=jnp.float32)  # (H, S, hd)
    pv = pv / denom                                      # exact softmax norm

    # ---- Wo folded per head, reduced into a lane-dense (S, D) slab ----
    attn = jnp.einsum("hqe,hef->hqf", pv.astype(bf16), wo_ref[...],
                      preferred_element_type=jnp.float32)  # (H, S, D)
    attn = jnp.sum(attn, axis=0) + bo_ref[0]               # (S, D)

    # ---- residual 1 (post-LN residual, exactly as in the PyTorch forward) --
    x2 = x1 + attn

    # ---- LayerNorm 2 ----
    x3 = _layer_norm(x2, g2_ref[0], b2_ref[0])

    # ---- MLP: Linear -> GELU -> Linear ----
    h1 = _mm(x3, w1_ref[...]) + bm1_ref[0]
    h1 = jax.nn.gelu(h1, approximate=not exact_gelu)
    h2 = _mm(h1, w2_ref[...]) + bm2_ref[0]

    # ---- residual 2, lane-dense (last dim = D) store ----
    o_ref[0] = x3 + h2


# -----------------------------------------------------------------------------
# Wrapper
# -----------------------------------------------------------------------------
def _prepare_params(params, n_heads):
    (g1, b1, wq, bq, wk, bk, wv, bv, wo, bo, g2, b2, w1, bm1, w2, bm2) = params
    D = wq.shape[0]
    hd = D // n_heads
    bf = lambda w_: w_.astype(jnp.bfloat16)

    def head_major_w(w_):      # (D, D) -> (n_heads, D, hd)  (output-dim split)
        return bf(w_).reshape(D, n_heads, hd).transpose(1, 0, 2)

    def head_major_b(b_):      # (1, D) -> (n_heads, 1, hd)
        return b_.reshape(n_heads, hd)[:, None, :].astype(jnp.float32)

    wo_hm = bf(wo).reshape(n_heads, hd, D)      # input-dim split per head
    return (g1, b1,
            head_major_w(wq), head_major_b(bq),
            head_major_w(wk), head_major_b(bk),
            head_major_w(wv), head_major_b(bv),
            wo_hm, bo,
            g2, b2,
            bf(w1), bm1, bf(w2), bm2)


def _forward(x, params, n_heads, *, exact_gelu, single_buffer):
    B, S, D = x.shape
    H = 4 * D
    hd = D // n_heads
    assert D % n_heads == 0

    dev_params = _prepare_params(params, n_heads)
    cs = functools.partial(_const_spec, single_buffer=single_buffer)

    in_specs = [
        pl.BlockSpec((1, S, D), lambda b: (b, 0, 0)),   # x: one batch elem/step
        cs((1, D)), cs((1, D)),                         # ln1 gamma, beta
        cs((n_heads, D, hd)), cs((n_heads, 1, hd)),     # Wq, bq (head-major)
        cs((n_heads, D, hd)), cs((n_heads, 1, hd)),     # Wk, bk
        cs((n_heads, D, hd)), cs((n_heads, 1, hd)),     # Wv, bv
        cs((n_heads, hd, D)), cs((1, D)),               # Wo (head-major), bo
        cs((1, D)), cs((1, D)),                         # ln2 gamma, beta
        cs((D, H)), cs((1, H)),                         # mlp W1, b1
        cs((H, D)), cs((1, D)),                         # mlp W2, b2
    ]
    out_spec = pl.BlockSpec((1, S, D), lambda b: (b, 0, 0))

    kernel = functools.partial(hybrid_transformer_kernel,
                               n_heads=n_heads, exact_gelu=exact_gelu)

    return pl.pallas_call(
        kernel,
        out_shape=jax.ShapeDtypeStruct((B, S, D), jnp.float32),
        grid=(B,),
        in_specs=in_specs,
        out_specs=out_spec,
        compiler_params=pltpu.CompilerParams(
            dimension_semantics=("parallel",),          # megacore split on v7x
            vmem_limit_bytes=_vmem_limit_bytes()),
    )(x, *dev_params)


def hybrid_transformer(x, params, n_heads, exact_gelu=None):
    if exact_gelu is None:
        exact_gelu = _exact_gelu_supported()
    try:
        return _forward(x, params, n_heads, exact_gelu=exact_gelu,
                        single_buffer=True)
    except Exception:
        # pl.Buffered(1) rejected by this Pallas version/backend: fall back to
        # default double-buffering (only costs extra VMEM at these shapes).
        return _forward(x, params, n_heads, exact_gelu=exact_gelu,
                        single_buffer=False)


# -----------------------------------------------------------------------------
# Pure-JAX reference (same math, incl. bf16 matmul operands)
# -----------------------------------------------------------------------------
def reference(x, params, n_heads, exact_gelu=True):
    (g1, b1, wq, bq, wk, bk, wv, bv, wo, bo, g2, b2, w1, bm1, w2, bm2) = params
    B, S, D = x.shape
    hd = D // n_heads
    scale = 1.0 / float(hd) ** 0.5

    def ln(t, g, bta, eps=1e-5):
        mu = jnp.mean(t, -1, keepdims=True)
        var = jnp.mean((t - mu) ** 2, -1, keepdims=True)
        return (t - mu) / jnp.sqrt(var + eps) * g[0] + bta[0]

    def mm(a, b):
        return jnp.dot(a.astype(jnp.bfloat16), b.astype(jnp.bfloat16),
                       preferred_element_type=jnp.float32)

    x2d = x.reshape(B * S, D)
    x1 = ln(x2d, g1, b1)
    q = (mm(x1, wq) + bq[0]) * scale
    k = mm(x1, wk) + bk[0]
    v = mm(x1, wv) + bv[0]
    q = q.reshape(B, S, n_heads, hd).transpose(0, 2, 1, 3)
    k = k.reshape(B, S, n_heads, hd).transpose(0, 2, 1, 3)
    v = v.reshape(B, S, n_heads, hd).transpose(0, 2, 1, 3)
    s = jnp.einsum("bhqd,bhkd->bhqk", q.astype(jnp.bfloat16),
                   k.astype(jnp.bfloat16), preferred_element_type=jnp.float32)
    s = s - jnp.max(s, -1, keepdims=True)
    p = jnp.exp(s)
    denom = jnp.sum(p, -1, keepdims=True)
    pv = jnp.einsum("bhqk,bhkd->bhqd", p.astype(jnp.bfloat16),
                    v.astype(jnp.bfloat16), preferred_element_type=jnp.float32)
    attn = (pv / denom).transpose(0, 2, 1, 3).reshape(B * S, D)
    attn = mm(attn, wo) + bo[0]
    x2 = x1 + attn
    x3 = ln(x2, g2, b2)
    h1 = jax.nn.gelu(mm(x3, w1) + bm1[0], approximate=not exact_gelu)
    out = x3 + mm(h1, w2) + bm2[0]
    return out.reshape(B, S, D)


# -----------------------------------------------------------------------------
# Main
# -----------------------------------------------------------------------------
if __name__ == "__main__":
    # embed_dim = 128 keeps every activation and the output store lane-dense.
    B, S, D, n_heads = 2, 8, 128, 4
    H = 4 * D

    key = jax.random.PRNGKey(0)
    keys = jax.random.split(key, 16)

    def w(k_, shape, scale=0.1):
        return jax.random.normal(k_, shape, dtype=jnp.float32) * scale

    params = (
        jnp.ones((1, D), jnp.float32),             # ln1 gamma
        jnp.zeros((1, D), jnp.float32),            # ln1 beta
        w(keys[0], (D, D)), w(keys[1], (1, D)),    # Wq, bq
        w(keys[2], (D, D)), w(keys[3], (1, D)),    # Wk, bk
        w(keys[4], (D, D)), w(keys[5], (1, D)),    # Wv, bv
        w(keys[6], (D, D)), w(keys[7], (1, D)),    # Wo, bo
        jnp.ones((1, D), jnp.float32),             # ln2 gamma
        jnp.zeros((1, D), jnp.float32),            # ln2 beta
        w(keys[8], (D, H)), w(keys[9], (1, H)),    # mlp W1, b1
        w(keys[10], (H, D)), w(keys[11], (1, D)),  # mlp W2, b2
    )

    x = jax.random.normal(keys[12], (B, S, D), dtype=jnp.float32)

    exact_gelu = _exact_gelu_supported()
    out = jax.block_until_ready(
        hybrid_transformer(x, params, n_heads, exact_gelu=exact_gelu))
    ref = jax.block_until_ready(
        reference(x, params, n_heads, exact_gelu=exact_gelu))

    assert out.shape == (B, S, D)
    assert jnp.allclose(out, ref, rtol=2e-3, atol=2e-3), "mismatch vs reference"

    print("KERNEL_OK")
</pallas_src>

<mosaic_0001>
module attributes {stable_mosaic.version = 11 : i64} {
  func.func @hybrid_transformer_kernel(%arg0: i32, %arg1: memref<1x8x128xf32, #tpu.memory_space<vmem>>, %arg2: memref<1x128xf32, #tpu.memory_space<vmem>>, %arg3: memref<1x128xf32, #tpu.memory_space<vmem>>, %arg4: memref<4x128x32xbf16, #tpu.memory_space<vmem>>, %arg5: memref<4x1x32xf32, #tpu.memory_space<vmem>>, %arg6: memref<4x128x32xbf16, #tpu.memory_space<vmem>>, %arg7: memref<4x1x32xf32, #tpu.memory_space<vmem>>, %arg8: memref<4x128x32xbf16, #tpu.memory_space<vmem>>, %arg9: memref<4x1x32xf32, #tpu.memory_space<vmem>>, %arg10: memref<4x32x128xbf16, #tpu.memory_space<vmem>>, %arg11: memref<1x128xf32, #tpu.memory_space<vmem>>, %arg12: memref<1x128xf32, #tpu.memory_space<vmem>>, %arg13: memref<1x128xf32, #tpu.memory_space<vmem>>, %arg14: memref<128x512xbf16, #tpu.memory_space<vmem>>, %arg15: memref<1x512xf32, #tpu.memory_space<vmem>>, %arg16: memref<512x128xbf16, #tpu.memory_space<vmem>>, %arg17: memref<1x128xf32, #tpu.memory_space<vmem>>, %arg18: memref<1x8x128xf32, #tpu.memory_space<vmem>>) attributes {dimension_semantics = [#tpu.dimension_semantics<parallel>], iteration_bounds = array<i64: 2>, scalar_prefetch = 0 : i64, scratch_operands = 0 : i64, tpu.core_type = #tpu.core_type<tc>, window_params = [{transform_indices = @transform_0, window_bounds = array<i64: 1, 8, 128>}, {pipeline_mode = #tpu.pipeline_mode<synchronous>, transform_indices = @transform_1, window_bounds = array<i64: 1, 128>}, {pipeline_mode = #tpu.pipeline_mode<synchronous>, transform_indices = @transform_2, window_bounds = array<i64: 1, 128>}, {pipeline_mode = #tpu.pipeline_mode<synchronous>, transform_indices = @transform_3, window_bounds = array<i64: 4, 128, 32>}, {pipeline_mode = #tpu.pipeline_mode<synchronous>, transform_indices = @transform_4, window_bounds = array<i64: 4, 1, 32>}, {pipeline_mode = #tpu.pipeline_mode<synchronous>, transform_indices = @transform_5, window_bounds = array<i64: 4, 128, 32>}, {pipeline_mode = #tpu.pipeline_mode<synchronous>, transform_indices = @transform_6, window_bounds = array<i64: 4, 1, 32>}, {pipeline_mode = #tpu.pipeline_mode<synchronous>, transform_indices = @transform_7, window_bounds = array<i64: 4, 128, 32>}, {pipeline_mode = #tpu.pipeline_mode<synchronous>, transform_indices = @transform_8, window_bounds = array<i64: 4, 1, 32>}, {pipeline_mode = #tpu.pipeline_mode<synchronous>, transform_indices = @transform_9, window_bounds = array<i64: 4, 32, 128>}, {pipeline_mode = #tpu.pipeline_mode<synchronous>, transform_indices = @transform_10, window_bounds = array<i64: 1, 128>}, {pipeline_mode = #tpu.pipeline_mode<synchronous>, transform_indices = @transform_11, window_bounds = array<i64: 1, 128>}, {pipeline_mode = #tpu.pipeline_mode<synchronous>, transform_indices = @transform_12, window_bounds = array<i64: 1, 128>}, {pipeline_mode = #tpu.pipeline_mode<synchronous>, transform_indices = @transform_13, window_bounds = array<i64: 128, 512>}, {pipeline_mode = #tpu.pipeline_mode<synchronous>, transform_indices = @transform_14, window_bounds = array<i64: 1, 512>}, {pipeline_mode = #tpu.pipeline_mode<synchronous>, transform_indices = @transform_15, window_bounds = array<i64: 512, 128>}, {pipeline_mode = #tpu.pipeline_mode<synchronous>, transform_indices = @transform_16, window_bounds = array<i64: 1, 128>}, {transform_indices = @transform_17, window_bounds = array<i64: 1, 8, 128>}]} {
    %c0 = arith.constant 0 : index
    %c0_0 = arith.constant 0 : index
    %c0_1 = arith.constant 0 : index
    %0 = vector.load %arg1[%c0, %c0_0, %c0_1] : memref<1x8x128xf32, #tpu.memory_space<vmem>>, vector<1x8x128xf32>
    %1 = vector.shape_cast %0 : vector<1x8x128xf32> to vector<8x128xf32>
    %c0_2 = arith.constant 0 : index
    %c0_3 = arith.constant 0 : index
    %2 = vector.load %arg2[%c0_2, %c0_3] : memref<1x128xf32, #tpu.memory_space<vmem>>, vector<1x128xf32>
    %3 = vector.shape_cast %2 : vector<1x128xf32> to vector<128xf32>
    %c0_4 = arith.constant 0 : index
    %c0_5 = arith.constant 0 : index
    %4 = vector.load %arg3[%c0_4, %c0_5] : memref<1x128xf32, #tpu.memory_space<vmem>>, vector<1x128xf32>
    %5 = vector.shape_cast %4 : vector<1x128xf32> to vector<128xf32>
    %cst = arith.constant dense<0.000000e+00> : vector<8xf32>
    %6 = vector.multi_reduction <add>, %1, %cst [1] : vector<8x128xf32> to vector<8xf32>
    %7 = vector.shape_cast %6 : vector<8xf32> to vector<8x1xf32>
    %cst_6 = arith.constant 1.280000e+02 : f32
    %8 = vector.broadcast %cst_6 : f32 to vector<8x1xf32>
    %9 = arith.divf %7, %8 : vector<8x1xf32>
    %10 = vector.broadcast %9 : vector<8x1xf32> to vector<8x128xf32>
    %11 = arith.subf %1, %10 : vector<8x128xf32>
    %12 = arith.mulf %11, %11 : vector<8x128xf32>
    %cst_7 = arith.constant dense<0.000000e+00> : vector<8xf32>
    %13 = vector.multi_reduction <add>, %12, %cst_7 [1] : vector<8x128xf32> to vector<8xf32>
    %14 = vector.shape_cast %13 : vector<8xf32> to vector<8x1xf32>
    %cst_8 = arith.constant 1.280000e+02 : f32
    %15 = vector.broadcast %cst_8 : f32 to vector<8x1xf32>
    %16 = arith.divf %14, %15 : vector<8x1xf32>
    %cst_9 = arith.constant 9.99999974E-6 : f32
    %17 = vector.broadcast %cst_9 : f32 to vector<8x1xf32>
    %18 = arith.addf %16, %17 : vector<8x1xf32>
    %19 = math.rsqrt %18 : vector<8x1xf32>
    %20 = vector.broadcast %19 : vector<8x1xf32> to vector<8x128xf32>
    %21 = arith.mulf %11, %20 : vector<8x128xf32>
    %22 = vector.shape_cast %3 : vector<128xf32> to vector<1x128xf32>
    %23 = vector.broadcast %22 : vector<1x128xf32> to vector<8x128xf32>
    %24 = arith.mulf %21, %23 : vector<8x128xf32>
    %25 = vector.shape_cast %5 : vector<128xf32> to vector<1x128xf32>
    %26 = vector.broadcast %25 : vector<1x128xf32> to vector<8x128xf32>
    %27 = arith.addf %24, %26 : vector<8x128xf32>
    %28 = arith.truncf %27 : vector<8x128xf32> to vector<8x128xbf16>
    %29 = vector.shape_cast %28 : vector<8x128xbf16> to vector<1x8x128xbf16>
    %30 = vector.shape_cast %29 : vector<1x8x128xbf16> to vector<1x8x128xbf16>
    %31 = vector.broadcast %30 : vector<1x8x128xbf16> to vector<4x8x128xbf16>
    %c0_10 = arith.constant 0 : index
    %c0_11 = arith.constant 0 : index
    %c0_12 = arith.constant 0 : index
    %32 = vector.load %arg4[%c0_10, %c0_11, %c0_12] : memref<4x128x32xbf16, #tpu.memory_space<vmem>>, vector<4x128x32xbf16>
    "tpu.trace_start"() <{level = 10 : i32, message = "hnd,hde->hne"}> : () -> ()
    %cst_13 = arith.constant dense<0.000000e+00> : vector<4x8x32xf32>
    %33 = tpu.matmul %31, %32, %cst_13 {dimension_numbers = #tpu.dot_dimension_numbers<[2], [1], [1], [2], [0, 0, 0, 1, 1, 2], [0], [0]>} : vector<4x8x128xbf16>, vector<4x128x32xbf16>, vector<4x8x32xf32> -> vector<4x8x32xf32>
    "tpu.trace_stop"() : () -> ()
    %c0_14 = arith.constant 0 : index
    %c0_15 = arith.constant 0 : index
    %c0_16 = arith.constant 0 : index
    %34 = vector.load %arg5[%c0_14, %c0_15, %c0_16] : memref<4x1x32xf32, #tpu.memory_space<vmem>>, vector<4x1x32xf32>
    %35 = vector.broadcast %34 : vector<4x1x32xf32> to vector<4x8x32xf32>
    %36 = arith.addf %33, %35 : vector<4x8x32xf32>
    %cst_17 = arith.constant 0.176776692 : f32
    %37 = vector.broadcast %cst_17 : f32 to vector<4x8x32xf32>
    %38 = arith.mulf %36, %37 : vector<4x8x32xf32>
    %c0_18 = arith.constant 0 : index
    %c0_19 = arith.constant 0 : index
    %c0_20 = arith.constant 0 : index
    %39 = vector.load %arg6[%c0_18, %c0_19, %c0_20] : memref<4x128x32xbf16, #tpu.memory_space<vmem>>, vector<4x128x32xbf16>
    "tpu.trace_start"() <{level = 10 : i32, message = "hnd,hde->hne"}> : () -> ()
    %cst_21 = arith.constant dense<0.000000e+00> : vector<4x8x32xf32>
    %40 = tpu.matmul %31, %39, %cst_21 {dimension_numbers = #tpu.dot_dimension_numbers<[2], [1], [1], [2], [0, 0, 0, 1, 1, 2], [0], [0]>} : vector<4x8x128xbf16>, vector<4x128x32xbf16>, vector<4x8x32xf32> -> vector<4x8x32xf32>
    "tpu.trace_stop"() : () -> ()
    %c0_22 = arith.constant 0 : index
    %c0_23 = arith.constant 0 : index
    %c0_24 = arith.constant 0 : index
    %41 = vector.load %arg7[%c0_22, %c0_23, %c0_24] : memref<4x1x32xf32, #tpu.memory_space<vmem>>, vector<4x1x32xf32>
    %42 = vector.broadcast %41 : vector<4x1x32xf32> to vector<4x8x32xf32>
    %43 = arith.addf %40, %42 : vector<4x8x32xf32>
    %c0_25 = arith.constant 0 : index
    %c0_26 = arith.constant 0 : index
    %c0_27 = arith.constant 0 : index
    %44 = vector.load %arg8[%c0_25, %c0_26, %c0_27] : memref<4x128x32xbf16, #tpu.memory_space<vmem>>, vector<4x128x32xbf16>
    "tpu.trace_start"() <{level = 10 : i32, message = "hnd,hde->hne"}> : () -> ()
    %cst_28 = arith.constant dense<0.000000e+00> : vector<4x8x32xf32>
    %45 = tpu.matmul %31, %44, %cst_28 {dimension_numbers = #tpu.dot_dimension_numbers<[2], [1], [1], [2], [0, 0, 0, 1, 1, 2], [0], [0]>} : vector<4x8x128xbf16>, vector<4x128x32xbf16>, vector<4x8x32xf32> -> vector<4x8x32xf32>
    "tpu.trace_stop"() : () -> ()
    %c0_29 = arith.constant 0 : index
    %c0_30 = arith.constant 0 : index
    %c0_31 = arith.constant 0 : index
    %46 = vector.load %arg9[%c0_29, %c0_30, %c0_31] : memref<4x1x32xf32, #tpu.memory_space<vmem>>, vector<4x1x32xf32>
    %47 = vector.broadcast %46 : vector<4x1x32xf32> to vector<4x8x32xf32>
    %48 = arith.addf %45, %47 : vector<4x8x32xf32>
    %49 = arith.truncf %38 : vector<4x8x32xf32> to vector<4x8x32xbf16>
    %50 = arith.truncf %43 : vector<4x8x32xf32> to vector<4x8x32xbf16>
    "tpu.trace_start"() <{level = 10 : i32, message = "hqe,hke->hqk"}> : () -> ()
    %cst_32 = arith.constant dense<0.000000e+00> : vector<4x8x8xf32>
    %51 = tpu.matmul %49, %50, %cst_32 {dimension_numbers = #tpu.dot_dimension_numbers<[2], [2], [1], [1], [0, 0, 0, 1, 1, 1], [0], [0]>} : vector<4x8x32xbf16>, vector<4x8x32xbf16>, vector<4x8x8xf32> -> vector<4x8x8xf32>
    "tpu.trace_stop"() : () -> ()
    %cst_33 = arith.constant dense<0xFF800000> : vector<4x8xf32>
    %52 = vector.multi_reduction <maximumf>, %51, %cst_33 [2] : vector<4x8x8xf32> to vector<4x8xf32>
    %53 = vector.shape_cast %52 : vector<4x8xf32> to vector<4x8x1xf32>
    %54 = vector.broadcast %53 : vector<4x8x1xf32> to vector<4x8x8xf32>
    %55 = arith.subf %51, %54 : vector<4x8x8xf32>
    %56 = math.exp %55 : vector<4x8x8xf32>
    %cst_34 = arith.constant dense<0.000000e+00> : vector<4x8xf32>
    %57 = vector.multi_reduction <add>, %56, %cst_34 [2] : vector<4x8x8xf32> to vector<4x8xf32>
    %58 = vector.shape_cast %57 : vector<4x8xf32> to vector<4x8x1xf32>
    %59 = arith.truncf %56 : vector<4x8x8xf32> to vector<4x8x8xbf16>
    %60 = arith.truncf %48 : vector<4x8x32xf32> to vector<4x8x32xbf16>
    "tpu.trace_start"() <{level = 10 : i32, message = "hqk,hke->hqe"}> : () -> ()
    %cst_35 = arith.constant dense<0.000000e+00> : vector<4x8x32xf32>
    %61 = tpu.matmul %59, %60, %cst_35 {dimension_numbers = #tpu.dot_dimension_numbers<[2], [1], [1], [2], [0, 0, 0, 1, 1, 2], [0], [0]>} : vector<4x8x8xbf16>, vector<4x8x32xbf16>, vector<4x8x32xf32> -> vector<4x8x32xf32>
    "tpu.trace_stop"() : () -> ()
    %62 = vector.broadcast %58 : vector<4x8x1xf32> to vector<4x8x32xf32>
    %63 = arith.divf %61, %62 : vector<4x8x32xf32>
    %64 = arith.truncf %63 : vector<4x8x32xf32> to vector<4x8x32xbf16>
    %c0_36 = arith.constant 0 : index
    %c0_37 = arith.constant 0 : index
    %c0_38 = arith.constant 0 : index
    %65 = vector.load %arg10[%c0_36, %c0_37, %c0_38] : memref<4x32x128xbf16, #tpu.memory_space<vmem>>, vector<4x32x128xbf16>
    "tpu.trace_start"() <{level = 10 : i32, message = "hqe,hef->hqf"}> : () -> ()
    %cst_39 = arith.constant dense<0.000000e+00> : vector<4x8x128xf32>
    %66 = tpu.matmul %64, %65, %cst_39 {dimension_numbers = #tpu.dot_dimension_numbers<[2], [1], [1], [2], [0, 0, 0, 1, 1, 2], [0], [0]>} : vector<4x8x32xbf16>, vector<4x32x128xbf16>, vector<4x8x128xf32> -> vector<4x8x128xf32>
    "tpu.trace_stop"() : () -> ()
    %cst_40 = arith.constant dense<0.000000e+00> : vector<8x128xf32>
    %67 = vector.multi_reduction <add>, %66, %cst_40 [0] : vector<4x8x128xf32> to vector<8x128xf32>
    %c0_41 = arith.constant 0 : index
    %c0_42 = arith.constant 0 : index
    %68 = vector.load %arg11[%c0_41, %c0_42] : memref<1x128xf32, #tpu.memory_space<vmem>>, vector<1x128xf32>
    %69 = vector.shape_cast %68 : vector<1x128xf32> to vector<128xf32>
    %70 = vector.shape_cast %69 : vector<128xf32> to vector<1x128xf32>
    %71 = vector.broadcast %70 : vector<1x128xf32> to vector<8x128xf32>
    %72 = arith.addf %67, %71 : vector<8x128xf32>
    %73 = arith.addf %27, %72 : vector<8x128xf32>
    %c0_43 = arith.constant 0 : index
    %c0_44 = arith.constant 0 : index
    %74 = vector.load %arg12[%c0_43, %c0_44] : memref<1x128xf32, #tpu.memory_space<vmem>>, vector<1x128xf32>
    %75 = vector.shape_cast %74 : vector<1x128xf32> to vector<128xf32>
    %c0_45 = arith.constant 0 : index
    %c0_46 = arith.constant 0 : index
    %76 = vector.load %arg13[%c0_45, %c0_46] : memref<1x128xf32, #tpu.memory_space<vmem>>, vector<1x128xf32>
    %77 = vector.shape_cast %76 : vector<1x128xf32> to vector<128xf32>
    %cst_47 = arith.constant dense<0.000000e+00> : vector<8xf32>
    %78 = vector.multi_reduction <add>, %73, %cst_47 [1] : vector<8x128xf32> to vector<8xf32>
    %79 = vector.shape_cast %78 : vector<8xf32> to vector<8x1xf32>
    %cst_48 = arith.constant 1.280000e+02 : f32
    %80 = vector.broadcast %cst_48 : f32 to vector<8x1xf32>
    %81 = arith.divf %79, %80 : vector<8x1xf32>
    %82 = vector.broadcast %81 : vector<8x1xf32> to vector<8x128xf32>
    %83 = arith.subf %73, %82 : vector<8x128xf32>
    %84 = arith.mulf %83, %83 : vector<8x128xf32>
    %cst_49 = arith.constant dense<0.000000e+00> : vector<8xf32>
    %85 = vector.multi_reduction <add>, %84, %cst_49 [1] : vector<8x128xf32> to vector<8xf32>
    %86 = vector.shape_cast %85 : vector<8xf32> to vector<8x1xf32>
    %cst_50 = arith.constant 1.280000e+02 : f32
    %87 = vector.broadcast %cst_50 : f32 to vector<8x1xf32>
    %88 = arith.divf %86, %87 : vector<8x1xf32>
    %cst_51 = arith.constant 9.99999974E-6 : f32
    %89 = vector.broadcast %cst_51 : f32 to vector<8x1xf32>
    %90 = arith.addf %88, %89 : vector<8x1xf32>
    %91 = math.rsqrt %90 : vector<8x1xf32>
    %92 = vector.broadcast %91 : vector<8x1xf32> to vector<8x128xf32>
    %93 = arith.mulf %83, %92 : vector<8x128xf32>
    %94 = vector.shape_cast %75 : vector<128xf32> to vector<1x128xf32>
    %95 = vector.broadcast %94 : vector<1x128xf32> to vector<8x128xf32>
    %96 = arith.mulf %93, %95 : vector<8x128xf32>
    %97 = vector.shape_cast %77 : vector<128xf32> to vector<1x128xf32>
    %98 = vector.broadcast %97 : vector<1x128xf32> to vector<8x128xf32>
    %99 = arith.addf %96, %98 : vector<8x128xf32>
    %c0_52 = arith.constant 0 : index
    %c0_53 = arith.constant 0 : index
    %100 = vector.load %arg14[%c0_52, %c0_53] : memref<128x512xbf16, #tpu.memory_space<vmem>>, vector<128x512xbf16>
    %101 = arith.truncf %99 : vector<8x128xf32> to vector<8x128xbf16>
    %cst_54 = arith.constant dense<0.000000e+00> : vector<8x512xf32>
    %102 = tpu.matmul %101, %100, %cst_54 {dimension_numbers = #tpu.dot_dimension_numbers<[1], [0], [0], [1], [0, 0, 1, 1], [], []>} : vector<8x128xbf16>, vector<128x512xbf16>, vector<8x512xf32> -> vector<8x512xf32>
    %c0_55 = arith.constant 0 : index
    %c0_56 = arith.constant 0 : index
    %103 = vector.load %arg15[%c0_55, %c0_56] : memref<1x512xf32, #tpu.memory_space<vmem>>, vector<1x512xf32>
    %104 = vector.shape_cast %103 : vector<1x512xf32> to vector<512xf32>
    %105 = vector.shape_cast %104 : vector<512xf32> to vector<1x512xf32>
    %106 = vector.broadcast %105 : vector<1x512xf32> to vector<8x512xf32>
    %107 = arith.addf %102, %106 : vector<8x512xf32>
    %108 = arith.mulf %107, %107 : vector<8x512xf32>
    %109 = arith.mulf %107, %108 : vector<8x512xf32>
    %cst_57 = arith.constant 4.471500e-02 : f32
    %110 = vector.broadcast %cst_57 : f32 to vector<8x512xf32>
    %111 = arith.mulf %110, %109 : vector<8x512xf32>
    %112 = arith.addf %107, %111 : vector<8x512xf32>
    %cst_58 = arith.constant 0.797884583 : f32
    %113 = vector.broadcast %cst_58 : f32 to vector<8x512xf32>
    %114 = arith.mulf %113, %112 : vector<8x512xf32>
    %115 = math.tanh %114 : vector<8x512xf32>
    %cst_59 = arith.constant 1.000000e+00 : f32
    %116 = vector.broadcast %cst_59 : f32 to vector<8x512xf32>
    %117 = arith.addf %116, %115 : vector<8x512xf32>
    %cst_60 = arith.constant 5.000000e-01 : f32
    %118 = vector.broadcast %cst_60 : f32 to vector<8x512xf32>
    %119 = arith.mulf %118, %117 : vector<8x512xf32>
    %120 = arith.mulf %107, %119 : vector<8x512xf32>
    %c0_61 = arith.constant 0 : index
    %c0_62 = arith.constant 0 : index
    %121 = vector.load %arg16[%c0_61, %c0_62] : memref<512x128xbf16, #tpu.memory_space<vmem>>, vector<512x128xbf16>
    %122 = arith.truncf %120 : vector<8x512xf32> to vector<8x512xbf16>
    %cst_63 = arith.constant dense<0.000000e+00> : vector<8x128xf32>
    %123 = tpu.matmul %122, %121, %cst_63 {dimension_numbers = #tpu.dot_dimension_numbers<[1], [0], [0], [1], [0, 0, 1, 1], [], []>} : vector<8x512xbf16>, vector<512x128xbf16>, vector<8x128xf32> -> vector<8x128xf32>
    %c0_64 = arith.constant 0 : index
    %c0_65 = arith.constant 0 : index
    %124 = vector.load %arg17[%c0_64, %c0_65] : memref<1x128xf32, #tpu.memory_space<vmem>>, vector<1x128xf32>
    %125 = vector.shape_cast %124 : vector<1x128xf32> to vector<128xf32>
    %126 = vector.shape_cast %125 : vector<128xf32> to vector<1x128xf32>
    %127 = vector.broadcast %126 : vector<1x128xf32> to vector<8x128xf32>
    %128 = arith.addf %123, %127 : vector<8x128xf32>
    %129 = arith.addf %99, %128 : vector<8x128xf32>
    %c0_66 = arith.constant 0 : index
    %c0_67 = arith.constant 0 : index
    %c0_68 = arith.constant 0 : index
    %130 = vector.load %arg18[%c0_66, %c0_67, %c0_68] : memref<1x8x128xf32, #tpu.memory_space<vmem>>, vector<1x8x128xf32>
    %131 = vector.shape_cast %130 : vector<1x8x128xf32> to vector<8x128xf32>
    %132 = vector.shape_cast %129 : vector<8x128xf32> to vector<1x8x128xf32>
    tpu.vector_store %arg18[%c0_66, %c0_67, %c0_68], %132 {strides = array<i32>} : memref<1x8x128xf32, #tpu.memory_space<vmem>>, vector<1x8x128xf32>,
    return
  }
  func.func @transform_0(%arg0: i32) -> (i32, i32, i32) {
    %c0_i32 = arith.constant 0 : i32
    %c0_i32_0 = arith.constant 0 : i32
    %c0_i32_1 = arith.constant 0 : i32
    return %arg0, %c0_i32, %c0_i32_0 : i32, i32, i32
  }
  func.func @transform_1(%arg0: i32) -> (i32, i32) {
    %c0_i32 = arith.constant 0 : i32
    %c0_i32_0 = arith.constant 0 : i32
    %c0_i32_1 = arith.constant 0 : i32
    return %c0_i32, %c0_i32_0 : i32, i32
  }
  func.func @transform_2(%arg0: i32) -> (i32, i32) {
    %c0_i32 = arith.constant 0 : i32
    %c0_i32_0 = arith.constant 0 : i32
    %c0_i32_1 = arith.constant 0 : i32
    return %c0_i32, %c0_i32_0 : i32, i32
  }
  func.func @transform_3(%arg0: i32) -> (i32, i32, i32) {
    %c0_i32 = arith.constant 0 : i32
    %c0_i32_0 = arith.constant 0 : i32
    %c0_i32_1 = arith.constant 0 : i32
    %c0_i32_2 = arith.constant 0 : i32
    return %c0_i32, %c0_i32_0, %c0_i32_1 : i32, i32, i32
  }
  func.func @transform_4(%arg0: i32) -> (i32, i32, i32) {
    %c0_i32 = arith.constant 0 : i32
    %c0_i32_0 = arith.constant 0 : i32
    %c0_i32_1 = arith.constant 0 : i32
    %c0_i32_2 = arith.constant 0 : i32
    return %c0_i32, %c0_i32_0, %c0_i32_1 : i32, i32, i32
  }
  func.func @transform_5(%arg0: i32) -> (i32, i32, i32) {
    %c0_i32 = arith.constant 0 : i32
    %c0_i32_0 = arith.constant 0 : i32
    %c0_i32_1 = arith.constant 0 : i32
    %c0_i32_2 = arith.constant 0 : i32
    return %c0_i32, %c0_i32_0, %c0_i32_1 : i32, i32, i32
  }
  func.func @transform_6(%arg0: i32) -> (i32, i32, i32) {
    %c0_i32 = arith.constant 0 : i32
    %c0_i32_0 = arith.constant 0 : i32
    %c0_i32_1 = arith.constant 0 : i32
    %c0_i32_2 = arith.constant 0 : i32
    return %c0_i32, %c0_i32_0, %c0_i32_1 : i32, i32, i32
  }
  func.func @transform_7(%arg0: i32) -> (i32, i32, i32) {
    %c0_i32 = arith.constant 0 : i32
    %c0_i32_0 = arith.constant 0 : i32
    %c0_i32_1 = arith.constant 0 : i32
    %c0_i32_2 = arith.constant 0 : i32
    return %c0_i32, %c0_i32_0, %c0_i32_1 : i32, i32, i32
  }
  func.func @transform_8(%arg0: i32) -> (i32, i32, i32) {
    %c0_i32 = arith.constant 0 : i32
    %c0_i32_0 = arith.constant 0 : i32
    %c0_i32_1 = arith.constant 0 : i32
    %c0_i32_2 = arith.constant 0 : i32
    return %c0_i32, %c0_i32_0, %c0_i32_1 : i32, i32, i32
  }
  func.func @transform_9(%arg0: i32) -> (i32, i32, i32) {
    %c0_i32 = arith.constant 0 : i32
    %c0_i32_0 = arith.constant 0 : i32
    %c0_i32_1 = arith.constant 0 : i32
    %c0_i32_2 = arith.constant 0 : i32
    return %c0_i32, %c0_i32_0, %c0_i32_1 : i32, i32, i32
  }
  func.func @transform_10(%arg0: i32) -> (i32, i32) {
    %c0_i32 = arith.constant 0 : i32
    %c0_i32_0 = arith.constant 0 : i32
    %c0_i32_1 = arith.constant 0 : i32
    return %c0_i32, %c0_i32_0 : i32, i32
  }
  func.func @transform_11(%arg0: i32) -> (i32, i32) {
    %c0_i32 = arith.constant 0 : i32
    %c0_i32_0 = arith.constant 0 : i32
    %c0_i32_1 = arith.constant 0 : i32
    return %c0_i32, %c0_i32_0 : i32, i32
  }
  func.func @transform_12(%arg0: i32) -> (i32, i32) {
    %c0_i32 = arith.constant 0 : i32
    %c0_i32_0 = arith.constant 0 : i32
    %c0_i32_1 = arith.constant 0 : i32
    return %c0_i32, %c0_i32_0 : i32, i32
  }
  func.func @transform_13(%arg0: i32) -> (i32, i32) {
    %c0_i32 = arith.constant 0 : i32
    %c0_i32_0 = arith.constant 0 : i32
    %c0_i32_1 = arith.constant 0 : i32
    return %c0_i32, %c0_i32_0 : i32, i32
  }
  func.func @transform_14(%arg0: i32) -> (i32, i32) {
    %c0_i32 = arith.constant 0 : i32
    %c0_i32_0 = arith.constant 0 : i32
    %c0_i32_1 = arith.constant 0 : i32
    return %c0_i32, %c0_i32_0 : i32, i32
  }
  func.func @transform_15(%arg0: i32) -> (i32, i32) {
    %c0_i32 = arith.constant 0 : i32
    %c0_i32_0 = arith.constant 0 : i32
    %c0_i32_1 = arith.constant 0 : i32
    return %c0_i32, %c0_i32_0 : i32, i32
  }
  func.func @transform_16(%arg0: i32) -> (i32, i32) {
    %c0_i32 = arith.constant 0 : i32
    %c0_i32_0 = arith.constant 0 : i32
    %c0_i32_1 = arith.constant 0 : i32
    return %c0_i32, %c0_i32_0 : i32, i32
  }
  func.func @transform_17(%arg0: i32) -> (i32, i32, i32) {
    %c0_i32 = arith.constant 0 : i32
    %c0_i32_0 = arith.constant 0 : i32
    %c0_i32_1 = arith.constant 0 : i32
    return %arg0, %c0_i32, %c0_i32_0 : i32, i32, i32
  }
}

module attributes {stable_mosaic.version = 11 : i64} {
  func.func @hybrid_transformer_kernel(%arg0: i32, %arg1: memref<1x8x128xf32, #tpu.memory_space<vmem>>, %arg2: memref<1x128xf32, #tpu.memory_space<vmem>>, %arg3: memref<1x128xf32, #tpu.memory_space<vmem>>, %arg4: memref<4x128x32xbf16, #tpu.memory_space<vmem>>, %arg5: memref<4x1x32xf32, #tpu.memory_space<vmem>>, %arg6: memref<4x128x32xbf16, #tpu.memory_space<vmem>>, %arg7: memref<4x1x32xf32, #tpu.memory_space<vmem>>, %arg8: memref<4x128x32xbf16, #tpu.memory_space<vmem>>, %arg9: memref<4x1x32xf32, #tpu.memory_space<vmem>>, %arg10: memref<4x32x128xbf16, #tpu.memory_space<vmem>>, %arg11: memref<1x128xf32, #tpu.memory_space<vmem>>, %arg12: memref<1x128xf32, #tpu.memory_space<vmem>>, %arg13: memref<1x128xf32, #tpu.memory_space<vmem>>, %arg14: memref<128x512xbf16, #tpu.memory_space<vmem>>, %arg15: memref<1x512xf32, #tpu.memory_space<vmem>>, %arg16: memref<512x128xbf16, #tpu.memory_space<vmem>>, %arg17: memref<1x128xf32, #tpu.memory_space<vmem>>, %arg18: memref<1x8x128xf32, #tpu.memory_space<vmem>>) attributes {dimension_semantics = [#tpu.dimension_semantics<parallel>], iteration_bounds = array<i64: 2>, scalar_prefetch = 0 : i64, scratch_operands = 0 : i64, tpu.core_type = #tpu.core_type<tc>, window_params = [{transform_indices = @transform_0, window_bounds = array<i64: 1, 8, 128>}, {pipeline_mode = #tpu.pipeline_mode<synchronous>, transform_indices = @transform_1, window_bounds = array<i64: 1, 128>}, {pipeline_mode = #tpu.pipeline_mode<synchronous>, transform_indices = @transform_2, window_bounds = array<i64: 1, 128>}, {pipeline_mode = #tpu.pipeline_mode<synchronous>, transform_indices = @transform_3, window_bounds = array<i64: 4, 128, 32>}, {pipeline_mode = #tpu.pipeline_mode<synchronous>, transform_indices = @transform_4, window_bounds = array<i64: 4, 1, 32>}, {pipeline_mode = #tpu.pipeline_mode<synchronous>, transform_indices = @transform_5, window_bounds = array<i64: 4, 128, 32>}, {pipeline_mode = #tpu.pipeline_mode<synchronous>, transform_indices = @transform_6, window_bounds = array<i64: 4, 1, 32>}, {pipeline_mode = #tpu.pipeline_mode<synchronous>, transform_indices = @transform_7, window_bounds = array<i64: 4, 128, 32>}, {pipeline_mode = #tpu.pipeline_mode<synchronous>, transform_indices = @transform_8, window_bounds = array<i64: 4, 1, 32>}, {pipeline_mode = #tpu.pipeline_mode<synchronous>, transform_indices = @transform_9, window_bounds = array<i64: 4, 32, 128>}, {pipeline_mode = #tpu.pipeline_mode<synchronous>, transform_indices = @transform_10, window_bounds = array<i64: 1, 128>}, {pipeline_mode = #tpu.pipeline_mode<synchronous>, transform_indices = @transform_11, window_bounds = array<i64: 1, 128>}, {pipeline_mode = #tpu.pipeline_mode<synchronous>, transform_indices = @transform_12, window_bounds = array<i64: 1, 128>}, {pipeline_mode = #tpu.pipeline_mode<synchronous>, transform_indices = @transform_13, window_bounds = array<i64: 128, 512>}, {pipeline_mode = #tpu.pipeline_mode<synchronous>, transform_indices = @transform_14, window_bounds = array<i64: 1, 512>}, {pipeline_mode = #tpu.pipeline_mode<synchronous>, transform_indices = @transform_15, window_bounds = array<i64: 512, 128>}, {pipeline_mode = #tpu.pipeline_mode<synchronous>, transform_indices = @transform_16, window_bounds = array<i64: 1, 128>}, {transform_indices = @transform_17, window_bounds = array<i64: 1, 8, 128>}]} {
    %c0 = arith.constant 0 : index
    %c0_0 = arith.constant 0 : index
    %c0_1 = arith.constant 0 : index
    %0 = vector.load %arg1[%c0, %c0_0, %c0_1] : memref<1x8x128xf32, #tpu.memory_space<vmem>>, vector<1x8x128xf32>
    %1 = vector.shape_cast %0 : vector<1x8x128xf32> to vector<8x128xf32>
    %c0_2 = arith.constant 0 : index
    %c0_3 = arith.constant 0 : index
    %2 = vector.load %arg2[%c0_2, %c0_3] : memref<1x128xf32, #tpu.memory_space<vmem>>, vector<1x128xf32>
    %3 = vector.shape_cast %2 : vector<1x128xf32> to vector<128xf32>
    %c0_4 = arith.constant 0 : index
    %c0_5 = arith.constant 0 : index
    %4 = vector.load %arg3[%c0_4, %c0_5] : memref<1x128xf32, #tpu.memory_space<vmem>>, vector<1x128xf32>
    %5 = vector.shape_cast %4 : vector<1x128xf32> to vector<128xf32>
    %cst = arith.constant dense<0.000000e+00> : vector<8xf32>
    %6 = vector.multi_reduction <add>, %1, %cst [1] : vector<8x128xf32> to vector<8xf32>
    %7 = vector.shape_cast %6 : vector<8xf32> to vector<8x1xf32>
    %cst_6 = arith.constant 1.280000e+02 : f32
    %8 = vector.broadcast %cst_6 : f32 to vector<8x1xf32>
    %9 = arith.divf %7, %8 : vector<8x1xf32>
    %10 = vector.broadcast %9 : vector<8x1xf32> to vector<8x128xf32>
    %11 = arith.subf %1, %10 : vector<8x128xf32>
    %12 = arith.mulf %11, %11 : vector<8x128xf32>
    %cst_7 = arith.constant dense<0.000000e+00> : vector<8xf32>
    %13 = vector.multi_reduction <add>, %12, %cst_7 [1] : vector<8x128xf32> to vector<8xf32>
    %14 = vector.shape_cast %13 : vector<8xf32> to vector<8x1xf32>
    %cst_8 = arith.constant 1.280000e+02 : f32
    %15 = vector.broadcast %cst_8 : f32 to vector<8x1xf32>
    %16 = arith.divf %14, %15 : vector<8x1xf32>
    %cst_9 = arith.constant 9.99999974E-6 : f32
    %17 = vector.broadcast %cst_9 : f32 to vector<8x1xf32>
    %18 = arith.addf %16, %17 : vector<8x1xf32>
    %19 = math.rsqrt %18 : vector<8x1xf32>
    %20 = vector.broadcast %19 : vector<8x1xf32> to vector<8x128xf32>
    %21 = arith.mulf %11, %20 : vector<8x128xf32>
    %22 = vector.shape_cast %3 : vector<128xf32> to vector<1x128xf32>
    %23 = vector.broadcast %22 : vector<1x128xf32> to vector<8x128xf32>
    %24 = arith.mulf %21, %23 : vector<8x128xf32>
    %25 = vector.shape_cast %5 : vector<128xf32> to vector<1x128xf32>
    %26 = vector.broadcast %25 : vector<1x128xf32> to vector<8x128xf32>
    %27 = arith.addf %24, %26 : vector<8x128xf32>
    %28 = arith.truncf %27 : vector<8x128xf32> to vector<8x128xbf16>
    %29 = vector.shape_cast %28 : vector<8x128xbf16> to vector<1x8x128xbf16>
    %30 = vector.shape_cast %29 : vector<1x8x128xbf16> to vector<1x8x128xbf16>
    %31 = vector.broadcast %30 : vector<1x8x128xbf16> to vector<4x8x128xbf16>
    %c0_10 = arith.constant 0 : index
    %c0_11 = arith.constant 0 : index
    %c0_12 = arith.constant 0 : index
    %32 = vector.load %arg4[%c0_10, %c0_11, %c0_12] : memref<4x128x32xbf16, #tpu.memory_space<vmem>>, vector<4x128x32xbf16>
    "tpu.trace_start"() <{level = 10 : i32, message = "hnd,hde->hne"}> : () -> ()
    %cst_13 = arith.constant dense<0.000000e+00> : vector<4x8x32xf32>
    %33 = tpu.matmul %31, %32, %cst_13 {dimension_numbers = #tpu.dot_dimension_numbers<[2], [1], [1], [2], [0, 0, 0, 1, 1, 2], [0], [0]>} : vector<4x8x128xbf16>, vector<4x128x32xbf16>, vector<4x8x32xf32> -> vector<4x8x32xf32>
    "tpu.trace_stop"() : () -> ()
    %c0_14 = arith.constant 0 : index
    %c0_15 = arith.constant 0 : index
    %c0_16 = arith.constant 0 : index
    %34 = vector.load %arg5[%c0_14, %c0_15, %c0_16] : memref<4x1x32xf32, #tpu.memory_space<vmem>>, vector<4x1x32xf32>
    %35 = vector.broadcast %34 : vector<4x1x32xf32> to vector<4x8x32xf32>
    %36 = arith.addf %33, %35 : vector<4x8x32xf32>
    %cst_17 = arith.constant 0.176776692 : f32
    %37 = vector.broadcast %cst_17 : f32 to vector<4x8x32xf32>
    %38 = arith.mulf %36, %37 : vector<4x8x32xf32>
    %c0_18 = arith.constant 0 : index
    %c0_19 = arith.constant 0 : index
    %c0_20 = arith.constant 0 : index
    %39 = vector.load %arg6[%c0_18, %c0_19, %c0_20] : memref<4x128x32xbf16, #tpu.memory_space<vmem>>, vector<4x128x32xbf16>
    "tpu.trace_start"() <{level = 10 : i32, message = "hnd,hde->hne"}> : () -> ()
    %cst_21 = arith.constant dense<0.000000e+00> : vector<4x8x32xf32>
    %40 = tpu.matmul %31, %39, %cst_21 {dimension_numbers = #tpu.dot_dimension_numbers<[2], [1], [1], [2], [0, 0, 0, 1, 1, 2], [0], [0]>} : vector<4x8x128xbf16>, vector<4x128x32xbf16>, vector<4x8x32xf32> -> vector<4x8x32xf32>
    "tpu.trace_stop"() : () -> ()
    %c0_22 = arith.constant 0 : index
    %c0_23 = arith.constant 0 : index
    %c0_24 = arith.constant 0 : index
    %41 = vector.load %arg7[%c0_22, %c0_23, %c0_24] : memref<4x1x32xf32, #tpu.memory_space<vmem>>, vector<4x1x32xf32>
    %42 = vector.broadcast %41 : vector<4x1x32xf32> to vector<4x8x32xf32>
    %43 = arith.addf %40, %42 : vector<4x8x32xf32>
    %c0_25 = arith.constant 0 : index
    %c0_26 = arith.constant 0 : index
    %c0_27 = arith.constant 0 : index
    %44 = vector.load %arg8[%c0_25, %c0_26, %c0_27] : memref<4x128x32xbf16, #tpu.memory_space<vmem>>, vector<4x128x32xbf16>
    "tpu.trace_start"() <{level = 10 : i32, message = "hnd,hde->hne"}> : () -> ()
    %cst_28 = arith.constant dense<0.000000e+00> : vector<4x8x32xf32>
    %45 = tpu.matmul %31, %44, %cst_28 {dimension_numbers = #tpu.dot_dimension_numbers<[2], [1], [1], [2], [0, 0, 0, 1, 1, 2], [0], [0]>} : vector<4x8x128xbf16>, vector<4x128x32xbf16>, vector<4x8x32xf32> -> vector<4x8x32xf32>
    "tpu.trace_stop"() : () -> ()
    %c0_29 = arith.constant 0 : index
    %c0_30 = arith.constant 0 : index
    %c0_31 = arith.constant 0 : index
    %46 = vector.load %arg9[%c0_29, %c0_30, %c0_31] : memref<4x1x32xf32, #tpu.memory_space<vmem>>, vector<4x1x32xf32>
    %47 = vector.broadcast %46 : vector<4x1x32xf32> to vector<4x8x32xf32>
    %48 = arith.addf %45, %47 : vector<4x8x32xf32>
    %49 = arith.truncf %38 : vector<4x8x32xf32> to vector<4x8x32xbf16>
    %50 = arith.truncf %43 : vector<4x8x32xf32> to vector<4x8x32xbf16>
    "tpu.trace_start"() <{level = 10 : i32, message = "hqe,hke->hqk"}> : () -> ()
    %cst_32 = arith.constant dense<0.000000e+00> : vector<4x8x8xf32>
    %51 = tpu.matmul %49, %50, %cst_32 {dimension_numbers = #tpu.dot_dimension_numbers<[2], [2], [1], [1], [0, 0, 0, 1, 1, 1], [0], [0]>} : vector<4x8x32xbf16>, vector<4x8x32xbf16>, vector<4x8x8xf32> -> vector<4x8x8xf32>
    "tpu.trace_stop"() : () -> ()
    %cst_33 = arith.constant dense<0xFF800000> : vector<4x8xf32>
    %52 = vector.multi_reduction <maximumf>, %51, %cst_33 [2] : vector<4x8x8xf32> to vector<4x8xf32>
    %53 = vector.shape_cast %52 : vector<4x8xf32> to vector<4x8x1xf32>
    %54 = vector.broadcast %53 : vector<4x8x1xf32> to vector<4x8x8xf32>
    %55 = arith.subf %51, %54 : vector<4x8x8xf32>
    %56 = math.exp %55 : vector<4x8x8xf32>
    %cst_34 = arith.constant dense<0.000000e+00> : vector<4x8xf32>
    %57 = vector.multi_reduction <add>, %56, %cst_34 [2] : vector<4x8x8xf32> to vector<4x8xf32>
    %58 = vector.shape_cast %57 : vector<4x8xf32> to vector<4x8x1xf32>
    %59 = arith.truncf %56 : vector<4x8x8xf32> to vector<4x8x8xbf16>
    %60 = arith.truncf %48 : vector<4x8x32xf32> to vector<4x8x32xbf16>
    "tpu.trace_start"() <{level = 10 : i32, message = "hqk,hke->hqe"}> : () -> ()
    %cst_35 = arith.constant dense<0.000000e+00> : vector<4x8x32xf32>
    %61 = tpu.matmul %59, %60, %cst_35 {dimension_numbers = #tpu.dot_dimension_numbers<[2], [1], [1], [2], [0, 0, 0, 1, 1, 2], [0], [0]>} : vector<4x8x8xbf16>, vector<4x8x32xbf16>, vector<4x8x32xf32> -> vector<4x8x32xf32>
    "tpu.trace_stop"() : () -> ()
    %62 = vector.broadcast %58 : vector<4x8x1xf32> to vector<4x8x32xf32>
    %63 = arith.divf %61, %62 : vector<4x8x32xf32>
    %64 = arith.truncf %63 : vector<4x8x32xf32> to vector<4x8x32xbf16>
    %c0_36 = arith.constant 0 : index
    %c0_37 = arith.constant 0 : index
    %c0_38 = arith.constant 0 : index
    %65 = vector.load %arg10[%c0_36, %c0_37, %c0_38] : memref<4x32x128xbf16, #tpu.memory_space<vmem>>, vector<4x32x128xbf16>
    "tpu.trace_start"() <{level = 10 : i32, message = "hqe,hef->hqf"}> : () -> ()
    %cst_39 = arith.constant dense<0.000000e+00> : vector<4x8x128xf32>
    %66 = tpu.matmul %64, %65, %cst_39 {dimension_numbers = #tpu.dot_dimension_numbers<[2], [1], [1], [2], [0, 0, 0, 1, 1, 2], [0], [0]>} : vector<4x8x32xbf16>, vector<4x32x128xbf16>, vector<4x8x128xf32> -> vector<4x8x128xf32>
    "tpu.trace_stop"() : () -> ()
    %cst_40 = arith.constant dense<0.000000e+00> : vector<8x128xf32>
    %67 = vector.multi_reduction <add>, %66, %cst_40 [0] : vector<4x8x128xf32> to vector<8x128xf32>
    %c0_41 = arith.constant 0 : index
    %c0_42 = arith.constant 0 : index
    %68 = vector.load %arg11[%c0_41, %c0_42] : memref<1x128xf32, #tpu.memory_space<vmem>>, vector<1x128xf32>
    %69 = vector.shape_cast %68 : vector<1x128xf32> to vector<128xf32>
    %70 = vector.shape_cast %69 : vector<128xf32> to vector<1x128xf32>
    %71 = vector.broadcast %70 : vector<1x128xf32> to vector<8x128xf32>
    %72 = arith.addf %67, %71 : vector<8x128xf32>
    %73 = arith.addf %27, %72 : vector<8x128xf32>
    %c0_43 = arith.constant 0 : index
    %c0_44 = arith.constant 0 : index
    %74 = vector.load %arg12[%c0_43, %c0_44] : memref<1x128xf32, #tpu.memory_space<vmem>>, vector<1x128xf32>
    %75 = vector.shape_cast %74 : vector<1x128xf32> to vector<128xf32>
    %c0_45 = arith.constant 0 : index
    %c0_46 = arith.constant 0 : index
    %76 = vector.load %arg13[%c0_45, %c0_46] : memref<1x128xf32, #tpu.memory_space<vmem>>, vector<1x128xf32>
    %77 = vector.shape_cast %76 : vector<1x128xf32> to vector<128xf32>
    %cst_47 = arith.constant dense<0.000000e+00> : vector<8xf32>
    %78 = vector.multi_reduction <add>, %73, %cst_47 [1] : vector<8x128xf32> to vector<8xf32>
    %79 = vector.shape_cast %78 : vector<8xf32> to vector<8x1xf32>
    %cst_48 = arith.constant 1.280000e+02 : f32
    %80 = vector.broadcast %cst_48 : f32 to vector<8x1xf32>
    %81 = arith.divf %79, %80 : vector<8x1xf32>
    %82 = vector.broadcast %81 : vector<8x1xf32> to vector<8x128xf32>
    %83 = arith.subf %73, %82 : vector<8x128xf32>
    %84 = arith.mulf %83, %83 : vector<8x128xf32>
    %cst_49 = arith.constant dense<0.000000e+00> : vector<8xf32>
    %85 = vector.multi_reduction <add>, %84, %cst_49 [1] : vector<8x128xf32> to vector<8xf32>
    %86 = vector.shape_cast %85 : vector<8xf32> to vector<8x1xf32>
    %cst_50 = arith.constant 1.280000e+02 : f32
    %87 = vector.broadcast %cst_50 : f32 to vector<8x1xf32>
    %88 = arith.divf %86, %87 : vector<8x1xf32>
    %cst_51 = arith.constant 9.99999974E-6 : f32
    %89 = vector.broadcast %cst_51 : f32 to vector<8x1xf32>
    %90 = arith.addf %88, %89 : vector<8x1xf32>
    %91 = math.rsqrt %90 : vector<8x1xf32>
    %92 = vector.broadcast %91 : vector<8x1xf32> to vector<8x128xf32>
    %93 = arith.mulf %83, %92 : vector<8x128xf32>
    %94 = vector.shape_cast %75 : vector<128xf32> to vector<1x128xf32>
    %95 = vector.broadcast %94 : vector<1x128xf32> to vector<8x128xf32>
    %96 = arith.mulf %93, %95 : vector<8x128xf32>
    %97 = vector.shape_cast %77 : vector<128xf32> to vector<1x128xf32>
    %98 = vector.broadcast %97 : vector<1x128xf32> to vector<8x128xf32>
    %99 = arith.addf %96, %98 : vector<8x128xf32>
    %c0_52 = arith.constant 0 : index
    %c0_53 = arith.constant 0 : index
    %100 = vector.load %arg14[%c0_52, %c0_53] : memref<128x512xbf16, #tpu.memory_space<vmem>>, vector<128x512xbf16>
    %101 = arith.truncf %99 : vector<8x128xf32> to vector<8x128xbf16>
    %cst_54 = arith.constant dense<0.000000e+00> : vector<8x512xf32>
    %102 = tpu.matmul %101, %100, %cst_54 {dimension_numbers = #tpu.dot_dimension_numbers<[1], [0], [0], [1], [0, 0, 1, 1], [], []>} : vector<8x128xbf16>, vector<128x512xbf16>, vector<8x512xf32> -> vector<8x512xf32>
    %c0_55 = arith.constant 0 : index
    %c0_56 = arith.constant 0 : index
    %103 = vector.load %arg15[%c0_55, %c0_56] : memref<1x512xf32, #tpu.memory_space<vmem>>, vector<1x512xf32>
    %104 = vector.shape_cast %103 : vector<1x512xf32> to vector<512xf32>
    %105 = vector.shape_cast %104 : vector<512xf32> to vector<1x512xf32>
    %106 = vector.broadcast %105 : vector<1x512xf32> to vector<8x512xf32>
    %107 = arith.addf %102, %106 : vector<8x512xf32>
    %108 = arith.mulf %107, %107 : vector<8x512xf32>
    %109 = arith.mulf %107, %108 : vector<8x512xf32>
    %cst_57 = arith.constant 4.471500e-02 : f32
    %110 = vector.broadcast %cst_57 : f32 to vector<8x512xf32>
    %111 = arith.mulf %110, %109 : vector<8x512xf32>
    %112 = arith.addf %107, %111 : vector<8x512xf32>
    %cst_58 = arith.constant 0.797884583 : f32
    %113 = vector.broadcast %cst_58 : f32 to vector<8x512xf32>
    %114 = arith.mulf %113, %112 : vector<8x512xf32>
    %115 = math.tanh %114 : vector<8x512xf32>
    %cst_59 = arith.constant 1.000000e+00 : f32
    %116 = vector.broadcast %cst_59 : f32 to vector<8x512xf32>
    %117 = arith.addf %116, %115 : vector<8x512xf32>
    %cst_60 = arith.constant 5.000000e-01 : f32
    %118 = vector.broadcast %cst_60 : f32 to vector<8x512xf32>
    %119 = arith.mulf %118, %117 : vector<8x512xf32>
    %120 = arith.mulf %107, %119 : vector<8x512xf32>
    %c0_61 = arith.constant 0 : index
    %c0_62 = arith.constant 0 : index
    %121 = vector.load %arg16[%c0_61, %c0_62] : memref<512x128xbf16, #tpu.memory_space<vmem>>, vector<512x128xbf16>
    %122 = arith.truncf %120 : vector<8x512xf32> to vector<8x512xbf16>
    %cst_63 = arith.constant dense<0.000000e+00> : vector<8x128xf32>
    %123 = tpu.matmul %122, %121, %cst_63 {dimension_numbers = #tpu.dot_dimension_numbers<[1], [0], [0], [1], [0, 0, 1, 1], [], []>} : vector<8x512xbf16>, vector<512x128xbf16>, vector<8x128xf32> -> vector<8x128xf32>
    %c0_64 = arith.constant 0 : index
    %c0_65 = arith.constant 0 : index
    %124 = vector.load %arg17[%c0_64, %c0_65] : memref<1x128xf32, #tpu.memory_space<vmem>>, vector<1x128xf32>
    %125 = vector.shape_cast %124 : vector<1x128xf32> to vector<128xf32>
    %126 = vector.shape_cast %125 : vector<128xf32> to vector<1x128xf32>
    %127 = vector.broadcast %126 : vector<1x128xf32> to vector<8x128xf32>
    %128 = arith.addf %123, %127 : vector<8x128xf32>
    %129 = arith.addf %99, %128 : vector<8x128xf32>
    %c0_66 = arith.constant 0 : index
    %c0_67 = arith.constant 0 : index
    %c0_68 = arith.constant 0 : index
    %130 = vector.load %arg18[%c0_66, %c0_67, %c0_68] : memref<1x8x128xf32, #tpu.memory_space<vmem>>, vector<1x8x128xf32>
    %131 = vector.shape_cast %130 : vector<1x8x128xf32> to vector<8x128xf32>
    %132 = vector.shape_cast %129 : vector<8x128xf32> to vector<1x8x128xf32>
    tpu.vector_store %arg18[%c0_66, %c0_67, %c0_68], %132 {strides = array<i32>} : memref<1x8x128xf32, #tpu.memory_space<vmem>>, vector<1x8x128xf32>,
    return
  }
  func.func @transform_0(%arg0: i32) -> (i32, i32, i32) {
    %c0_i32 = arith.constant 0 : i32
    %c0_i32_0 = arith.constant 0 : i32
    %c0_i32_1 = arith.constant 0 : i32
    return %arg0, %c0_i32, %c0_i32_0 : i32, i32, i32
  }
  func.func @transform_1(%arg0: i32) -> (i32, i32) {
    %c0_i32 = arith.constant 0 : i32
    %c0_i32_0 = arith.constant 0 : i32
    %c0_i32_1 = arith.constant 0 : i32
    return %c0_i32, %c0_i32_0 : i32, i32
  }
  func.func @transform_2(%arg0: i32) -> (i32, i32) {
    %c0_i32 = arith.constant 0 : i32
    %c0_i32_0 = arith.constant 0 : i32
    %c0_i32_1 = arith.constant 0 : i32
    return %c0_i32, %c0_i32_0 : i32, i32
  }
  func.func @transform_3(%arg0: i32) -> (i32, i32, i32) {
    %c0_i32 = arith.constant 0 : i32
    %c0_i32_0 = arith.constant 0 : i32
    %c0_i32_1 = arith.constant 0 : i32
    %c0_i32_2 = arith.constant 0 : i32
    return %c0_i32, %c0_i32_0, %c0_i32_1 : i32, i32, i32
  }
  func.func @transform_4(%arg0: i32) -> (i32, i32, i32) {
    %c0_i32 = arith.constant 0 : i32
    %c0_i32_0 = arith.constant 0 : i32
    %c0_i32_1 = arith.constant 0 : i32
    %c0_i32_2 = arith.constant 0 : i32
    return %c0_i32, %c0_i32_0, %c0_i32_1 : i32, i32, i32
  }
  func.func @transform_5(%arg0: i32) -> (i32, i32, i32) {
    %c0_i32 = arith.constant 0 : i32
    %c0_i32_0 = arith.constant 0 : i32
    %c0_i32_1 = arith.constant 0 : i32
    %c0_i32_2 = arith.constant 0 : i32
    return %c0_i32, %c0_i32_0, %c0_i32_1 : i32, i32, i32
  }
  func.func @transform_6(%arg0: i32) -> (i32, i32, i32) {
    %c0_i32 = arith.constant 0 : i32
    %c0_i32_0 = arith.constant 0 : i32
    %c0_i32_1 = arith.constant 0 : i32
    %c0_i32_2 = arith.constant 0 : i32
    return %c0_i32, %c0_i32_0, %c0_i32_1 : i32, i32, i32
  }
  func.func @transform_7(%arg0: i32) -> (i32, i32, i32) {
    %c0_i32 = arith.constant 0 : i32
    %c0_i32_0 = arith.constant 0 : i32
    %c0_i32_1 = arith.constant 0 : i32
    %c0_i32_2 = arith.constant 0 : i32
    return %c0_i32, %c0_i32_0, %c0_i32_1 : i32, i32, i32
  }
  func.func @transform_8(%arg0: i32) -> (i32, i32, i32) {
    %c0_i32 = arith.constant 0 : i32
    %c0_i32_0 = arith.constant 0 : i32
    %c0_i32_1 = arith.constant 0 : i32
    %c0_i32_2 = arith.constant 0 : i32
    return %c0_i32, %c0_i32_0, %c0_i32_1 : i32, i32, i32
  }
  func.func @transform_9(%arg0: i32) -> (i32, i32, i32) {
    %c0_i32 = arith.constant 0 : i32
    %c0_i32_0 = arith.constant 0 : i32
    %c0_i32_1 = arith.constant 0 : i32
    %c0_i32_2 = arith.constant 0 : i32
    return %c0_i32, %c0_i32_0, %c0_i32_1 : i32, i32, i32
  }
  func.func @transform_10(%arg0: i32) -> (i32, i32) {
    %c0_i32 = arith.constant 0 : i32
    %c0_i32_0 = arith.constant 0 : i32
    %c0_i32_1 = arith.constant 0 : i32
    return %c0_i32, %c0_i32_0 : i32, i32
  }
  func.func @transform_11(%arg0: i32) -> (i32, i32) {
    %c0_i32 = arith.constant 0 : i32
    %c0_i32_0 = arith.constant 0 : i32
    %c0_i32_1 = arith.constant 0 : i32
    return %c0_i32, %c0_i32_0 : i32, i32
  }
  func.func @transform_12(%arg0: i32) -> (i32, i32) {
    %c0_i32 = arith.constant 0 : i32
    %c0_i32_0 = arith.constant 0 : i32
    %c0_i32_1 = arith.constant 0 : i32
    return %c0_i32, %c0_i32_0 : i32, i32
  }
  func.func @transform_13(%arg0: i32) -> (i32, i32) {
    %c0_i32 = arith.constant 0 : i32
    %c0_i32_0 = arith.constant 0 : i32
    %c0_i32_1 = arith.constant 0 : i32
    return %c0_i32, %c0_i32_0 : i32, i32
  }
  func.func @transform_14(%arg0: i32) -> (i32, i32) {
    %c0_i32 = arith.constant 0 : i32
    %c0_i32_0 = arith.constant 0 : i32
    %c0_i32_1 = arith.constant 0 : i32
    return %c0_i32, %c0_i32_0 : i32, i32
  }
  func.func @transform_15(%arg0: i32) -> (i32, i32) {
    %c0_i32 = arith.constant 0 : i32
    %c0_i32_0 = arith.constant 0 : i32
    %c0_i32_1 = arith.constant 0 : i32
    return %c0_i32, %c0_i32_0 : i32, i32
  }
  func.func @transform_16(%arg0: i32) -> (i32, i32) {
    %c0_i32 = arith.constant 0 : i32
    %c0_i32_0 = arith.constant 0 : i32
    %c0_i32_1 = arith.constant 0 : i32
    return %c0_i32, %c0_i32_0 : i32, i32
  }
  func.func @transform_17(%arg0: i32) -> (i32, i32, i32) {
    %c0_i32 = arith.constant 0 : i32
    %c0_i32_0 = arith.constant 0 : i32
    %c0_i32_1 = arith.constant 0 : i32
    return %arg0, %c0_i32, %c0_i32_0 : i32, i32, i32
  }
}

</mosaic_0001>

<llo_original>
// kernel: tpu_custom_call.1
$region0: #{tpu_custom_call.1}
  #allocation0 [shape = 'u32[]', space=smem, size = 0x4, offset = 0x4, fixed_abs, tag = 'smem constant byte address 0x4 - core index']
  #allocation1 [shape = 'u32[72,128]{1,0:T(1,128)}', space=vmem, size = 0x9000, scoped, tag = 'internal scratch']
  %s0 = inlined_call_operand.vmem [shape: f32[2,8,128], index: 0, kind: input, shape index: {}]
  %s1 = inlined_call_operand.vmem [shape: f32[1,128], index: 1, kind: input, shape index: {}]
  %s2 = inlined_call_operand.vmem [shape: f32[1,128], index: 2, kind: input, shape index: {}]
  %s3 = inlined_call_operand.vmem [shape: bf16[4,128,32], index: 3, kind: input, shape index: {}]
  %s4 = inlined_call_operand.vmem [shape: f32[4,1,32], index: 4, kind: input, shape index: {}]
  %s5 = inlined_call_operand.vmem [shape: bf16[4,128,32], index: 5, kind: input, shape index: {}]
  %s6 = inlined_call_operand.vmem [shape: f32[4,1,32], index: 6, kind: input, shape index: {}]
  %s7 = inlined_call_operand.vmem [shape: bf16[4,128,32], index: 7, kind: input, shape index: {}]
  %s8 = inlined_call_operand.vmem [shape: f32[4,1,32], index: 8, kind: input, shape index: {}]
  %s9 = inlined_call_operand.vmem [shape: bf16[4,32,128], index: 9, kind: input, shape index: {}]
  %s10 = inlined_call_operand.vmem [shape: f32[1,128], index: 10, kind: input, shape index: {}]
  %s11 = inlined_call_operand.vmem [shape: f32[1,128], index: 11, kind: input, shape index: {}]
  %s12 = inlined_call_operand.vmem [shape: f32[1,128], index: 12, kind: input, shape index: {}]
  %s13 = inlined_call_operand.vmem [shape: bf16[128,512], index: 13, kind: input, shape index: {}]
  %s14 = inlined_call_operand.vmem [shape: f32[1,512], index: 14, kind: input, shape index: {}]
  %s15 = inlined_call_operand.vmem [shape: bf16[512,128], index: 15, kind: input, shape index: {}]
  %s16 = inlined_call_operand.vmem [shape: f32[1,128], index: 16, kind: input, shape index: {}]
  %s17 = inlined_call_operand.hbm [shape: f32[2,8,128], index: 17, kind: output, shape index: {}]
  %s18 = sld [smem:[#allocation0]]
  $region101: #{tpu_custom_call.1} parent=0
    _
  %s20 = ssub.s32 1, %s18
  %s21 = scalar_select 0, %s20, %s18
  $region1: #{tpu_custom_call.1} parent=0
    #allocation2 [shape = 'u8[8192]{0}', space=vmem, size = 0x2000, scoped, tag = 'output window, operand 0']
    #allocation3 [shape = 's32[2]{0}', space=sflag, size = 0x8, scoped, tag = 'scoped memory for tpu_custom_call.1']
    %22 = vsyncpa [#allocation3], 0
    %s23 = scalar_lea.sflag [#allocation3], 1
    %24 = vsyncpa %s23, 0
    loop: start=0, step=1, limit=4
    $region2: #{tpu_custom_call.1} parent=1 // loop_pre_header
      _
    $region3: #{tpu_custom_call.1} parent=1 // loop_header
      %s26 = sphi 0, %s30
      %p27 = scmp.ge.s32.totalorder %s26, 4
      %s36 = sphi 0, %s38
      %s39 = sphi 0, %s36
      %s40 = sphi 0, %s39
      %s56 = sphi 0, %s40
      %s60 = sphi 0, %s60
      %s62 = sphi 0, %s60
      %s63 = sphi 0, %s62
      %s77 = sphi 0, %s63
      %s81 = sphi 0, %s81
      %s83 = sphi 0, %s81
      %s84 = sphi 0, %s83
      %s98 = sphi 0, %s84
      %s102 = sphi 0, %s102
      %s104 = sphi 0, %s102
      %s105 = sphi 0, %s104
      %s119 = sphi 0, %s105
      %s123 = sphi 0, %s123
      %s125 = sphi 0, %s123
      %s126 = sphi 0, %s125
      %s140 = sphi 0, %s126
      %s144 = sphi 0, %s144
      %s146 = sphi 0, %s144
      %s147 = sphi 0, %s146
      %s161 = sphi 0, %s147
      %s165 = sphi 0, %s165
      %s167 = sphi 0, %s165
      %s168 = sphi 0, %s167
      %s182 = sphi 0, %s168
      %s186 = sphi 0, %s186
      %s188 = sphi 0, %s186
      %s189 = sphi 0, %s188
      %s203 = sphi 0, %s189
      %s207 = sphi 0, %s207
      %s209 = sphi 0, %s207
      %s210 = sphi 0, %s209
      %s224 = sphi 0, %s210
      %s228 = sphi 0, %s228
      %s230 = sphi 0, %s228
      %s231 = sphi 0, %s230
      %s245 = sphi 0, %s231
      %s249 = sphi 0, %s249
      %s251 = sphi 0, %s249
      %s252 = sphi 0, %s251
      %s266 = sphi 0, %s252
      %s270 = sphi 0, %s270
      %s272 = sphi 0, %s270
      %s273 = sphi 0, %s272
      %s287 = sphi 0, %s273
      %s291 = sphi 0, %s291
      %s293 = sphi 0, %s291
      %s294 = sphi 0, %s293
      %s308 = sphi 0, %s294
      %s312 = sphi 0, %s312
      %s314 = sphi 0, %s312
      %s315 = sphi 0, %s314
      %s329 = sphi 0, %s315
      %s333 = sphi 0, %s333
      %s335 = sphi 0, %s333
      %s336 = sphi 0, %s335
      %s350 = sphi 0, %s336
      %s354 = sphi 0, %s354
      %s356 = sphi 0, %s354
      %s357 = sphi 0, %s356
      %s371 = sphi 0, %s357
      %s375 = sphi 0, %s375
      %s377 = sphi 0, %s375
      %s378 = sphi 0, %s377
      %s392 = sphi 0, %s378
      %s398 = sphi 0, %s400
      %s401 = sphi 0, %s398
      %s402 = sphi 0, %s401
      %s418 = sphi 0, %s402
    $region4: #{tpu_custom_call.1} parent=1 // loop_header_branch
      %29 = sbr.rel (%p27) target = $region8
    $region5: #{tpu_custom_call.1} parent=1 // loop_body
      %s31 = ssub.s32 %s26, 1
      %s32 = ssub.s32 %s26, 2
      %s33 = sadd.s32 %s26, 1
      %s34 = ssub.s32 %s26, %s33
      %p35 = scmp.eq.s32.totalorder %s34, 0
      %s37 = sadd.s32 %s36, 1
      %s38 = scalar_select %p35, %s36, %s37
      %p41 = pneg %p35
      %p42 = scmp.eq.s32.totalorder %s26, 1
      %p43 = por %p41, %p42
      %p44 = scmp.ne.s32.totalorder %s36, %s39
      %p45 = scmp.eq.s32.totalorder %s26, 0
      %p46 = por %p44, %p45
      %p47 = scmp.ne.s32.totalorder %s36, %s39
      %p48 = scmp.eq.s32.totalorder %s31, 1
      %p49 = por %p47, %p48
      %p50 = scmp.ne.s32.totalorder %s39, %s40
      %p51 = scmp.eq.s32.totalorder %s31, 0
      %p52 = por %p50, %p51
      %p53 = scmp.ne.s32.totalorder %s39, %s40
      %p54 = scmp.eq.s32.totalorder %s32, 1
      %p55 = por %p53, %p54
      %p57 = scmp.ne.s32.totalorder %s40, %s56
      %p58 = scmp.eq.s32.totalorder %s32, 0
      %p59 = por %p57, %p58
      %s61 = sadd.s32 %s60, 1
      %p64 = scmp.eq.s32.totalorder %s26, 1
      %p65 = scmp.ne.s32.totalorder %s60, %s62
      %p66 = scmp.eq.s32.totalorder %s26, 0
      %p67 = por %p65, %p66
      %p68 = scmp.ne.s32.totalorder %s60, %s62
      %p69 = scmp.eq.s32.totalorder %s31, 1
      %p70 = por %p68, %p69
      %p71 = scmp.ne.s32.totalorder %s62, %s63
      %p72 = scmp.eq.s32.totalorder %s31, 0
      %p73 = por %p71, %p72
      %p74 = scmp.ne.s32.totalorder %s62, %s63
      %p75 = scmp.eq.s32.totalorder %s32, 1
      %p76 = por %p74, %p75
      %p78 = scmp.ne.s32.totalorder %s63, %s77
      %p79 = scmp.eq.s32.totalorder %s32, 0
      %p80 = por %p78, %p79
      %s82 = sadd.s32 %s81, 1
      %p85 = scmp.eq.s32.totalorder %s26, 1
      %p86 = scmp.ne.s32.totalorder %s81, %s83
      %p87 = scmp.eq.s32.totalorder %s26, 0
      %p88 = por %p86, %p87
      %p89 = scmp.ne.s32.totalorder %s81, %s83
      %p90 = scmp.eq.s32.totalorder %s31, 1
      %p91 = por %p89, %p90
      %p92 = scmp.ne.s32.totalorder %s83, %s84
      %p93 = scmp.eq.s32.totalorder %s31, 0
      %p94 = por %p92, %p93
      %p95 = scmp.ne.s32.totalorder %s83, %s84
      %p96 = scmp.eq.s32.totalorder %s32, 1
      %p97 = por %p95, %p96
      %p99 = scmp.ne.s32.totalorder %s84, %s98
      %p100 = scmp.eq.s32.totalorder %s32, 0
      %p101 = por %p99, %p100
      %s103 = sadd.s32 %s102, 1
      %p106 = scmp.eq.s32.totalorder %s26, 1
      %p107 = scmp.ne.s32.totalorder %s102, %s104
      %p108 = scmp.eq.s32.totalorder %s26, 0
      %p109 = por %p107, %p108
      %p110 = scmp.ne.s32.totalorder %s102, %s104
      %p111 = scmp.eq.s32.totalorder %s31, 1
      %p112 = por %p110, %p111
      %p113 = scmp.ne.s32.totalorder %s104, %s105
      %p114 = scmp.eq.s32.totalorder %s31, 0
      %p115 = por %p113, %p114
      %p116 = scmp.ne.s32.totalorder %s104, %s105
      %p117 = scmp.eq.s32.totalorder %s32, 1
      %p118 = por %p116, %p117
      %p120 = scmp.ne.s32.totalorder %s105, %s119
      %p121 = scmp.eq.s32.totalorder %s32, 0
      %p122 = por %p120, %p121
      %s124 = sadd.s32 %s123, 1
      %p127 = scmp.eq.s32.totalorder %s26, 1
      %p128 = scmp.ne.s32.totalorder %s123, %s125
      %p129 = scmp.eq.s32.totalorder %s26, 0
      %p130 = por %p128, %p129
      %p131 = scmp.ne.s32.totalorder %s123, %s125
      %p132 = scmp.eq.s32.totalorder %s31, 1
      %p133 = por %p131, %p132
      %p134 = scmp.ne.s32.totalorder %s125, %s126
      %p135 = scmp.eq.s32.totalorder %s31, 0
      %p136 = por %p134, %p135
      %p137 = scmp.ne.s32.totalorder %s125, %s126
      %p138 = scmp.eq.s32.totalorder %s32, 1
      %p139 = por %p137, %p138
      %p141 = scmp.ne.s32.totalorder %s126, %s140
      %p142 = scmp.eq.s32.totalorder %s32, 0
      %p143 = por %p141, %p142
      %s145 = sadd.s32 %s144, 1
      %p148 = scmp.eq.s32.totalorder %s26, 1
      %p149 = scmp.ne.s32.totalorder %s144, %s146
      %p150 = scmp.eq.s32.totalorder %s26, 0
      %p151 = por %p149, %p150
      %p152 = scmp.ne.s32.totalorder %s144, %s146
      %p153 = scmp.eq.s32.totalorder %s31, 1
      %p154 = por %p152, %p153
      %p155 = scmp.ne.s32.totalorder %s146, %s147
      %p156 = scmp.eq.s32.totalorder %s31, 0
      %p157 = por %p155, %p156
      %p158 = scmp.ne.s32.totalorder %s146, %s147
      %p159 = scmp.eq.s32.totalorder %s32, 1
      %p160 = por %p158, %p159
      %p162 = scmp.ne.s32.totalorder %s147, %s161
      %p163 = scmp.eq.s32.totalorder %s32, 0
      %p164 = por %p162, %p163
      %s166 = sadd.s32 %s165, 1
      %p169 = scmp.eq.s32.totalorder %s26, 1
      %p170 = scmp.ne.s32.totalorder %s165, %s167
      %p171 = scmp.eq.s32.totalorder %s26, 0
      %p172 = por %p170, %p171
      %p173 = scmp.ne.s32.totalorder %s165, %s167
      %p174 = scmp.eq.s32.totalorder %s31, 1
      %p175 = por %p173, %p174
      %p176 = scmp.ne.s32.totalorder %s167, %s168
      %p177 = scmp.eq.s32.totalorder %s31, 0
      %p178 = por %p176, %p177
      %p179 = scmp.ne.s32.totalorder %s167, %s168
      %p180 = scmp.eq.s32.totalorder %s32, 1
      %p181 = por %p179, %p180
      %p183 = scmp.ne.s32.totalorder %s168, %s182
      %p184 = scmp.eq.s32.totalorder %s32, 0
      %p185 = por %p183, %p184
      %s187 = sadd.s32 %s186, 1
      %p190 = scmp.eq.s32.totalorder %s26, 1
      %p191 = scmp.ne.s32.totalorder %s186, %s188
      %p192 = scmp.eq.s32.totalorder %s26, 0
      %p193 = por %p191, %p192
      %p194 = scmp.ne.s32.totalorder %s186, %s188
      %p195 = scmp.eq.s32.totalorder %s31, 1
      %p196 = por %p194, %p195
      %p197 = scmp.ne.s32.totalorder %s188, %s189
      %p198 = scmp.eq.s32.totalorder %s31, 0
      %p199 = por %p197, %p198
      %p200 = scmp.ne.s32.totalorder %s188, %s189
      %p201 = scmp.eq.s32.totalorder %s32, 1
      %p202 = por %p200, %p201
      %p204 = scmp.ne.s32.totalorder %s189, %s203
      %p205 = scmp.eq.s32.totalorder %s32, 0
      %p206 = por %p204, %p205
      %s208 = sadd.s32 %s207, 1
      %p211 = scmp.eq.s32.totalorder %s26, 1
      %p212 = scmp.ne.s32.totalorder %s207, %s209
      %p213 = scmp.eq.s32.totalorder %s26, 0
      %p214 = por %p212, %p213
      %p215 = scmp.ne.s32.totalorder %s207, %s209
      %p216 = scmp.eq.s32.totalorder %s31, 1
      %p217 = por %p215, %p216
      %p218 = scmp.ne.s32.totalorder %s209, %s210
      %p219 = scmp.eq.s32.totalorder %s31, 0
      %p220 = por %p218, %p219
      %p221 = scmp.ne.s32.totalorder %s209, %s210
      %p222 = scmp.eq.s32.totalorder %s32, 1
      %p223 = por %p221, %p222
      %p225 = scmp.ne.s32.totalorder %s210, %s224
      %p226 = scmp.eq.s32.totalorder %s32, 0
      %p227 = por %p225, %p226
      %s229 = sadd.s32 %s228, 1
      %p232 = scmp.eq.s32.totalorder %s26, 1
      %p233 = scmp.ne.s32.totalorder %s228, %s230
      %p234 = scmp.eq.s32.totalorder %s26, 0
      %p235 = por %p233, %p234
      %p236 = scmp.ne.s32.totalorder %s228, %s230
      %p237 = scmp.eq.s32.totalorder %s31, 1
      %p238 = por %p236, %p237
      %p239 = scmp.ne.s32.totalorder %s230, %s231
      %p240 = scmp.eq.s32.totalorder %s31, 0
      %p241 = por %p239, %p240
      %p242 = scmp.ne.s32.totalorder %s230, %s231
      %p243 = scmp.eq.s32.totalorder %s32, 1
      %p244 = por %p242, %p243
      %p246 = scmp.ne.s32.totalorder %s231, %s245
      %p247 = scmp.eq.s32.totalorder %s32, 0
      %p248 = por %p246, %p247
      %s250 = sadd.s32 %s249, 1
      %p253 = scmp.eq.s32.totalorder %s26, 1
      %p254 = scmp.ne.s32.totalorder %s249, %s251
      %p255 = scmp.eq.s32.totalorder %s26, 0
      %p256 = por %p254, %p255
      %p257 = scmp.ne.s32.totalorder %s249, %s251
      %p258 = scmp.eq.s32.totalorder %s31, 1
      %p259 = por %p257, %p258
      %p260 = scmp.ne.s32.totalorder %s251, %s252
      %p261 = scmp.eq.s32.totalorder %s31, 0
      %p262 = por %p260, %p261
      %p263 = scmp.ne.s32.totalorder %s251, %s252
      %p264 = scmp.eq.s32.totalorder %s32, 1
      %p265 = por %p263, %p264
      %p267 = scmp.ne.s32.totalorder %s252, %s266
      %p268 = scmp.eq.s32.totalorder %s32, 0
      %p269 = por %p267, %p268
      %s271 = sadd.s32 %s270, 1
      %p274 = scmp.eq.s32.totalorder %s26, 1
      %p275 = scmp.ne.s32.totalorder %s270, %s272
      %p276 = scmp.eq.s32.totalorder %s26, 0
      %p277 = por %p275, %p276
      %p278 = scmp.ne.s32.totalorder %s270, %s272
      %p279 = scmp.eq.s32.totalorder %s31, 1
      %p280 = por %p278, %p279
      %p281 = scmp.ne.s32.totalorder %s272, %s273
      %p282 = scmp.eq.s32.totalorder %s31, 0
      %p283 = por %p281, %p282
      %p284 = scmp.ne.s32.totalorder %s272, %s273
      %p285 = scmp.eq.s32.totalorder %s32, 1
      %p286 = por %p284, %p285
      %p288 = scmp.ne.s32.totalorder %s273, %s287
      %p289 = scmp.eq.s32.totalorder %s32, 0
      %p290 = por %p288, %p289
      %s292 = sadd.s32 %s291, 1
      %p295 = scmp.eq.s32.totalorder %s26, 1
      %p296 = scmp.ne.s32.totalorder %s291, %s293
      %p297 = scmp.eq.s32.totalorder %s26, 0
      %p298 = por %p296, %p297
      %p299 = scmp.ne.s32.totalorder %s291, %s293
      %p300 = scmp.eq.s32.totalorder %s31, 1
      %p301 = por %p299, %p300
      %p302 = scmp.ne.s32.totalorder %s293, %s294
      %p303 = scmp.eq.s32.totalorder %s31, 0
      %p304 = por %p302, %p303
      %p305 = scmp.ne.s32.totalorder %s293, %s294
      %p306 = scmp.eq.s32.totalorder %s32, 1
      %p307 = por %p305, %p306
      %p309 = scmp.ne.s32.totalorder %s294, %s308
      %p310 = scmp.eq.s32.totalorder %s32, 0
      %p311 = por %p309, %p310
      %s313 = sadd.s32 %s312, 1
      %p316 = scmp.eq.s32.totalorder %s26, 1
      %p317 = scmp.ne.s32.totalorder %s312, %s314
      %p318 = scmp.eq.s32.totalorder %s26, 0
      %p319 = por %p317, %p318
      %p320 = scmp.ne.s32.totalorder %s312, %s314
      %p321 = scmp.eq.s32.totalorder %s31, 1
      %p322 = por %p320, %p321
      %p323 = scmp.ne.s32.totalorder %s314, %s315
      %p324 = scmp.eq.s32.totalorder %s31, 0
      %p325 = por %p323, %p324
      %p326 = scmp.ne.s32.totalorder %s314, %s315
      %p327 = scmp.eq.s32.totalorder %s32, 1
      %p328 = por %p326, %p327
      %p330 = scmp.ne.s32.totalorder %s315, %s329
      %p331 = scmp.eq.s32.totalorder %s32, 0
      %p332 = por %p330, %p331
      %s334 = sadd.s32 %s333, 1
      %p337 = scmp.eq.s32.totalorder %s26, 1
      %p338 = scmp.ne.s32.totalorder %s333, %s335
      %p339 = scmp.eq.s32.totalorder %s26, 0
      %p340 = por %p338, %p339
      %p341 = scmp.ne.s32.totalorder %s333, %s335
      %p342 = scmp.eq.s32.totalorder %s31, 1
      %p343 = por %p341, %p342
      %p344 = scmp.ne.s32.totalorder %s335, %s336
      %p345 = scmp.eq.s32.totalorder %s31, 0
      %p346 = por %p344, %p345
      %p347 = scmp.ne.s32.totalorder %s335, %s336
      %p348 = scmp.eq.s32.totalorder %s32, 1
      %p349 = por %p347, %p348
      %p351 = scmp.ne.s32.totalorder %s336, %s350
      %p352 = scmp.eq.s32.totalorder %s32, 0
      %p353 = por %p351, %p352
      %s355 = sadd.s32 %s354, 1
      %p358 = scmp.eq.s32.totalorder %s26, 1
      %p359 = scmp.ne.s32.totalorder %s354, %s356
      %p360 = scmp.eq.s32.totalorder %s26, 0
      %p361 = por %p359, %p360
      %p362 = scmp.ne.s32.totalorder %s354, %s356
      %p363 = scmp.eq.s32.totalorder %s31, 1
      %p364 = por %p362, %p363
      %p365 = scmp.ne.s32.totalorder %s356, %s357
      %p366 = scmp.eq.s32.totalorder %s31, 0
      %p367 = por %p365, %p366
      %p368 = scmp.ne.s32.totalorder %s356, %s357
      %p369 = scmp.eq.s32.totalorder %s32, 1
      %p370 = por %p368, %p369
      %p372 = scmp.ne.s32.totalorder %s357, %s371
      %p373 = scmp.eq.s32.totalorder %s32, 0
      %p374 = por %p372, %p373
      %s376 = sadd.s32 %s375, 1
      %p379 = scmp.eq.s32.totalorder %s26, 1
      %p380 = scmp.ne.s32.totalorder %s375, %s377
      %p381 = scmp.eq.s32.totalorder %s26, 0
      %p382 = por %p380, %p381
      %p383 = scmp.ne.s32.totalorder %s375, %s377
      %p384 = scmp.eq.s32.totalorder %s31, 1
      %p385 = por %p383, %p384
      %p386 = scmp.ne.s32.totalorder %s377, %s378
      %p387 = scmp.eq.s32.totalorder %s31, 0
      %p388 = por %p386, %p387
      %p389 = scmp.ne.s32.totalorder %s377, %s378
      %p390 = scmp.eq.s32.totalorder %s32, 1
      %p391 = por %p389, %p390
      %p393 = scmp.ne.s32.totalorder %s378, %s392
      %p394 = scmp.eq.s32.totalorder %s32, 0
      %p395 = por %p393, %p394
      %s396 = ssub.s32 %s26, %s33
      %p397 = scmp.eq.s32.totalorder %s396, 0
      %s399 = sadd.s32 %s398, 1
      %s400 = scalar_select %p397, %s398, %s399
      %p403 = pneg %p397
      %p404 = scmp.eq.s32.totalorder %s26, 1
      %p405 = por %p403, %p404
      %p406 = scmp.ne.s32.totalorder %s398, %s401
      %p407 = scmp.eq.s32.totalorder %s26, 0
      %p408 = por %p406, %p407
      %p409 = scmp.ne.s32.totalorder %s398, %s401
      %p410 = scmp.eq.s32.totalorder %s31, 1
      %p411 = por %p409, %p410
      %p412 = scmp.ne.s32.totalorder %s401, %s402
      %p413 = scmp.eq.s32.totalorder %s31, 0
      %p414 = por %p412, %p413
      %p415 = scmp.ne.s32.totalorder %s401, %s402
      %p416 = scmp.eq.s32.totalorder %s32, 1
      %p417 = por %p415, %p416
      %p419 = scmp.ne.s32.totalorder %s402, %s418
      %p420 = scmp.eq.s32.totalorder %s32, 0
      %p421 = por %p419, %p420
      %p422 = scmp.le.s32.totalorder 1, %s26
      %p423 = scmp.lt.s32.totalorder %s26, 3
      %p424 = pnand %p422, %p423
      %p425 = pneg %p424
      // Predicated region
      $region9: #{tpu_custom_call.1} parent=5 // pred_check
        _
      $region10: #{tpu_custom_call.1} parent=5 // pred_check_branch
        %427 = sbr.rel (%p424) target = $region12
      $region11: #{tpu_custom_call.1} parent=5 // pred_region
        %s428 = ssub.s32 %s26, 1
        // Predicated region
        $region13: #{tpu_custom_call.1} parent=11 // pred_check
          %p429 = pneg %p73
        $region14: #{tpu_custom_call.1} parent=11 // pred_check_branch
          %431 = sbr.rel (%p429) target = $region16
        $region15: #{tpu_custom_call.1} parent=11 // pred_region
          _
        $region16: #{tpu_custom_call.1} parent=11 // pred_fallthru
          _
        // Predicated region
        $region17: #{tpu_custom_call.1} parent=11 // pred_check
          %p432 = pneg %p94
        $region18: #{tpu_custom_call.1} parent=11 // pred_check_branch
          %434 = sbr.rel (%p432) target = $region20
        $region19: #{tpu_custom_call.1} parent=11 // pred_region
          _
        $region20: #{tpu_custom_call.1} parent=11 // pred_fallthru
          _
        // Predicated region
        $region21: #{tpu_custom_call.1} parent=11 // pred_check
          %p435 = pneg %p115
        $region22: #{tpu_custom_call.1} parent=11 // pred_check_branch
          %437 = sbr.rel (%p435) target = $region24
        $region23: #{tpu_custom_call.1} parent=11 // pred_region
          _
        $region24: #{tpu_custom_call.1} parent=11 // pred_fallthru
          _
        // Predicated region
        $region25: #{tpu_custom_call.1} parent=11 // pred_check
          %p438 = pneg %p136
        $region26: #{tpu_custom_call.1} parent=11 // pred_check_branch
          %440 = sbr.rel (%p438) target = $region28
        $region27: #{tpu_custom_call.1} parent=11 // pred_region
          _
        $region28: #{tpu_custom_call.1} parent=11 // pred_fallthru
          _
        // Predicated region
        $region29: #{tpu_custom_call.1} parent=11 // pred_check
          %p441 = pneg %p157
        $region30: #{tpu_custom_call.1} parent=11 // pred_check_branch
          %443 = sbr.rel (%p441) target = $region32
        $region31: #{tpu_custom_call.1} parent=11 // pred_region
          _
        $region32: #{tpu_custom_call.1} parent=11 // pred_fallthru
          _
        // Predicated region
        $region33: #{tpu_custom_call.1} parent=11 // pred_check
          %p444 = pneg %p178
        $region34: #{tpu_custom_call.1} parent=11 // pred_check_branch
          %446 = sbr.rel (%p444) target = $region36
        $region35: #{tpu_custom_call.1} parent=11 // pred_region
          _
        $region36: #{tpu_custom_call.1} parent=11 // pred_fallthru
          _
        // Predicated region
        $region37: #{tpu_custom_call.1} parent=11 // pred_check
          %p447 = pneg %p199
        $region38: #{tpu_custom_call.1} parent=11 // pred_check_branch
          %449 = sbr.rel (%p447) target = $region40
        $region39: #{tpu_custom_call.1} parent=11 // pred_region
          _
        $region40: #{tpu_custom_call.1} parent=11 // pred_fallthru
          _
        // Predicated region
        $region41: #{tpu_custom_call.1} parent=11 // pred_check
          %p450 = pneg %p220
        $region42: #{tpu_custom_call.1} parent=11 // pred_check_branch
          %452 = sbr.rel (%p450) target = $region44
        $region43: #{tpu_custom_call.1} parent=11 // pred_region
          _
        $region44: #{tpu_custom_call.1} parent=11 // pred_fallthru
          _
        // Predicated region
        $region45: #{tpu_custom_call.1} parent=11 // pred_check
          %p453 = pneg %p241
        $region46: #{tpu_custom_call.1} parent=11 // pred_check_branch
          %455 = sbr.rel (%p453) target = $region48
        $region47: #{tpu_custom_call.1} parent=11 // pred_region
          _
        $region48: #{tpu_custom_call.1} parent=11 // pred_fallthru
          _
        // Predicated region
        $region49: #{tpu_custom_call.1} parent=11 // pred_check
          %p456 = pneg %p262
        $region50: #{tpu_custom_call.1} parent=11 // pred_check_branch
          %458 = sbr.rel (%p456) target = $region52
        $region51: #{tpu_custom_call.1} parent=11 // pred_region
          _
        $region52: #{tpu_custom_call.1} parent=11 // pred_fallthru
          _
        // Predicated region
        $region53: #{tpu_custom_call.1} parent=11 // pred_check
          %p459 = pneg %p283
        $region54: #{tpu_custom_call.1} parent=11 // pred_check_branch
          %461 = sbr.rel (%p459) target = $region56
        $region55: #{tpu_custom_call.1} parent=11 // pred_region
          _
        $region56: #{tpu_custom_call.1} parent=11 // pred_fallthru
          _
        // Predicated region
        $region57: #{tpu_custom_call.1} parent=11 // pred_check
          %p462 = pneg %p304
        $region58: #{tpu_custom_call.1} parent=11 // pred_check_branch
          %464 = sbr.rel (%p462) target = $region60
        $region59: #{tpu_custom_call.1} parent=11 // pred_region
          _
        $region60: #{tpu_custom_call.1} parent=11 // pred_fallthru
          _
        // Predicated region
        $region61: #{tpu_custom_call.1} parent=11 // pred_check
          %p465 = pneg %p325
        $region62: #{tpu_custom_call.1} parent=11 // pred_check_branch
          %467 = sbr.rel (%p465) target = $region64
        $region63: #{tpu_custom_call.1} parent=11 // pred_region
          _
        $region64: #{tpu_custom_call.1} parent=11 // pred_fallthru
          _
        // Predicated region
        $region65: #{tpu_custom_call.1} parent=11 // pred_check
          %p468 = pneg %p346
        $region66: #{tpu_custom_call.1} parent=11 // pred_check_branch
          %470 = sbr.rel (%p468) target = $region68
        $region67: #{tpu_custom_call.1} parent=11 // pred_region
          _
        $region68: #{tpu_custom_call.1} parent=11 // pred_fallthru
          _
        // Predicated region
        $region69: #{tpu_custom_call.1} parent=11 // pred_check
          %p471 = pneg %p367
        $region70: #{tpu_custom_call.1} parent=11 // pred_check_branch
          %473 = sbr.rel (%p471) target = $region72
        $region71: #{tpu_custom_call.1} parent=11 // pred_region
          _
        $region72: #{tpu_custom_call.1} parent=11 // pred_fallthru
          _
        // Predicated region
        $region73: #{tpu_custom_call.1} parent=11 // pred_check
          %p474 = pneg %p388
        $region74: #{tpu_custom_call.1} parent=11 // pred_check_branch
          %476 = sbr.rel (%p474) target = $region76
        $region75: #{tpu_custom_call.1} parent=11 // pred_region
          _
        $region76: #{tpu_custom_call.1} parent=11 // pred_fallthru
          _
      $region12: #{tpu_custom_call.1} parent=5 // pred_fallthru
        _
      %p477 = scmp.lt.s32.totalorder %s26, 2
      // Predicated region
      $region77: #{tpu_custom_call.1} parent=5 // pred_check
        %p478 = pneg %p477
      $region78: #{tpu_custom_call.1} parent=5 // pred_check_branch
        %480 = sbr.rel (%p478) target = $region80
      $region79: #{tpu_custom_call.1} parent=5 // pred_region
        // Predicated region
        $region81: #{tpu_custom_call.1} parent=79 // pred_check
          %p481 = pneg %p46
        $region82: #{tpu_custom_call.1} parent=79 // pred_check_branch
          %483 = sbr.rel (%p481) target = $region84
        $region83: #{tpu_custom_call.1} parent=79 // pred_region
          %p484 = scmp.lt.s32.totalorder %s26, 1
          %s485 = scalar_select %p484, %s26, 1
          %s486 = smul.addr %s485, 8
          %s487 = scalar_lea.vmem %s0, %s486
        $region84: #{tpu_custom_call.1} parent=79 // pred_fallthru
          _
      $region80: #{tpu_custom_call.1} parent=5 // pred_fallthru
        _
      %p488 = scmp.le.s32.totalorder 1, %s26
      %p489 = scmp.lt.s32.totalorder %s26, 3
      %p490 = pnand %p488, %p489
      %p491 = pneg %p490
      // Predicated region
      $region85: #{tpu_custom_call.1} parent=5 // pred_check
        _
      $region86: #{tpu_custom_call.1} parent=5 // pred_check_branch
        %493 = sbr.rel (%p490) target = $region88
      $region87: #{tpu_custom_call.1} parent=5 // pred_region
        %s494 = ssub.s32 %s26, 1
        %p495 = scmp.lt.s32.totalorder %s31, 1
        %s496 = scalar_select %p495, %s31, 1
        %s497 = smul.addr %s496, 8
        %s498 = scalar_lea.vmem %s0, %s497
        %p499 = pneg %p52
        %p500 = pneg %p49
        %p501 = pneg %p73
        %p502 = pneg %p70
        %p503 = pneg %p94
        %p504 = pneg %p91
        %p505 = pneg %p115
        %p506 = pneg %p112
        %p507 = pneg %p136
        %p508 = pneg %p133
        %p509 = pneg %p157
        %p510 = pneg %p154
        %p511 = pneg %p178
        %p512 = pneg %p175
        %p513 = pneg %p199
        %p514 = pneg %p196
        %p515 = pneg %p220
        %p516 = pneg %p217
        %p517 = pneg %p241
        %p518 = pneg %p238
        %p519 = pneg %p262
        %p520 = pneg %p259
        %p521 = pneg %p283
        %p522 = pneg %p280
        %p523 = pneg %p304
        %p524 = pneg %p301
        %p525 = pneg %p325
        %p526 = pneg %p322
        %p527 = pneg %p346
        %p528 = pneg %p343
        %p529 = pneg %p367
        %p530 = pneg %p364
        %p531 = pneg %p388
        %p532 = pneg %p385
        %p533 = pneg %p414
        %p534 = pneg %p411
        %s535 = sand.u32 %s401, 1
        %s536 = scalar_lea.sflag [#allocation3], %s535
        %s537 = sand.u32 %s401, 1
        %s538 = smul.addr %s537, 8
        %s539 = scalar_lea.vmem [#allocation2], %s538
        %p540 = scmp.lt.s32.totalorder %s31, 1
        %s541 = scalar_select %p540, %s31, 1
        %s542 = smul.addr %s541, 8
        %s543 = scalar_lea.vmem %s0, %s542
        %v545 = vld [vmem:[%s543] sm:$0xff]
        %v546 = vld [vmem:[%s1] sm:$0x1]
        %v547 = vld [vmem:[%s2] sm:$0x1]
        %548 = vadd.xlane.f32.xlu0 %v545
        %v549 = vpop.xlane.xlu0 %548
        %v550 = vrcp.pop 128.0
        %v551 = vmul.f32 128.0, %v550
        %v552 = vsub.f32 1.0, %v551
        %v553 = vmul.f32 %v550, %v552
        %v554 = vadd.f32 %v550, %v553
        %vm555 = vweird.f32 %v550
        %v556 = vsel %vm555, %v550, %v554
        %v557 = vmul.f32 %v549, %v556
        %v558 = vsub.f32 %v545, %v557
        %v559 = vmul.f32 %v558, %v558
        %560 = vadd.xlane.f32.xlu0 %v559
        %v561 = vpop.xlane.xlu0 %560
        %v562 = vmul.f32 %v561, %v556
        %v563 = vadd.f32 %v562, 1e-05
        %v564 = vrsqrt.pop %v563
        %v565 = vmul.f32 %v564, %v563
        %v566 = vmul.f32 %v565, %v564
        %v567 = vmul.f32 0.5, %v566
        %v568 = vsub.f32 1.5, %v567
        %v569 = vmul.f32 %v564, %v568
        %vm570 = vweird.f32 %v563
        %vm571 = vweird.f32 %v564
        %vm572 = vmor %vm570, %vm571
        %v573 = vsel %vm572, %v564, %v569
        %v574 = vmul.f32 %v558, %v573
        %v576 = vperm.slane %v546, 0
        %v578 = vmul.f32 %v574, %v576
        %v580 = vperm.slane %v547, 0
        %v582 = vadd.f32 %v578, %v580
        %v583 = vpack.c.bf16 %v582, %v582
        %v584 = vld [vmem:[%s3] sm:$0xf]
        %v585 = vld [vmem:[%s3 + $0x4] sm:$0xf]
        %v586 = vld [vmem:[%s3 + $0x8] sm:$0xf]
        %v587 = vld [vmem:[%s3 + $0xc] sm:$0xf]
        %v588 = vld [vmem:[%s3 + $0x10] sm:$0xf]
        %v589 = vld [vmem:[%s3 + $0x14] sm:$0xf]
        %v590 = vld [vmem:[%s3 + $0x18] sm:$0xf]
        %v591 = vld [vmem:[%s3 + $0x1c] sm:$0xf]
        %v592 = vld [vmem:[%s3 + $0x20] sm:$0xf]
        %v593 = vld [vmem:[%s3 + $0x24] sm:$0xf]
        %v594 = vld [vmem:[%s3 + $0x28] sm:$0xf]
        %v595 = vld [vmem:[%s3 + $0x2c] sm:$0xf]
        %v596 = vld [vmem:[%s3 + $0x30] sm:$0xf]
        %v597 = vld [vmem:[%s3 + $0x34] sm:$0xf]
        %v598 = vld [vmem:[%s3 + $0x38] sm:$0xf]
        %v599 = vld [vmem:[%s3 + $0x3c] sm:$0xf]
        %v600 = vld [vmem:[%s3 + $0x40] sm:$0xf]
        %v601 = vld [vmem:[%s3 + $0x44] sm:$0xf]
        %v602 = vld [vmem:[%s3 + $0x48] sm:$0xf]
        %v603 = vld [vmem:[%s3 + $0x4c] sm:$0xf]
        %v604 = vld [vmem:[%s3 + $0x50] sm:$0xf]
        %v605 = vld [vmem:[%s3 + $0x54] sm:$0xf]
        %v606 = vld [vmem:[%s3 + $0x58] sm:$0xf]
        %v607 = vld [vmem:[%s3 + $0x5c] sm:$0xf]
        %v608 = vld [vmem:[%s3 + $0x60] sm:$0xf]
        %v609 = vld [vmem:[%s3 + $0x64] sm:$0xf]
        %v610 = vld [vmem:[%s3 + $0x68] sm:$0xf]
        %v611 = vld [vmem:[%s3 + $0x6c] sm:$0xf]
        %v612 = vld [vmem:[%s3 + $0x70] sm:$0xf]
        %v613 = vld [vmem:[%s3 + $0x74] sm:$0xf]
        %v614 = vld [vmem:[%s3 + $0x78] sm:$0xf]
        %v615 = vld [vmem:[%s3 + $0x7c] sm:$0xf]
        %v616 = vld [vmem:[%s3 + $0x80] sm:$0xf]
        %v617 = vld [vmem:[%s3 + $0x84] sm:$0xf]
        %v618 = vld [vmem:[%s3 + $0x88] sm:$0xf]
        %v619 = vld [vmem:[%s3 + $0x8c] sm:$0xf]
        %v620 = vld [vmem:[%s3 + $0x90] sm:$0xf]
        %v621 = vld [vmem:[%s3 + $0x94] sm:$0xf]
        %v622 = vld [vmem:[%s3 + $0x98] sm:$0xf]
        %v623 = vld [vmem:[%s3 + $0x9c] sm:$0xf]
        %v624 = vld [vmem:[%s3 + $0xa0] sm:$0xf]
        %v625 = vld [vmem:[%s3 + $0xa4] sm:$0xf]
        %v626 = vld [vmem:[%s3 + $0xa8] sm:$0xf]
        %v627 = vld [vmem:[%s3 + $0xac] sm:$0xf]
        %v628 = vld [vmem:[%s3 + $0xb0] sm:$0xf]
        %v629 = vld [vmem:[%s3 + $0xb4] sm:$0xf]
        %v630 = vld [vmem:[%s3 + $0xb8] sm:$0xf]
        %v631 = vld [vmem:[%s3 + $0xbc] sm:$0xf]
        %v632 = vld [vmem:[%s3 + $0xc0] sm:$0xf]
        %v633 = vld [vmem:[%s3 + $0xc4] sm:$0xf]
        %v634 = vld [vmem:[%s3 + $0xc8] sm:$0xf]
        %v635 = vld [vmem:[%s3 + $0xcc] sm:$0xf]
        %v636 = vld [vmem:[%s3 + $0xd0] sm:$0xf]
        %v637 = vld [vmem:[%s3 + $0xd4] sm:$0xf]
        %v638 = vld [vmem:[%s3 + $0xd8] sm:$0xf]
        %v639 = vld [vmem:[%s3 + $0xdc] sm:$0xf]
        %v640 = vld [vmem:[%s3 + $0xe0] sm:$0xf]
        %v641 = vld [vmem:[%s3 + $0xe4] sm:$0xf]
        %v642 = vld [vmem:[%s3 + $0xe8] sm:$0xf]
        %v643 = vld [vmem:[%s3 + $0xec] sm:$0xf]
        %v644 = vld [vmem:[%s3 + $0xf0] sm:$0xf]
        %v645 = vld [vmem:[%s3 + $0xf4] sm:$0xf]
        %v646 = vld [vmem:[%s3 + $0xf8] sm:$0xf]
        %v647 = vld [vmem:[%s3 + $0xfc] sm:$0xf]
        %v648 = vld [vmem:[%s4] sm:$0x1]
        %v649 = vld [vmem:[%s4 + $0x1] sm:$0x1]
        %v650 = vld [vmem:[%s4 + $0x2] sm:$0x1]
        %v651 = vld [vmem:[%s4 + $0x3] sm:$0x1]
        %v656 = vperm.slane %v648, 0
        %v657 = vperm.slane %v649, 0
        %v658 = vperm.slane %v650, 0
        %v659 = vperm.slane %v651, 0
        %v680 = vunpack.c.l.b16 %v584
        %v681 = vunpack.c.l.b16 %v585
        %v682 = vunpack.c.l.b16 %v586
        %v683 = vunpack.c.l.b16 %v587
        %v684 = vunpack.c.l.b16 %v588
        %v685 = vunpack.c.l.b16 %v589
        %v686 = vunpack.c.l.b16 %v590
        %v687 = vunpack.c.l.b16 %v591
        %v688 = vunpack.c.l.b16 %v592
        %v689 = vunpack.c.l.b16 %v593
        %v690 = vunpack.c.l.b16 %v594
        %v691 = vunpack.c.l.b16 %v595
        %v692 = vunpack.c.l.b16 %v596
        %v693 = vunpack.c.l.b16 %v597
        %v694 = vunpack.c.l.b16 %v598
        %v695 = vunpack.c.l.b16 %v599
        %v696 = vpack.c.b16 %v681, %v680
        %v697 = vpack.c.b16 %v683, %v682
        %v698 = vpack.c.b16 %v685, %v684
        %v699 = vpack.c.b16 %v687, %v686
        %v700 = vpack.c.b16 %v689, %v688
        %v701 = vpack.c.b16 %v691, %v690
        %v702 = vpack.c.b16 %v693, %v692
        %v703 = vpack.c.b16 %v695, %v694
        %712 = vmatpush.bf16.msra.mxu0 %v703
        %713 = vmatpush.bf16.msra.mxu0 %v702
        %714 = vmatpush.bf16.msra.mxu0 %v701
        %715 = vmatpush.bf16.msra.mxu0 %v700
        %716 = vmatpush.bf16.msra.mxu0 %v699
        %717 = vmatpush.bf16.msra.mxu0 %v698
        %718 = vmatpush.bf16.msra.mxu0 %v697
        %719 = vmatpush.bf16.msra.mxu0 %v696
        %720 = vmatmul.bf16.gmra.mxu0 %v583
        %v721 = vpop.f32.mrf.mxu0
        %v722 = vadd.f32 %v656, %v721
        %v723 = vpop.f32.mrf.mxu0
        %724 = vdwg.mxu0
        %v741 = vunpack.c.l.b16 %v600
        %v742 = vunpack.c.l.b16 %v601
        %v743 = vunpack.c.l.b16 %v602
        %v744 = vunpack.c.l.b16 %v603
        %v745 = vunpack.c.l.b16 %v604
        %v746 = vunpack.c.l.b16 %v605
        %v747 = vunpack.c.l.b16 %v606
        %v748 = vunpack.c.l.b16 %v607
        %v749 = vunpack.c.l.b16 %v608
        %v750 = vunpack.c.l.b16 %v609
        %v751 = vunpack.c.l.b16 %v610
        %v752 = vunpack.c.l.b16 %v611
        %v753 = vunpack.c.l.b16 %v612
        %v754 = vunpack.c.l.b16 %v613
        %v755 = vunpack.c.l.b16 %v614
        %v756 = vunpack.c.l.b16 %v615
        %v757 = vpack.c.b16 %v742, %v741
        %v758 = vpack.c.b16 %v744, %v743
        %v759 = vpack.c.b16 %v746, %v745
        %v760 = vpack.c.b16 %v748, %v747
        %v761 = vpack.c.b16 %v750, %v749
        %v762 = vpack.c.b16 %v752, %v751
        %v763 = vpack.c.b16 %v754, %v753
        %v764 = vpack.c.b16 %v756, %v755
        %773 = vmatpush.bf16.msra.mxu0 %v764
        %774 = vmatpush.bf16.msra.mxu0 %v763
        %775 = vmatpush.bf16.msra.mxu0 %v762
        %776 = vmatpush.bf16.msra.mxu0 %v761
        %777 = vmatpush.bf16.msra.mxu0 %v760
        %778 = vmatpush.bf16.msra.mxu0 %v759
        %779 = vmatpush.bf16.msra.mxu0 %v758
        %780 = vmatpush.bf16.msra.mxu0 %v757
        %781 = vmatmul.bf16.gmra.mxu0 %v583
        %v782 = vpop.f32.mrf.mxu0
        %v783 = vadd.f32 %v657, %v782
        %v784 = vpop.f32.mrf.mxu0
        %785 = vdwg.mxu0
        %v802 = vunpack.c.l.b16 %v616
        %v803 = vunpack.c.l.b16 %v617
        %v804 = vunpack.c.l.b16 %v618
        %v805 = vunpack.c.l.b16 %v619
        %v806 = vunpack.c.l.b16 %v620
        %v807 = vunpack.c.l.b16 %v621
        %v808 = vunpack.c.l.b16 %v622
        %v809 = vunpack.c.l.b16 %v623
        %v810 = vunpack.c.l.b16 %v624
        %v811 = vunpack.c.l.b16 %v625
        %v812 = vunpack.c.l.b16 %v626
        %v813 = vunpack.c.l.b16 %v627
        %v814 = vunpack.c.l.b16 %v628
        %v815 = vunpack.c.l.b16 %v629
        %v816 = vunpack.c.l.b16 %v630
        %v817 = vunpack.c.l.b16 %v631
        %v818 = vpack.c.b16 %v803, %v802
        %v819 = vpack.c.b16 %v805, %v804
        %v820 = vpack.c.b16 %v807, %v806
        %v821 = vpack.c.b16 %v809, %v808
        %v822 = vpack.c.b16 %v811, %v810
        %v823 = vpack.c.b16 %v813, %v812
        %v824 = vpack.c.b16 %v815, %v814
        %v825 = vpack.c.b16 %v817, %v816
        %834 = vmatpush.bf16.msra.mxu0 %v825
        %835 = vmatpush.bf16.msra.mxu0 %v824
        %836 = vmatpush.bf16.msra.mxu0 %v823
        %837 = vmatpush.bf16.msra.mxu0 %v822
        %838 = vmatpush.bf16.msra.mxu0 %v821
        %839 = vmatpush.bf16.msra.mxu0 %v820
        %840 = vmatpush.bf16.msra.mxu0 %v819
        %841 = vmatpush.bf16.msra.mxu0 %v818
        %842 = vmatmul.bf16.gmra.mxu0 %v583
        %v843 = vpop.f32.mrf.mxu0
        %v844 = vadd.f32 %v658, %v843
        %v845 = vpop.f32.mrf.mxu0
        %846 = vdwg.mxu0
        %v863 = vunpack.c.l.b16 %v632
        %v864 = vunpack.c.l.b16 %v633
        %v865 = vunpack.c.l.b16 %v634
        %v866 = vunpack.c.l.b16 %v635
        %v867 = vunpack.c.l.b16 %v636
        %v868 = vunpack.c.l.b16 %v637
        %v869 = vunpack.c.l.b16 %v638
        %v870 = vunpack.c.l.b16 %v639
        %v871 = vunpack.c.l.b16 %v640
        %v872 = vunpack.c.l.b16 %v641
        %v873 = vunpack.c.l.b16 %v642
        %v874 = vunpack.c.l.b16 %v643
        %v875 = vunpack.c.l.b16 %v644
        %v876 = vunpack.c.l.b16 %v645
        %v877 = vunpack.c.l.b16 %v646
        %v878 = vunpack.c.l.b16 %v647
        %v879 = vpack.c.b16 %v864, %v863
        %v880 = vpack.c.b16 %v866, %v865
        %v881 = vpack.c.b16 %v868, %v867
        %v882 = vpack.c.b16 %v870, %v869
        %v883 = vpack.c.b16 %v872, %v871
        %v884 = vpack.c.b16 %v874, %v873
        %v885 = vpack.c.b16 %v876, %v875
        %v886 = vpack.c.b16 %v878, %v877
        %895 = vmatpush.bf16.msra.mxu0 %v886
        %896 = vmatpush.bf16.msra.mxu0 %v885
        %897 = vmatpush.bf16.msra.mxu0 %v884
        %898 = vmatpush.bf16.msra.mxu0 %v883
        %899 = vmatpush.bf16.msra.mxu0 %v882
        %900 = vmatpush.bf16.msra.mxu0 %v881
        %901 = vmatpush.bf16.msra.mxu0 %v880
        %902 = vmatpush.bf16.msra.mxu0 %v879
        %903 = vmatmul.bf16.gmra.mxu0 %v583
        %v904 = vpop.f32.mrf.mxu0
        %v905 = vadd.f32 %v659, %v904
        %v906 = vpop.f32.mrf.mxu0
        %907 = vdwg.mxu0
        %v908 = vmul.f32 %v722, 0.17677669
        %v909 = vmul.f32 %v783, 0.17677669
        %v910 = vmul.f32 %v844, 0.17677669
        %v911 = vmul.f32 %v905, 0.17677669
        %v912 = vld [vmem:[%s5] sm:$0xf]
        %v913 = vld [vmem:[%s5 + $0x4] sm:$0xf]
        %v914 = vld [vmem:[%s5 + $0x8] sm:$0xf]
        %v915 = vld [vmem:[%s5 + $0xc] sm:$0xf]
        %v916 = vld [vmem:[%s5 + $0x10] sm:$0xf]
        %v917 = vld [vmem:[%s5 + $0x14] sm:$0xf]
        %v918 = vld [vmem:[%s5 + $0x18] sm:$0xf]
        %v919 = vld [vmem:[%s5 + $0x1c] sm:$0xf]
        %v920 = vld [vmem:[%s5 + $0x20] sm:$0xf]
        %v921 = vld [vmem:[%s5 + $0x24] sm:$0xf]
        %v922 = vld [vmem:[%s5 + $0x28] sm:$0xf]
        %v923 = vld [vmem:[%s5 + $0x2c] sm:$0xf]
        %v924 = vld [vmem:[%s5 + $0x30] sm:$0xf]
        %v925 = vld [vmem:[%s5 + $0x34] sm:$0xf]
        %v926 = vld [vmem:[%s5 + $0x38] sm:$0xf]
        %v927 = vld [vmem:[%s5 + $0x3c] sm:$0xf]
        %v928 = vld [vmem:[%s5 + $0x40] sm:$0xf]
        %v929 = vld [vmem:[%s5 + $0x44] sm:$0xf]
        %v930 = vld [vmem:[%s5 + $0x48] sm:$0xf]
        %v931 = vld [vmem:[%s5 + $0x4c] sm:$0xf]
        %v932 = vld [vmem:[%s5 + $0x50] sm:$0xf]
        %v933 = vld [vmem:[%s5 + $0x54] sm:$0xf]
        %v934 = vld [vmem:[%s5 + $0x58] sm:$0xf]
        %v935 = vld [vmem:[%s5 + $0x5c] sm:$0xf]
        %v936 = vld [vmem:[%s5 + $0x60] sm:$0xf]
        %v937 = vld [vmem:[%s5 + $0x64] sm:$0xf]
        %v938 = vld [vmem:[%s5 + $0x68] sm:$0xf]
        %v939 = vld [vmem:[%s5 + $0x6c] sm:$0xf]
        %v940 = vld [vmem:[%s5 + $0x70] sm:$0xf]
        %v941 = vld [vmem:[%s5 + $0x74] sm:$0xf]
        %v942 = vld [vmem:[%s5 + $0x78] sm:$0xf]
        %v943 = vld [vmem:[%s5 + $0x7c] sm:$0xf]
        %v944 = vld [vmem:[%s5 + $0x80] sm:$0xf]
        %v945 = vld [vmem:[%s5 + $0x84] sm:$0xf]
        %v946 = vld [vmem:[%s5 + $0x88] sm:$0xf]
        %v947 = vld [vmem:[%s5 + $0x8c] sm:$0xf]
        %v948 = vld [vmem:[%s5 + $0x90] sm:$0xf]
        %v949 = vld [vmem:[%s5 + $0x94] sm:$0xf]
        %v950 = vld [vmem:[%s5 + $0x98] sm:$0xf]
        %v951 = vld [vmem:[%s5 + $0x9c] sm:$0xf]
        %v952 = vld [vmem:[%s5 + $0xa0] sm:$0xf]
        %v953 = vld [vmem:[%s5 + $0xa4] sm:$0xf]
        %v954 = vld [vmem:[%s5 + $0xa8] sm:$0xf]
        %v955 = vld [vmem:[%s5 + $0xac] sm:$0xf]
        %v956 = vld [vmem:[%s5 + $0xb0] sm:$0xf]
        %v957 = vld [vmem:[%s5 + $0xb4] sm:$0xf]
        %v958 = vld [vmem:[%s5 + $0xb8] sm:$0xf]
        %v959 = vld [vmem:[%s5 + $0xbc] sm:$0xf]
        %v960 = vld [vmem:[%s5 + $0xc0] sm:$0xf]
        %v961 = vld [vmem:[%s5 + $0xc4] sm:$0xf]
        %v962 = vld [vmem:[%s5 + $0xc8] sm:$0xf]
        %v963 = vld [vmem:[%s5 + $0xcc] sm:$0xf]
        %v964 = vld [vmem:[%s5 + $0xd0] sm:$0xf]
        %v965 = vld [vmem:[%s5 + $0xd4] sm:$0xf]
        %v966 = vld [vmem:[%s5 + $0xd8] sm:$0xf]
        %v967 = vld [vmem:[%s5 + $0xdc] sm:$0xf]
        %v968 = vld [vmem:[%s5 + $0xe0] sm:$0xf]
        %v969 = vld [vmem:[%s5 + $0xe4] sm:$0xf]
        %v970 = vld [vmem:[%s5 + $0xe8] sm:$0xf]
        %v971 = vld [vmem:[%s5 + $0xec] sm:$0xf]
        %v972 = vld [vmem:[%s5 + $0xf0] sm:$0xf]
        %v973 = vld [vmem:[%s5 + $0xf4] sm:$0xf]
        %v974 = vld [vmem:[%s5 + $0xf8] sm:$0xf]
        %v975 = vld [vmem:[%s5 + $0xfc] sm:$0xf]
        %v976 = vld [vmem:[%s6] sm:$0x1]
        %v977 = vld [vmem:[%s6 + $0x1] sm:$0x1]
        %v978 = vld [vmem:[%s6 + $0x2] sm:$0x1]
        %v979 = vld [vmem:[%s6 + $0x3] sm:$0x1]
        %v984 = vperm.slane %v976, 0
        %v985 = vperm.slane %v977, 0
        %v986 = vperm.slane %v978, 0
        %v987 = vperm.slane %v979, 0
        %v1008 = vunpack.c.l.b16 %v912
        %v1009 = vunpack.c.l.b16 %v913
        %v1010 = vunpack.c.l.b16 %v914
        %v1011 = vunpack.c.l.b16 %v915
        %v1012 = vunpack.c.l.b16 %v916
        %v1013 = vunpack.c.l.b16 %v917
        %v1014 = vunpack.c.l.b16 %v918
        %v1015 = vunpack.c.l.b16 %v919
        %v1016 = vunpack.c.l.b16 %v920
        %v1017 = vunpack.c.l.b16 %v921
        %v1018 = vunpack.c.l.b16 %v922
        %v1019 = vunpack.c.l.b16 %v923
        %v1020 = vunpack.c.l.b16 %v924
        %v1021 = vunpack.c.l.b16 %v925
        %v1022 = vunpack.c.l.b16 %v926
        %v1023 = vunpack.c.l.b16 %v927
        %v1024 = vpack.c.b16 %v1009, %v1008
        %v1025 = vpack.c.b16 %v1011, %v1010
        %v1026 = vpack.c.b16 %v1013, %v1012
        %v1027 = vpack.c.b16 %v1015, %v1014
        %v1028 = vpack.c.b16 %v1017, %v1016
        %v1029 = vpack.c.b16 %v1019, %v1018
        %v1030 = vpack.c.b16 %v1021, %v1020
        %v1031 = vpack.c.b16 %v1023, %v1022
        %1040 = vmatpush.bf16.msra.mxu0 %v1031
        %1041 = vmatpush.bf16.msra.mxu0 %v1030
        %1042 = vmatpush.bf16.msra.mxu0 %v1029
        %1043 = vmatpush.bf16.msra.mxu0 %v1028
        %1044 = vmatpush.bf16.msra.mxu0 %v1027
        %1045 = vmatpush.bf16.msra.mxu0 %v1026
        %1046 = vmatpush.bf16.msra.mxu0 %v1025
        %1047 = vmatpush.bf16.msra.mxu0 %v1024
        %1048 = vmatmul.bf16.gmra.mxu0 %v583
        %v1049 = vpop.f32.mrf.mxu0
        %v1050 = vadd.f32 %v984, %v1049
        %v1051 = vpop.f32.mrf.mxu0
        %1052 = vdwg.mxu0
        %v1069 = vunpack.c.l.b16 %v928
        %v1070 = vunpack.c.l.b16 %v929
        %v1071 = vunpack.c.l.b16 %v930
        %v1072 = vunpack.c.l.b16 %v931
        %v1073 = vunpack.c.l.b16 %v932
        %v1074 = vunpack.c.l.b16 %v933
        %v1075 = vunpack.c.l.b16 %v934
        %v1076 = vunpack.c.l.b16 %v935
        %v1077 = vunpack.c.l.b16 %v936
        %v1078 = vunpack.c.l.b16 %v937
        %v1079 = vunpack.c.l.b16 %v938
        %v1080 = vunpack.c.l.b16 %v939
        %v1081 = vunpack.c.l.b16 %v940
        %v1082 = vunpack.c.l.b16 %v941
        %v1083 = vunpack.c.l.b16 %v942
        %v1084 = vunpack.c.l.b16 %v943
        %v1085 = vpack.c.b16 %v1070, %v1069
        %v1086 = vpack.c.b16 %v1072, %v1071
        %v1087 = vpack.c.b16 %v1074, %v1073
        %v1088 = vpack.c.b16 %v1076, %v1075
        %v1089 = vpack.c.b16 %v1078, %v1077
        %v1090 = vpack.c.b16 %v1080, %v1079
        %v1091 = vpack.c.b16 %v1082, %v1081
        %v1092 = vpack.c.b16 %v1084, %v1083
        %1101 = vmatpush.bf16.msra.mxu0 %v1092
        %1102 = vmatpush.bf16.msra.mxu0 %v1091
        %1103 = vmatpush.bf16.msra.mxu0 %v1090
        %1104 = vmatpush.bf16.msra.mxu0 %v1089
        %1105 = vmatpush.bf16.msra.mxu0 %v1088
        %1106 = vmatpush.bf16.msra.mxu0 %v1087
        %1107 = vmatpush.bf16.msra.mxu0 %v1086
        %1108 = vmatpush.bf16.msra.mxu0 %v1085
        %1109 = vmatmul.bf16.gmra.mxu0 %v583
        %v1110 = vpop.f32.mrf.mxu0
        %v1111 = vadd.f32 %v985, %v1110
        %v1112 = vpop.f32.mrf.mxu0
        %1113 = vdwg.mxu0
        %v1130 = vunpack.c.l.b16 %v944
        %v1131 = vunpack.c.l.b16 %v945
        %v1132 = vunpack.c.l.b16 %v946
        %v1133 = vunpack.c.l.b16 %v947
        %v1134 = vunpack.c.l.b16 %v948
        %v1135 = vunpack.c.l.b16 %v949
        %v1136 = vunpack.c.l.b16 %v950
        %v1137 = vunpack.c.l.b16 %v951
        %v1138 = vunpack.c.l.b16 %v952
        %v1139 = vunpack.c.l.b16 %v953
        %v1140 = vunpack.c.l.b16 %v954
        %v1141 = vunpack.c.l.b16 %v955
        %v1142 = vunpack.c.l.b16 %v956
        %v1143 = vunpack.c.l.b16 %v957
        %v1144 = vunpack.c.l.b16 %v958
        %v1145 = vunpack.c.l.b16 %v959
        %v1146 = vpack.c.b16 %v1131, %v1130
        %v1147 = vpack.c.b16 %v1133, %v1132
        %v1148 = vpack.c.b16 %v1135, %v1134
        %v1149 = vpack.c.b16 %v1137, %v1136
        %v1150 = vpack.c.b16 %v1139, %v1138
        %v1151 = vpack.c.b16 %v1141, %v1140
        %v1152 = vpack.c.b16 %v1143, %v1142
        %v1153 = vpack.c.b16 %v1145, %v1144
        %1162 = vmatpush.bf16.msra.mxu0 %v1153
        %1163 = vmatpush.bf16.msra.mxu0 %v1152
        %1164 = vmatpush.bf16.msra.mxu0 %v1151
        %1165 = vmatpush.bf16.msra.mxu0 %v1150
        %1166 = vmatpush.bf16.msra.mxu0 %v1149
        %1167 = vmatpush.bf16.msra.mxu0 %v1148
        %1168 = vmatpush.bf16.msra.mxu0 %v1147
        %1169 = vmatpush.bf16.msra.mxu0 %v1146
        %1170 = vmatmul.bf16.gmra.mxu0 %v583
        %v1171 = vpop.f32.mrf.mxu0
        %v1172 = vadd.f32 %v986, %v1171
        %v1173 = vpop.f32.mrf.mxu0
        %1174 = vdwg.mxu0
        %v1191 = vunpack.c.l.b16 %v960
        %v1192 = vunpack.c.l.b16 %v961
        %v1193 = vunpack.c.l.b16 %v962
        %v1194 = vunpack.c.l.b16 %v963
        %v1195 = vunpack.c.l.b16 %v964
        %v1196 = vunpack.c.l.b16 %v965
        %v1197 = vunpack.c.l.b16 %v966
        %v1198 = vunpack.c.l.b16 %v967
        %v1199 = vunpack.c.l.b16 %v968
        %v1200 = vunpack.c.l.b16 %v969
        %v1201 = vunpack.c.l.b16 %v970
        %v1202 = vunpack.c.l.b16 %v971
        %v1203 = vunpack.c.l.b16 %v972
        %v1204 = vunpack.c.l.b16 %v973
        %v1205 = vunpack.c.l.b16 %v974
        %v1206 = vunpack.c.l.b16 %v975
        %v1207 = vpack.c.b16 %v1192, %v1191
        %v1208 = vpack.c.b16 %v1194, %v1193
        %v1209 = vpack.c.b16 %v1196, %v1195
        %v1210 = vpack.c.b16 %v1198, %v1197
        %v1211 = vpack.c.b16 %v1200, %v1199
        %v1212 = vpack.c.b16 %v1202, %v1201
        %v1213 = vpack.c.b16 %v1204, %v1203
        %v1214 = vpack.c.b16 %v1206, %v1205
        %1223 = vmatpush.bf16.msra.mxu0 %v1214
        %1224 = vmatpush.bf16.msra.mxu0 %v1213
        %1225 = vmatpush.bf16.msra.mxu0 %v1212
        %1226 = vmatpush.bf16.msra.mxu0 %v1211
        %1227 = vmatpush.bf16.msra.mxu0 %v1210
        %1228 = vmatpush.bf16.msra.mxu0 %v1209
        %1229 = vmatpush.bf16.msra.mxu0 %v1208
        %1230 = vmatpush.bf16.msra.mxu0 %v1207
        %1231 = vmatmul.bf16.gmra.mxu0 %v583
        %v1232 = vpop.f32.mrf.mxu0
        %v1233 = vadd.f32 %v987, %v1232
        %v1234 = vpop.f32.mrf.mxu0
        %1235 = vdwg.mxu0
        %v1236 = vld [vmem:[%s7] sm:$0xf]
        %v1237 = vld [vmem:[%s7 + $0x4] sm:$0xf]
        %v1238 = vld [vmem:[%s7 + $0x8] sm:$0xf]
        %v1239 = vld [vmem:[%s7 + $0xc] sm:$0xf]
        %v1240 = vld [vmem:[%s7 + $0x10] sm:$0xf]
        %v1241 = vld [vmem:[%s7 + $0x14] sm:$0xf]
        %v1242 = vld [vmem:[%s7 + $0x18] sm:$0xf]
        %v1243 = vld [vmem:[%s7 + $0x1c] sm:$0xf]
        %v1244 = vld [vmem:[%s7 + $0x20] sm:$0xf]
        %v1245 = vld [vmem:[%s7 + $0x24] sm:$0xf]
        %v1246 = vld [vmem:[%s7 + $0x28] sm:$0xf]
        %v1247 = vld [vmem:[%s7 + $0x2c] sm:$0xf]
        %v1248 = vld [vmem:[%s7 + $0x30] sm:$0xf]
        %v1249 = vld [vmem:[%s7 + $0x34] sm:$0xf]
        %v1250 = vld [vmem:[%s7 + $0x38] sm:$0xf]
        %v1251 = vld [vmem:[%s7 + $0x3c] sm:$0xf]
        %v1252 = vld [vmem:[%s7 + $0x40] sm:$0xf]
        %v1253 = vld [vmem:[%s7 + $0x44] sm:$0xf]
        %v1254 = vld [vmem:[%s7 + $0x48] sm:$0xf]
        %v1255 = vld [vmem:[%s7 + $0x4c] sm:$0xf]
        %v1256 = vld [vmem:[%s7 + $0x50] sm:$0xf]
        %v1257 = vld [vmem:[%s7 + $0x54] sm:$0xf]
        %v1258 = vld [vmem:[%s7 + $0x58] sm:$0xf]
        %v1259 = vld [vmem:[%s7 + $0x5c] sm:$0xf]
        %v1260 = vld [vmem:[%s7 + $0x60] sm:$0xf]
        %v1261 = vld [vmem:[%s7 + $0x64] sm:$0xf]
        %v1262 = vld [vmem:[%s7 + $0x68] sm:$0xf]
        %v1263 = vld [vmem:[%s7 + $0x6c] sm:$0xf]
        %v1264 = vld [vmem:[%s7 + $0x70] sm:$0xf]
        %v1265 = vld [vmem:[%s7 + $0x74] sm:$0xf]
        %v1266 = vld [vmem:[%s7 + $0x78] sm:$0xf]
        %v1267 = vld [vmem:[%s7 + $0x7c] sm:$0xf]
        %v1268 = vld [vmem:[%s7 + $0x80] sm:$0xf]
        %v1269 = vld [vmem:[%s7 + $0x84] sm:$0xf]
        %v1270 = vld [vmem:[%s7 + $0x88] sm:$0xf]
        %v1271 = vld [vmem:[%s7 + $0x8c] sm:$0xf]
        %v1272 = vld [vmem:[%s7 + $0x90] sm:$0xf]
        %v1273 = vld [vmem:[%s7 + $0x94] sm:$0xf]
        %v1274 = vld [vmem:[%s7 + $0x98] sm:$0xf]
        %v1275 = vld [vmem:[%s7 + $0x9c] sm:$0xf]
        %v1276 = vld [vmem:[%s7 + $0xa0] sm:$0xf]
        %v1277 = vld [vmem:[%s7 + $0xa4] sm:$0xf]
        %v1278 = vld [vmem:[%s7 + $0xa8] sm:$0xf]
        %v1279 = vld [vmem:[%s7 + $0xac] sm:$0xf]
        %v1280 = vld [vmem:[%s7 + $0xb0] sm:$0xf]
        %v1281 = vld [vmem:[%s7 + $0xb4] sm:$0xf]
        %v1282 = vld [vmem:[%s7 + $0xb8] sm:$0xf]
        %v1283 = vld [vmem:[%s7 + $0xbc] sm:$0xf]
        %v1284 = vld [vmem:[%s7 + $0xc0] sm:$0xf]
        %v1285 = vld [vmem:[%s7 + $0xc4] sm:$0xf]
        %v1286 = vld [vmem:[%s7 + $0xc8] sm:$0xf]
        %v1287 = vld [vmem:[%s7 + $0xcc] sm:$0xf]
        %v1288 = vld [vmem:[%s7 + $0xd0] sm:$0xf]
        %v1289 = vld [vmem:[%s7 + $0xd4] sm:$0xf]
        %v1290 = vld [vmem:[%s7 + $0xd8] sm:$0xf]
        %v1291 = vld [vmem:[%s7 + $0xdc] sm:$0xf]
        %v1292 = vld [vmem:[%s7 + $0xe0] sm:$0xf]
        %v1293 = vld [vmem:[%s7 + $0xe4] sm:$0xf]
        %v1294 = vld [vmem:[%s7 + $0xe8] sm:$0xf]
        %v1295 = vld [vmem:[%s7 + $0xec] sm:$0xf]
        %v1296 = vld [vmem:[%s7 + $0xf0] sm:$0xf]
        %v1297 = vld [vmem:[%s7 + $0xf4] sm:$0xf]
        %v1298 = vld [vmem:[%s7 + $0xf8] sm:$0xf]
        %v1299 = vld [vmem:[%s7 + $0xfc] sm:$0xf]
        %v1300 = vld [vmem:[%s8] sm:$0x1]
        %v1301 = vld [vmem:[%s8 + $0x1] sm:$0x1]
        %v1302 = vld [vmem:[%s8 + $0x2] sm:$0x1]
        %v1303 = vld [vmem:[%s8 + $0x3] sm:$0x1]
        %v1308 = vperm.slane %v1300, 0
        %v1309 = vperm.slane %v1301, 0
        %v1310 = vperm.slane %v1302, 0
        %v1311 = vperm.slane %v1303, 0
        %v1332 = vunpack.c.l.b16 %v1236
        %v1333 = vunpack.c.l.b16 %v1237
        %v1334 = vunpack.c.l.b16 %v1238
        %v1335 = vunpack.c.l.b16 %v1239
        %v1336 = vunpack.c.l.b16 %v1240
        %v1337 = vunpack.c.l.b16 %v1241
        %v1338 = vunpack.c.l.b16 %v1242
        %v1339 = vunpack.c.l.b16 %v1243
        %v1340 = vunpack.c.l.b16 %v1244
        %v1341 = vunpack.c.l.b16 %v1245
        %v1342 = vunpack.c.l.b16 %v1246
        %v1343 = vunpack.c.l.b16 %v1247
        %v1344 = vunpack.c.l.b16 %v1248
        %v1345 = vunpack.c.l.b16 %v1249
        %v1346 = vunpack.c.l.b16 %v1250
        %v1347 = vunpack.c.l.b16 %v1251
        %v1348 = vpack.c.b16 %v1333, %v1332
        %v1349 = vpack.c.b16 %v1335, %v1334
        %v1350 = vpack.c.b16 %v1337, %v1336
        %v1351 = vpack.c.b16 %v1339, %v1338
        %v1352 = vpack.c.b16 %v1341, %v1340
        %v1353 = vpack.c.b16 %v1343, %v1342
        %v1354 = vpack.c.b16 %v1345, %v1344
        %v1355 = vpack.c.b16 %v1347, %v1346
        %1364 = vmatpush.bf16.msra.mxu0 %v1355
        %1365 = vmatpush.bf16.msra.mxu0 %v1354
        %1366 = vmatpush.bf16.msra.mxu0 %v1353
        %1367 = vmatpush.bf16.msra.mxu0 %v1352
        %1368 = vmatpush.bf16.msra.mxu0 %v1351
        %1369 = vmatpush.bf16.msra.mxu0 %v1350
        %1370 = vmatpush.bf16.msra.mxu0 %v1349
        %1371 = vmatpush.bf16.msra.mxu0 %v1348
        %1372 = vmatmul.bf16.gmra.mxu0 %v583
        %v1373 = vpop.f32.mrf.mxu0
        %v1374 = vadd.f32 %v1308, %v1373
        %v1375 = vpop.f32.mrf.mxu0
        %1376 = vdwg.mxu0
        %v1393 = vunpack.c.l.b16 %v1252
        %v1394 = vunpack.c.l.b16 %v1253
        %v1395 = vunpack.c.l.b16 %v1254
        %v1396 = vunpack.c.l.b16 %v1255
        %v1397 = vunpack.c.l.b16 %v1256
        %v1398 = vunpack.c.l.b16 %v1257
        %v1399 = vunpack.c.l.b16 %v1258
        %v1400 = vunpack.c.l.b16 %v1259
        %v1401 = vunpack.c.l.b16 %v1260
        %v1402 = vunpack.c.l.b16 %v1261
        %v1403 = vunpack.c.l.b16 %v1262
        %v1404 = vunpack.c.l.b16 %v1263
        %v1405 = vunpack.c.l.b16 %v1264
        %v1406 = vunpack.c.l.b16 %v1265
        %v1407 = vunpack.c.l.b16 %v1266
        %v1408 = vunpack.c.l.b16 %v1267
        %v1409 = vpack.c.b16 %v1394, %v1393
        %v1410 = vpack.c.b16 %v1396, %v1395
        %v1411 = vpack.c.b16 %v1398, %v1397
        %v1412 = vpack.c.b16 %v1400, %v1399
        %v1413 = vpack.c.b16 %v1402, %v1401
        %v1414 = vpack.c.b16 %v1404, %v1403
        %v1415 = vpack.c.b16 %v1406, %v1405
        %v1416 = vpack.c.b16 %v1408, %v1407
        %1425 = vmatpush.bf16.msra.mxu0 %v1416
        %1426 = vmatpush.bf16.msra.mxu0 %v1415
        %1427 = vmatpush.bf16.msra.mxu0 %v1414
        %1428 = vmatpush.bf16.msra.mxu0 %v1413
        %1429 = vmatpush.bf16.msra.mxu0 %v1412
        %1430 = vmatpush.bf16.msra.mxu0 %v1411
        %1431 = vmatpush.bf16.msra.mxu0 %v1410
        %1432 = vmatpush.bf16.msra.mxu0 %v1409
        %1433 = vmatmul.bf16.gmra.mxu0 %v583
        %v1434 = vpop.f32.mrf.mxu0
        %v1435 = vadd.f32 %v1309, %v1434
        %v1436 = vpop.f32.mrf.mxu0
        %1437 = vdwg.mxu0
        %v1454 = vunpack.c.l.b16 %v1268
        %v1455 = vunpack.c.l.b16 %v1269
        %v1456 = vunpack.c.l.b16 %v1270
        %v1457 = vunpack.c.l.b16 %v1271
        %v1458 = vunpack.c.l.b16 %v1272
        %v1459 = vunpack.c.l.b16 %v1273
        %v1460 = vunpack.c.l.b16 %v1274
        %v1461 = vunpack.c.l.b16 %v1275
        %v1462 = vunpack.c.l.b16 %v1276
        %v1463 = vunpack.c.l.b16 %v1277
        %v1464 = vunpack.c.l.b16 %v1278
        %v1465 = vunpack.c.l.b16 %v1279
        %v1466 = vunpack.c.l.b16 %v1280
        %v1467 = vunpack.c.l.b16 %v1281
        %v1468 = vunpack.c.l.b16 %v1282
        %v1469 = vunpack.c.l.b16 %v1283
        %v1470 = vpack.c.b16 %v1455, %v1454
        %v1471 = vpack.c.b16 %v1457, %v1456
        %v1472 = vpack.c.b16 %v1459, %v1458
        %v1473 = vpack.c.b16 %v1461, %v1460
        %v1474 = vpack.c.b16 %v1463, %v1462
        %v1475 = vpack.c.b16 %v1465, %v1464
        %v1476 = vpack.c.b16 %v1467, %v1466
        %v1477 = vpack.c.b16 %v1469, %v1468
        %1486 = vmatpush.bf16.msra.mxu0 %v1477
        %1487 = vmatpush.bf16.msra.mxu0 %v1476
        %1488 = vmatpush.bf16.msra.mxu0 %v1475
        %1489 = vmatpush.bf16.msra.mxu0 %v1474
        %1490 = vmatpush.bf16.msra.mxu0 %v1473
        %1491 = vmatpush.bf16.msra.mxu0 %v1472
        %1492 = vmatpush.bf16.msra.mxu0 %v1471
        %1493 = vmatpush.bf16.msra.mxu0 %v1470
        %1494 = vmatmul.bf16.gmra.mxu0 %v583
        %v1495 = vpop.f32.mrf.mxu0
        %v1496 = vadd.f32 %v1310, %v1495
        %v1497 = vpop.f32.mrf.mxu0
        %1498 = vdwg.mxu0
        %v1515 = vunpack.c.l.b16 %v1284
        %v1516 = vunpack.c.l.b16 %v1285
        %v1517 = vunpack.c.l.b16 %v1286
        %v1518 = vunpack.c.l.b16 %v1287
        %v1519 = vunpack.c.l.b16 %v1288
        %v1520 = vunpack.c.l.b16 %v1289
        %v1521 = vunpack.c.l.b16 %v1290
        %v1522 = vunpack.c.l.b16 %v1291
        %v1523 = vunpack.c.l.b16 %v1292
        %v1524 = vunpack.c.l.b16 %v1293
        %v1525 = vunpack.c.l.b16 %v1294
        %v1526 = vunpack.c.l.b16 %v1295
        %v1527 = vunpack.c.l.b16 %v1296
        %v1528 = vunpack.c.l.b16 %v1297
        %v1529 = vunpack.c.l.b16 %v1298
        %v1530 = vunpack.c.l.b16 %v1299
        %v1531 = vpack.c.b16 %v1516, %v1515
        %v1532 = vpack.c.b16 %v1518, %v1517
        %v1533 = vpack.c.b16 %v1520, %v1519
        %v1534 = vpack.c.b16 %v1522, %v1521
        %v1535 = vpack.c.b16 %v1524, %v1523
        %v1536 = vpack.c.b16 %v1526, %v1525
        %v1537 = vpack.c.b16 %v1528, %v1527
        %v1538 = vpack.c.b16 %v1530, %v1529
        %1547 = vmatpush.bf16.msra.mxu0 %v1538
        %1548 = vmatpush.bf16.msra.mxu0 %v1537
        %1549 = vmatpush.bf16.msra.mxu0 %v1536
        %1550 = vmatpush.bf16.msra.mxu0 %v1535
        %1551 = vmatpush.bf16.msra.mxu0 %v1534
        %1552 = vmatpush.bf16.msra.mxu0 %v1533
        %1553 = vmatpush.bf16.msra.mxu0 %v1532
        %1554 = vmatpush.bf16.msra.mxu0 %v1531
        %1555 = vmatmul.bf16.gmra.mxu0 %v583
        %v1556 = vpop.f32.mrf.mxu0
        %v1557 = vadd.f32 %v1311, %v1556
        %v1558 = vpop.f32.mrf.mxu0
        %1559 = vdwg.mxu0
        %v1560 = vpack.c.bf16 %v908, %v908
        %v1561 = vpack.c.bf16 %v909, %v909
        %v1562 = vpack.c.bf16 %v910, %v910
        %v1563 = vpack.c.bf16 %v911, %v911
        %v1564 = vpack.c.bf16 %v1050, %v1050
        %v1565 = vpack.c.bf16 %v1111, %v1111
        %v1566 = vpack.c.bf16 %v1172, %v1172
        %v1567 = vpack.c.bf16 %v1233, %v1233
        %vm1568 = vcmask 261120
        %v1570 = vsel %vm1568, %v1560, 0
        %v1573 = vsel %vm1568, %v1564, 0
        %1575 = vmatpush.bf16.xpose.msra.mxu0 0
        %1576 = vmatpush.bf16.xpose.msra.mxu0 0
        %1577 = vmatpush.bf16.xpose.msra.mxu0 0
        %1578 = vmatpush.bf16.xpose.msra.mxu0 0
        %1579 = vmatpush.bf16.xpose.msra.mxu0 0
        %1580 = vmatpush.bf16.xpose.msra.mxu0 0
        %1581 = vmatpush.bf16.xpose.msra.mxu0 0
        %1582 = vmatpush.bf16.xpose.msra.mxu0 %v1573
        %1583 = vmatmul.bf16.gmra.mxu0 %v1570
        %v1584 = vpop.f32.mrf.mxu0
        %v1585 = vadd.f32 0.0, %v1584
        %v1586 = vpop.f32.mrf.mxu0
        %1587 = vdwg.mxu0
        %v1589 = vsel %vm1568, %v1561, 0
        %v1592 = vsel %vm1568, %v1565, 0
        %1594 = vmatpush.bf16.xpose.msra.mxu0 0
        %1595 = vmatpush.bf16.xpose.msra.mxu0 0
        %1596 = vmatpush.bf16.xpose.msra.mxu0 0
        %1597 = vmatpush.bf16.xpose.msra.mxu0 0
        %1598 = vmatpush.bf16.xpose.msra.mxu0 0
        %1599 = vmatpush.bf16.xpose.msra.mxu0 0
        %1600 = vmatpush.bf16.xpose.msra.mxu0 0
        %1601 = vmatpush.bf16.xpose.msra.mxu0 %v1592
        %1602 = vmatmul.bf16.gmra.mxu0 %v1589
        %v1603 = vpop.f32.mrf.mxu0
        %v1604 = vadd.f32 0.0, %v1603
        %v1605 = vpop.f32.mrf.mxu0
        %1606 = vdwg.mxu0
        %v1608 = vsel %vm1568, %v1562, 0
        %v1611 = vsel %vm1568, %v1566, 0
        %1613 = vmatpush.bf16.xpose.msra.mxu0 0
        %1614 = vmatpush.bf16.xpose.msra.mxu0 0
        %1615 = vmatpush.bf16.xpose.msra.mxu0 0
        %1616 = vmatpush.bf16.xpose.msra.mxu0 0
        %1617 = vmatpush.bf16.xpose.msra.mxu0 0
        %1618 = vmatpush.bf16.xpose.msra.mxu0 0
        %1619 = vmatpush.bf16.xpose.msra.mxu0 0
        %1620 = vmatpush.bf16.xpose.msra.mxu0 %v1611
        %1621 = vmatmul.bf16.gmra.mxu0 %v1608
        %v1622 = vpop.f32.mrf.mxu0
        %v1623 = vadd.f32 0.0, %v1622
        %v1624 = vpop.f32.mrf.mxu0
        %1625 = vdwg.mxu0
        %v1627 = vsel %vm1568, %v1563, 0
        %v1630 = vsel %vm1568, %v1567, 0
        %1632 = vmatpush.bf16.xpose.msra.mxu0 0
        %1633 = vmatpush.bf16.xpose.msra.mxu0 0
        %1634 = vmatpush.bf16.xpose.msra.mxu0 0
        %1635 = vmatpush.bf16.xpose.msra.mxu0 0
        %1636 = vmatpush.bf16.xpose.msra.mxu0 0
        %1637 = vmatpush.bf16.xpose.msra.mxu0 0
        %1638 = vmatpush.bf16.xpose.msra.mxu0 0
        %1639 = vmatpush.bf16.xpose.msra.mxu0 %v1630
        %1640 = vmatmul.bf16.gmra.mxu0 %v1627
        %v1641 = vpop.f32.mrf.mxu0
        %v1642 = vadd.f32 0.0, %v1641
        %v1643 = vpop.f32.mrf.mxu0
        %1644 = vdwg.mxu0
        %vm1645 = vcmask 64512
        %v1646 = vsel %vm1645, %v1585, -inf
        %1647 = vmax.xlane.f32.xlu0 %v1646
        %v1648 = vpop.xlane.xlu0 %1647
        %v1649 = vsel %vm1645, %v1604, -inf
        %1650 = vmax.xlane.f32.xlu0 %v1649
        %v1651 = vpop.xlane.xlu0 %1650
        %v1652 = vsel %vm1645, %v1623, -inf
        %1653 = vmax.xlane.f32.xlu0 %v1652
        %v1654 = vpop.xlane.xlu0 %1653
        %v1655 = vsel %vm1645, %v1642, -inf
        %1656 = vmax.xlane.f32.xlu0 %v1655
        %v1657 = vpop.xlane.xlu0 %1656
        %v1658 = vsub.f32 %v1585, %v1648
        %v1659 = vsub.f32 %v1604, %v1651
        %v1660 = vsub.f32 %v1623, %v1654
        %v1661 = vsub.f32 %v1642, %v1657
        %v1662 = vmul.f32 %v1658, 1.442695
        %v1663 = vpow.pop %v1662
        %v1664 = vmul.f32 %v1659, 1.442695
        %v1665 = vpow.pop %v1664
        %v1666 = vmul.f32 %v1660, 1.442695
        %v1667 = vpow.pop %v1666
        %v1668 = vmul.f32 %v1661, 1.442695
        %v1669 = vpow.pop %v1668
        %v1670 = vsel %vm1645, %v1663, 0.0
        %1671 = vadd.xlane.f32.xlu0 %v1670
        %v1672 = vpop.xlane.xlu0 %1671
        %v1673 = vsel %vm1645, %v1665, 0.0
        %1674 = vadd.xlane.f32.xlu0 %v1673
        %v1675 = vpop.xlane.xlu0 %1674
        %v1676 = vsel %vm1645, %v1667, 0.0
        %1677 = vadd.xlane.f32.xlu0 %v1676
        %v1678 = vpop.xlane.xlu0 %1677
        %v1679 = vsel %vm1645, %v1669, 0.0
        %1680 = vadd.xlane.f32.xlu0 %v1679
        %v1681 = vpop.xlane.xlu0 %1680
        %v1682 = vpack.c.bf16 %v1663, %v1663
        %v1683 = vpack.c.bf16 %v1665, %v1665
        %v1684 = vpack.c.bf16 %v1667, %v1667
        %v1685 = vpack.c.bf16 %v1669, %v1669
        %v1686 = vpack.c.bf16 %v1374, %v1374
        %v1687 = vpack.c.bf16 %v1435, %v1435
        %v1688 = vpack.c.bf16 %v1496, %v1496
        %v1689 = vpack.c.bf16 %v1557, %v1557
        %v1691 = vsel %vm1645, %v1682, 0
        %vm1693 = vcmask 1043456
        %v1695 = vsel %vm1693, %v1686, 0
        %1697 = vmatpush.bf16.msra.mxu0 0
        %1698 = vmatpush.bf16.msra.mxu0 0
        %1699 = vmatpush.bf16.msra.mxu0 0
        %1700 = vmatpush.bf16.msra.mxu0 0
        %1701 = vmatpush.bf16.msra.mxu0 0
        %1702 = vmatpush.bf16.msra.mxu0 0
        %1703 = vmatpush.bf16.msra.mxu0 0
        %1704 = vmatpush.bf16.msra.mxu0 %v1695
        %1705 = vmatmul.bf16.gmra.mxu0 %v1691
        %v1706 = vpop.f32.mrf.mxu0
        %v1707 = vadd.f32 0.0, %v1706
        %v1708 = vpop.f32.mrf.mxu0
        %1709 = vdwg.mxu0
        %v1711 = vsel %vm1645, %v1683, 0
        %v1714 = vsel %vm1693, %v1687, 0
        %1716 = vmatpush.bf16.msra.mxu0 0
        %1717 = vmatpush.bf16.msra.mxu0 0
        %1718 = vmatpush.bf16.msra.mxu0 0
        %1719 = vmatpush.bf16.msra.mxu0 0
        %1720 = vmatpush.bf16.msra.mxu0 0
        %1721 = vmatpush.bf16.msra.mxu0 0
        %1722 = vmatpush.bf16.msra.mxu0 0
        %1723 = vmatpush.bf16.msra.mxu0 %v1714
        %1724 = vmatmul.bf16.gmra.mxu0 %v1711
        %v1725 = vpop.f32.mrf.mxu0
        %v1726 = vadd.f32 0.0, %v1725
        %v1727 = vpop.f32.mrf.mxu0
        %1728 = vdwg.mxu0
        %v1730 = vsel %vm1645, %v1684, 0
        %v1733 = vsel %vm1693, %v1688, 0
        %1735 = vmatpush.bf16.msra.mxu0 0
        %1736 = vmatpush.bf16.msra.mxu0 0
        %1737 = vmatpush.bf16.msra.mxu0 0
        %1738 = vmatpush.bf16.msra.mxu0 0
        %1739 = vmatpush.bf16.msra.mxu0 0
        %1740 = vmatpush.bf16.msra.mxu0 0
        %1741 = vmatpush.bf16.msra.mxu0 0
        %1742 = vmatpush.bf16.msra.mxu0 %v1733
        %1743 = vmatmul.bf16.gmra.mxu0 %v1730
        %v1744 = vpop.f32.mrf.mxu0
        %v1745 = vadd.f32 0.0, %v1744
        %v1746 = vpop.f32.mrf.mxu0
        %1747 = vdwg.mxu0
        %v1749 = vsel %vm1645, %v1685, 0
        %v1752 = vsel %vm1693, %v1689, 0
        %1754 = vmatpush.bf16.msra.mxu0 0
        %1755 = vmatpush.bf16.msra.mxu0 0
        %1756 = vmatpush.bf16.msra.mxu0 0
        %1757 = vmatpush.bf16.msra.mxu0 0
        %1758 = vmatpush.bf16.msra.mxu0 0
        %1759 = vmatpush.bf16.msra.mxu0 0
        %1760 = vmatpush.bf16.msra.mxu0 0
        %1761 = vmatpush.bf16.msra.mxu0 %v1752
        %1762 = vmatmul.bf16.gmra.mxu0 %v1749
        %v1763 = vpop.f32.mrf.mxu0
        %v1764 = vadd.f32 0.0, %v1763
        %v1765 = vpop.f32.mrf.mxu0
        %1766 = vdwg.mxu0
        %v1767 = vrcp.pop %v1672
        %v1768 = vmul.f32 %v1672, %v1767
        %v1769 = vsub.f32 1.0, %v1768
        %v1770 = vmul.f32 %v1767, %v1769
        %v1771 = vadd.f32 %v1767, %v1770
        %vm1772 = vweird.f32 %v1672
        %vm1773 = vweird.f32 %v1767
        %vm1774 = vmor %vm1772, %vm1773
        %v1775 = vsel %vm1774, %v1767, %v1771
        %v1776 = vand.u32 2147483647, %v1672
        %vm1777 = vcmp.eq.f32.partialorder %v1776, 8.507059e+37
        %v1778 = vand.u32 %v1672, 2147483648
        %v1779 = vor.u32 1.1754944e-38, %v1778
        %v1780 = vsel %vm1777, %v1779, %v1775
        %v1781 = vmul.f32 %v1707, %v1780
        %v1782 = vrcp.pop %v1675
        %v1783 = vmul.f32 %v1675, %v1782
        %v1784 = vsub.f32 1.0, %v1783
        %v1785 = vmul.f32 %v1782, %v1784
        %v1786 = vadd.f32 %v1782, %v1785
        %vm1787 = vweird.f32 %v1675
        %vm1788 = vweird.f32 %v1782
        %vm1789 = vmor %vm1787, %vm1788
        %v1790 = vsel %vm1789, %v1782, %v1786
        %v1791 = vand.u32 2147483647, %v1675
        %vm1792 = vcmp.eq.f32.partialorder %v1791, 8.507059e+37
        %v1793 = vand.u32 %v1675, 2147483648
        %v1794 = vor.u32 1.1754944e-38, %v1793
        %v1795 = vsel %vm1792, %v1794, %v1790
        %v1796 = vmul.f32 %v1726, %v1795
        %v1797 = vrcp.pop %v1678
        %v1798 = vmul.f32 %v1678, %v1797
        %v1799 = vsub.f32 1.0, %v1798
        %v1800 = vmul.f32 %v1797, %v1799
        %v1801 = vadd.f32 %v1797, %v1800
        %vm1802 = vweird.f32 %v1678
        %vm1803 = vweird.f32 %v1797
        %vm1804 = vmor %vm1802, %vm1803
        %v1805 = vsel %vm1804, %v1797, %v1801
        %v1806 = vand.u32 2147483647, %v1678
        %vm1807 = vcmp.eq.f32.partialorder %v1806, 8.507059e+37
        %v1808 = vand.u32 %v1678, 2147483648
        %v1809 = vor.u32 1.1754944e-38, %v1808
        %v1810 = vsel %vm1807, %v1809, %v1805
        %v1811 = vmul.f32 %v1745, %v1810
        %v1812 = vrcp.pop %v1681
        %v1813 = vmul.f32 %v1681, %v1812
        %v1814 = vsub.f32 1.0, %v1813
        %v1815 = vmul.f32 %v1812, %v1814
        %v1816 = vadd.f32 %v1812, %v1815
        %vm1817 = vweird.f32 %v1681
        %vm1818 = vweird.f32 %v1812
        %vm1819 = vmor %vm1817, %vm1818
        %v1820 = vsel %vm1819, %v1812, %v1816
        %v1821 = vand.u32 2147483647, %v1681
        %vm1822 = vcmp.eq.f32.partialorder %v1821, 8.507059e+37
        %v1823 = vand.u32 %v1681, 2147483648
        %v1824 = vor.u32 1.1754944e-38, %v1823
        %v1825 = vsel %vm1822, %v1824, %v1820
        %v1826 = vmul.f32 %v1764, %v1825
        %v1827 = vpack.c.bf16 %v1781, %v1781
        %v1828 = vpack.c.bf16 %v1796, %v1796
        %v1829 = vpack.c.bf16 %v1811, %v1811
        %v1830 = vpack.c.bf16 %v1826, %v1826
        %v1831 = vld [vmem:[%s9] sm:$0xf]
        %v1832 = vld [vmem:[%s9 + $0x4] sm:$0xf]
        %v1833 = vld [vmem:[%s9 + $0x8] sm:$0xf]
        %v1834 = vld [vmem:[%s9 + $0xc] sm:$0xf]
        %v1835 = vld [vmem:[%s9 + $0x10] sm:$0xf]
        %v1836 = vld [vmem:[%s9 + $0x14] sm:$0xf]
        %v1837 = vld [vmem:[%s9 + $0x18] sm:$0xf]
        %v1838 = vld [vmem:[%s9 + $0x1c] sm:$0xf]
        %v1839 = vld [vmem:[%s9 + $0x20] sm:$0xf]
        %v1840 = vld [vmem:[%s9 + $0x24] sm:$0xf]
        %v1841 = vld [vmem:[%s9 + $0x28] sm:$0xf]
        %v1842 = vld [vmem:[%s9 + $0x2c] sm:$0xf]
        %v1843 = vld [vmem:[%s9 + $0x30] sm:$0xf]
        %v1844 = vld [vmem:[%s9 + $0x34] sm:$0xf]
        %v1845 = vld [vmem:[%s9 + $0x38] sm:$0xf]
        %v1846 = vld [vmem:[%s9 + $0x3c] sm:$0xf]
        %v1851 = vunpack.c.l.b16 %v1831
        %v1852 = vunpack.c.l.b16 %v1832
        %v1853 = vunpack.c.l.b16 %v1833
        %v1854 = vunpack.c.l.b16 %v1834
        %v1855 = vpack.c.b16 %v1852, %v1851
        %v1856 = vpack.c.b16 %v1854, %v1853
        %v1860 = vsel %vm1568, %v1827, 0
        %1862 = vmatpush.bf16.msra.mxu0 0
        %1863 = vmatpush.bf16.msra.mxu0 0
        %1864 = vmatpush.bf16.msra.mxu0 0
        %1865 = vmatpush.bf16.msra.mxu0 0
        %1866 = vmatpush.bf16.msra.mxu0 0
        %1867 = vmatpush.bf16.msra.mxu0 0
        %1868 = vmatpush.bf16.msra.mxu0 %v1856
        %1869 = vmatpush.bf16.msra.mxu0 %v1855
        %1870 = vmatmul.bf16.gmra.mxu0 %v1860
        %v1871 = vpop.f32.mrf.mxu0
        %v1872 = vadd.f32 0.0, %v1871
        %v1873 = vpop.f32.mrf.mxu0
        %1874 = vdwg.mxu0
        %v1879 = vunpack.c.l.b16 %v1835
        %v1880 = vunpack.c.l.b16 %v1836
        %v1881 = vunpack.c.l.b16 %v1837
        %v1882 = vunpack.c.l.b16 %v1838
        %v1883 = vpack.c.b16 %v1880, %v1879
        %v1884 = vpack.c.b16 %v1882, %v1881
        %v1888 = vsel %vm1568, %v1828, 0
        %1890 = vmatpush.bf16.msra.mxu0 0
        %1891 = vmatpush.bf16.msra.mxu0 0
        %1892 = vmatpush.bf16.msra.mxu0 0
        %1893 = vmatpush.bf16.msra.mxu0 0
        %1894 = vmatpush.bf16.msra.mxu0 0
        %1895 = vmatpush.bf16.msra.mxu0 0
        %1896 = vmatpush.bf16.msra.mxu0 %v1884
        %1897 = vmatpush.bf16.msra.mxu0 %v1883
        %1898 = vmatmul.bf16.gmra.mxu0 %v1888
        %v1899 = vpop.f32.mrf.mxu0
        %v1900 = vadd.f32 0.0, %v1899
        %v1901 = vpop.f32.mrf.mxu0
        %1902 = vdwg.mxu0
        %v1907 = vunpack.c.l.b16 %v1839
        %v1908 = vunpack.c.l.b16 %v1840
        %v1909 = vunpack.c.l.b16 %v1841
        %v1910 = vunpack.c.l.b16 %v1842
        %v1911 = vpack.c.b16 %v1908, %v1907
        %v1912 = vpack.c.b16 %v1910, %v1909
        %v1916 = vsel %vm1568, %v1829, 0
        %1918 = vmatpush.bf16.msra.mxu0 0
        %1919 = vmatpush.bf16.msra.mxu0 0
        %1920 = vmatpush.bf16.msra.mxu0 0
        %1921 = vmatpush.bf16.msra.mxu0 0
        %1922 = vmatpush.bf16.msra.mxu0 0
        %1923 = vmatpush.bf16.msra.mxu0 0
        %1924 = vmatpush.bf16.msra.mxu0 %v1912
        %1925 = vmatpush.bf16.msra.mxu0 %v1911
        %1926 = vmatmul.bf16.gmra.mxu0 %v1916
        %v1927 = vpop.f32.mrf.mxu0
        %v1928 = vadd.f32 0.0, %v1927
        %v1929 = vpop.f32.mrf.mxu0
        %1930 = vdwg.mxu0
        %v1935 = vunpack.c.l.b16 %v1843
        %v1936 = vunpack.c.l.b16 %v1844
        %v1937 = vunpack.c.l.b16 %v1845
        %v1938 = vunpack.c.l.b16 %v1846
        %v1939 = vpack.c.b16 %v1936, %v1935
        %v1940 = vpack.c.b16 %v1938, %v1937
        %v1944 = vsel %vm1568, %v1830, 0
        %1946 = vmatpush.bf16.msra.mxu0 0
        %1947 = vmatpush.bf16.msra.mxu0 0
        %1948 = vmatpush.bf16.msra.mxu0 0
        %1949 = vmatpush.bf16.msra.mxu0 0
        %1950 = vmatpush.bf16.msra.mxu0 0
        %1951 = vmatpush.bf16.msra.mxu0 0
        %1952 = vmatpush.bf16.msra.mxu0 %v1940
        %1953 = vmatpush.bf16.msra.mxu0 %v1939
        %1954 = vmatmul.bf16.gmra.mxu0 %v1944
        %v1955 = vpop.f32.mrf.mxu0
        %v1956 = vadd.f32 0.0, %v1955
        %v1957 = vpop.f32.mrf.mxu0
        %1958 = vdwg.mxu0
        %v1959 = vadd.f32 %v1872, %v1900
        %v1960 = vadd.f32 %v1959, %v1928
        %v1961 = vadd.f32 %v1960, %v1956
        %v1962 = vld [vmem:[%s10] sm:$0x1]
        %v1964 = vperm.slane %v1962, 0
        %v1966 = vadd.f32 %v1961, %v1964
        %v1967 = vadd.f32 %v582, %v1966
        %v1968 = vld [vmem:[%s11] sm:$0x1]
        %v1969 = vld [vmem:[%s12] sm:$0x1]
        %1970 = vadd.xlane.f32.xlu0 %v1967
        %v1971 = vpop.xlane.xlu0 %1970
        %v1972 = vmul.f32 %v1971, %v556
        %v1973 = vsub.f32 %v1967, %v1972
        %v1974 = vmul.f32 %v1973, %v1973
        %1975 = vadd.xlane.f32.xlu0 %v1974
        %v1976 = vpop.xlane.xlu0 %1975
        %v1977 = vmul.f32 %v1976, %v556
        %v1978 = vadd.f32 %v1977, 1e-05
        %v1979 = vrsqrt.pop %v1978
        %v1980 = vmul.f32 %v1979, %v1978
        %v1981 = vmul.f32 %v1980, %v1979
        %v1982 = vmul.f32 0.5, %v1981
        %v1983 = vsub.f32 1.5, %v1982
        %v1984 = vmul.f32 %v1979, %v1983
        %vm1985 = vweird.f32 %v1978
        %vm1986 = vweird.f32 %v1979
        %vm1987 = vmor %vm1985, %vm1986
        %v1988 = vsel %vm1987, %v1979, %v1984
        %v1989 = vmul.f32 %v1973, %v1988
        %v1991 = vperm.slane %v1968, 0
        %v1993 = vmul.f32 %v1989, %v1991
        %v1995 = vperm.slane %v1969, 0
        %v1997 = vadd.f32 %v1993, %v1995
        %v1998 = vld [vmem:[%s13] sm:$0xff]
        %v1999 = vld [vmem:[%s13 + $0x8] sm:$0xff]
        %v2000 = vld [vmem:[%s13 + $0x10] sm:$0xff]
        %v2001 = vld [vmem:[%s13 + $0x18] sm:$0xff]
        %v2002 = vld [vmem:[%s13 + $0x20] sm:$0xff]
        %v2003 = vld [vmem:[%s13 + $0x28] sm:$0xff]
        %v2004 = vld [vmem:[%s13 + $0x30] sm:$0xff]
        %v2005 = vld [vmem:[%s13 + $0x38] sm:$0xff]
        %v2006 = vld [vmem:[%s13 + $0x40] sm:$0xff]
        %v2007 = vld [vmem:[%s13 + $0x48] sm:$0xff]
        %v2008 = vld [vmem:[%s13 + $0x50] sm:$0xff]
        %v2009 = vld [vmem:[%s13 + $0x58] sm:$0xff]
        %v2010 = vld [vmem:[%s13 + $0x60] sm:$0xff]
        %v2011 = vld [vmem:[%s13 + $0x68] sm:$0xff]
        %v2012 = vld [vmem:[%s13 + $0x70] sm:$0xff]
        %v2013 = vld [vmem:[%s13 + $0x78] sm:$0xff]
        %v2014 = vld [vmem:[%s13 + $0x80] sm:$0xff]
        %v2015 = vld [vmem:[%s13 + $0x88] sm:$0xff]
        %v2016 = vld [vmem:[%s13 + $0x90] sm:$0xff]
        %v2017 = vld [vmem:[%s13 + $0x98] sm:$0xff]
        %v2018 = vld [vmem:[%s13 + $0xa0] sm:$0xff]
        %v2019 = vld [vmem:[%s13 + $0xa8] sm:$0xff]
        %v2020 = vld [vmem:[%s13 + $0xb0] sm:$0xff]
        %v2021 = vld [vmem:[%s13 + $0xb8] sm:$0xff]
        %v2022 = vld [vmem:[%s13 + $0xc0] sm:$0xff]
        %v2023 = vld [vmem:[%s13 + $0xc8] sm:$0xff]
        %v2024 = vld [vmem:[%s13 + $0xd0] sm:$0xff]
        %v2025 = vld [vmem:[%s13 + $0xd8] sm:$0xff]
        %v2026 = vld [vmem:[%s13 + $0xe0] sm:$0xff]
        %v2027 = vld [vmem:[%s13 + $0xe8] sm:$0xff]
        %v2028 = vld [vmem:[%s13 + $0xf0] sm:$0xff]
        %v2029 = vld [vmem:[%s13 + $0xf8] sm:$0xff]
        %v2030 = vpack.c.bf16 %v1997, %v1997
        %v2031 = vld [vmem:[%s14] sm:$0xf]
        %v2033 = vperm.slane %v2031, 0
        %v2034 = vperm.slane %v2031, 1
        %v2035 = vperm.slane %v2031, 2
        %v2036 = vperm.slane %v2031, 3
        %v2073 = vunpack.c.l.b16 %v1998
        %v2074 = vunpack.c.h.b16 %v1998
        %v2075 = vunpack.c.l.b16 %v1999
        %v2076 = vunpack.c.h.b16 %v1999
        %v2077 = vunpack.c.l.b16 %v2000
        %v2078 = vunpack.c.h.b16 %v2000
        %v2079 = vunpack.c.l.b16 %v2001
        %v2080 = vunpack.c.h.b16 %v2001
        %v2081 = vunpack.c.l.b16 %v2002
        %v2082 = vunpack.c.h.b16 %v2002
        %v2083 = vunpack.c.l.b16 %v2003
        %v2084 = vunpack.c.h.b16 %v2003
        %v2085 = vunpack.c.l.b16 %v2004
        %v2086 = vunpack.c.h.b16 %v2004
        %v2087 = vunpack.c.l.b16 %v2005
        %v2088 = vunpack.c.h.b16 %v2005
        %v2089 = vunpack.c.l.b16 %v2006
        %v2090 = vunpack.c.h.b16 %v2006
        %v2091 = vunpack.c.l.b16 %v2007
        %v2092 = vunpack.c.h.b16 %v2007
        %v2093 = vunpack.c.l.b16 %v2008
        %v2094 = vunpack.c.h.b16 %v2008
        %v2095 = vunpack.c.l.b16 %v2009
        %v2096 = vunpack.c.h.b16 %v2009
        %v2097 = vunpack.c.l.b16 %v2010
        %v2098 = vunpack.c.h.b16 %v2010
        %v2099 = vunpack.c.l.b16 %v2011
        %v2100 = vunpack.c.h.b16 %v2011
        %v2101 = vunpack.c.l.b16 %v2012
        %v2102 = vunpack.c.h.b16 %v2012
        %v2103 = vunpack.c.l.b16 %v2013
        %v2104 = vunpack.c.h.b16 %v2013
        %v2105 = vunpack.c.l.b16 %v2014
        %v2106 = vunpack.c.h.b16 %v2014
        %v2107 = vunpack.c.l.b16 %v2015
        %v2108 = vunpack.c.h.b16 %v2015
        %v2109 = vunpack.c.l.b16 %v2016
        %v2110 = vunpack.c.h.b16 %v2016
        %v2111 = vunpack.c.l.b16 %v2017
        %v2112 = vunpack.c.h.b16 %v2017
        %v2113 = vunpack.c.l.b16 %v2018
        %v2114 = vunpack.c.h.b16 %v2018
        %v2115 = vunpack.c.l.b16 %v2019
        %v2116 = vunpack.c.h.b16 %v2019
        %v2117 = vunpack.c.l.b16 %v2020
        %v2118 = vunpack.c.h.b16 %v2020
        %v2119 = vunpack.c.l.b16 %v2021
        %v2120 = vunpack.c.h.b16 %v2021
        %v2121 = vunpack.c.l.b16 %v2022
        %v2122 = vunpack.c.h.b16 %v2022
        %v2123 = vunpack.c.l.b16 %v2023
        %v2124 = vunpack.c.h.b16 %v2023
        %v2125 = vunpack.c.l.b16 %v2024
        %v2126 = vunpack.c.h.b16 %v2024
        %v2127 = vunpack.c.l.b16 %v2025
        %v2128 = vunpack.c.h.b16 %v2025
        %v2129 = vunpack.c.l.b16 %v2026
        %v2130 = vunpack.c.h.b16 %v2026
        %v2131 = vunpack.c.l.b16 %v2027
        %v2132 = vunpack.c.h.b16 %v2027
        %v2133 = vunpack.c.l.b16 %v2028
        %v2134 = vunpack.c.h.b16 %v2028
        %v2135 = vunpack.c.l.b16 %v2029
        %v2136 = vunpack.c.h.b16 %v2029
        %v2137 = vpack.c.b16 %v2077, %v2073
        %v2138 = vpack.c.b16 %v2078, %v2074
        %v2139 = vpack.c.b16 %v2079, %v2075
        %v2140 = vpack.c.b16 %v2080, %v2076
        %v2141 = vpack.c.b16 %v2085, %v2081
        %v2142 = vpack.c.b16 %v2086, %v2082
        %v2143 = vpack.c.b16 %v2087, %v2083
        %v2144 = vpack.c.b16 %v2088, %v2084
        %v2145 = vpack.c.b16 %v2093, %v2089
        %v2146 = vpack.c.b16 %v2094, %v2090
        %v2147 = vpack.c.b16 %v2095, %v2091
        %v2148 = vpack.c.b16 %v2096, %v2092
        %v2149 = vpack.c.b16 %v2101, %v2097
        %v2150 = vpack.c.b16 %v2102, %v2098
        %v2151 = vpack.c.b16 %v2103, %v2099
        %v2152 = vpack.c.b16 %v2104, %v2100
        %v2153 = vpack.c.b16 %v2109, %v2105
        %v2154 = vpack.c.b16 %v2110, %v2106
        %v2155 = vpack.c.b16 %v2111, %v2107
        %v2156 = vpack.c.b16 %v2112, %v2108
        %v2157 = vpack.c.b16 %v2117, %v2113
        %v2158 = vpack.c.b16 %v2118, %v2114
        %v2159 = vpack.c.b16 %v2119, %v2115
        %v2160 = vpack.c.b16 %v2120, %v2116
        %v2161 = vpack.c.b16 %v2125, %v2121
        %v2162 = vpack.c.b16 %v2126, %v2122
        %v2163 = vpack.c.b16 %v2127, %v2123
        %v2164 = vpack.c.b16 %v2128, %v2124
        %v2165 = vpack.c.b16 %v2133, %v2129
        %v2166 = vpack.c.b16 %v2134, %v2130
        %v2167 = vpack.c.b16 %v2135, %v2131
        %v2168 = vpack.c.b16 %v2136, %v2132
        %2201 = vmatpush.bf16.msra.mxu0 %v2165
        %2202 = vmatpush.bf16.msra.mxu0 %v2161
        %2203 = vmatpush.bf16.msra.mxu0 %v2157
        %2204 = vmatpush.bf16.msra.mxu0 %v2153
        %2205 = vmatpush.bf16.msra.mxu0 %v2149
        %2206 = vmatpush.bf16.msra.mxu0 %v2145
        %2207 = vmatpush.bf16.msra.mxu0 %v2141
        %2208 = vmatpush.bf16.msra.mxu0 %v2137
        %2209 = vmatmul.bf16.gmra.mxu0 %v2030
        %v2210 = vpop.f32.mrf.mxu0
        %v2211 = vadd.f32 %v2033, %v2210
        %v2212 = vpop.f32.mrf.mxu0
        %2213 = vdwg.mxu0
        %2214 = vmatpush.bf16.msra.mxu0 %v2166
        %2215 = vmatpush.bf16.msra.mxu0 %v2162
        %2216 = vmatpush.bf16.msra.mxu0 %v2158
        %2217 = vmatpush.bf16.msra.mxu0 %v2154
        %2218 = vmatpush.bf16.msra.mxu0 %v2150
        %2219 = vmatpush.bf16.msra.mxu0 %v2146
        %2220 = vmatpush.bf16.msra.mxu0 %v2142
        %2221 = vmatpush.bf16.msra.mxu0 %v2138
        %2222 = vmatmul.bf16.gmra.mxu0 %v2030
        %v2223 = vpop.f32.mrf.mxu0
        %v2224 = vadd.f32 %v2034, %v2223
        %v2225 = vpop.f32.mrf.mxu0
        %2226 = vdwg.mxu0
        %2227 = vmatpush.bf16.msra.mxu0 %v2167
        %2228 = vmatpush.bf16.msra.mxu0 %v2163
        %2229 = vmatpush.bf16.msra.mxu0 %v2159
        %2230 = vmatpush.bf16.msra.mxu0 %v2155
        %2231 = vmatpush.bf16.msra.mxu0 %v2151
        %2232 = vmatpush.bf16.msra.mxu0 %v2147
        %2233 = vmatpush.bf16.msra.mxu0 %v2143
        %2234 = vmatpush.bf16.msra.mxu0 %v2139
        %2235 = vmatmul.bf16.gmra.mxu0 %v2030
        %v2236 = vpop.f32.mrf.mxu0
        %v2237 = vadd.f32 %v2035, %v2236
        %v2238 = vpop.f32.mrf.mxu0
        %2239 = vdwg.mxu0
        %2240 = vmatpush.bf16.msra.mxu0 %v2168
        %2241 = vmatpush.bf16.msra.mxu0 %v2164
        %2242 = vmatpush.bf16.msra.mxu0 %v2160
        %2243 = vmatpush.bf16.msra.mxu0 %v2156
        %2244 = vmatpush.bf16.msra.mxu0 %v2152
        %2245 = vmatpush.bf16.msra.mxu0 %v2148
        %2246 = vmatpush.bf16.msra.mxu0 %v2144
        %2247 = vmatpush.bf16.msra.mxu0 %v2140
        %2248 = vmatmul.bf16.gmra.mxu0 %v2030
        %v2249 = vpop.f32.mrf.mxu0
        %v2250 = vadd.f32 %v2036, %v2249
        %v2251 = vpop.f32.mrf.mxu0
        %2252 = vdwg.mxu0
        %v2253 = vmul.f32 %v2211, %v2211
        %v2254 = vmul.f32 %v2224, %v2224
        %v2255 = vmul.f32 %v2237, %v2237
        %v2256 = vmul.f32 %v2250, %v2250
        %v2257 = vmul.f32 %v2211, %v2253
        %v2258 = vmul.f32 %v2224, %v2254
        %v2259 = vmul.f32 %v2237, %v2255
        %v2260 = vmul.f32 %v2250, %v2256
        %v2261 = vmul.f32 %v2257, 0.044715
        %v2262 = vmul.f32 %v2258, 0.044715
        %v2263 = vmul.f32 %v2259, 0.044715
        %v2264 = vmul.f32 %v2260, 0.044715
        %v2265 = vadd.f32 %v2211, %v2261
        %v2266 = vadd.f32 %v2224, %v2262
        %v2267 = vadd.f32 %v2237, %v2263
        %v2268 = vadd.f32 %v2250, %v2264
        %v2269 = vmul.f32 %v2265, 0.7978846
        %v2270 = vmul.f32 %v2266, 0.7978846
        %v2271 = vmul.f32 %v2267, 0.7978846
        %v2272 = vmul.f32 %v2268, 0.7978846
        %v2273 = vtanh.pop %v2269
        %v2274 = vtanh.pop %v2270
        %v2275 = vtanh.pop %v2271
        %v2276 = vtanh.pop %v2272
        %v2277 = vadd.f32 %v2273, 1.0
        %v2278 = vadd.f32 %v2274, 1.0
        %v2279 = vadd.f32 %v2275, 1.0
        %v2280 = vadd.f32 %v2276, 1.0
        %v2281 = vmul.f32 %v2277, 0.5
        %v2282 = vmul.f32 %v2278, 0.5
        %v2283 = vmul.f32 %v2279, 0.5
        %v2284 = vmul.f32 %v2280, 0.5
        %v2285 = vmul.f32 %v2211, %v2281
        %v2286 = vmul.f32 %v2224, %v2282
        %v2287 = vmul.f32 %v2237, %v2283
        %v2288 = vmul.f32 %v2250, %v2284
        %v2289 = vld [vmem:[%s15] sm:$0xf]
        %v2290 = vld [vmem:[%s15 + $0x4] sm:$0xf]
        %v2291 = vld [vmem:[%s15 + $0x8] sm:$0xf]
        %v2292 = vld [vmem:[%s15 + $0xc] sm:$0xf]
        %v2293 = vld [vmem:[%s15 + $0x10] sm:$0xf]
        %v2294 = vld [vmem:[%s15 + $0x14] sm:$0xf]
        %v2295 = vld [vmem:[%s15 + $0x18] sm:$0xf]
        %v2296 = vld [vmem:[%s15 + $0x1c] sm:$0xf]
        %v2297 = vld [vmem:[%s15 + $0x20] sm:$0xf]
        %v2298 = vld [vmem:[%s15 + $0x24] sm:$0xf]
        %v2299 = vld [vmem:[%s15 + $0x28] sm:$0xf]
        %v2300 = vld [vmem:[%s15 + $0x2c] sm:$0xf]
        %v2301 = vld [vmem:[%s15 + $0x30] sm:$0xf]
        %v2302 = vld [vmem:[%s15 + $0x34] sm:$0xf]
        %v2303 = vld [vmem:[%s15 + $0x38] sm:$0xf]
        %v2304 = vld [vmem:[%s15 + $0x3c] sm:$0xf]
        %v2305 = vld [vmem:[%s15 + $0x40] sm:$0xf]
        %v2306 = vld [vmem:[%s15 + $0x44] sm:$0xf]
        %v2307 = vld [vmem:[%s15 + $0x48] sm:$0xf]
        %v2308 = vld [vmem:[%s15 + $0x4c] sm:$0xf]
        %v2309 = vld [vmem:[%s15 + $0x50] sm:$0xf]
        %v2310 = vld [vmem:[%s15 + $0x54] sm:$0xf]
        %v2311 = vld [vmem:[%s15 + $0x58] sm:$0xf]
        %v2312 = vld [vmem:[%s15 + $0x5c] sm:$0xf]
        %v2313 = vld [vmem:[%s15 + $0x60] sm:$0xf]
        %v2314 = vld [vmem:[%s15 + $0x64] sm:$0xf]
        %v2315 = vld [vmem:[%s15 + $0x68] sm:$0xf]
        %v2316 = vld [vmem:[%s15 + $0x6c] sm:$0xf]
        %v2317 = vld [vmem:[%s15 + $0x70] sm:$0xf]
        %v2318 = vld [vmem:[%s15 + $0x74] sm:$0xf]
        %v2319 = vld [vmem:[%s15 + $0x78] sm:$0xf]
        %v2320 = vld [vmem:[%s15 + $0x7c] sm:$0xf]
        %v2321 = vld [vmem:[%s15 + $0x80] sm:$0xf]
        %v2322 = vld [vmem:[%s15 + $0x84] sm:$0xf]
        %v2323 = vld [vmem:[%s15 + $0x88] sm:$0xf]
        %v2324 = vld [vmem:[%s15 + $0x8c] sm:$0xf]
        %v2325 = vld [vmem:[%s15 + $0x90] sm:$0xf]
        %v2326 = vld [vmem:[%s15 + $0x94] sm:$0xf]
        %v2327 = vld [vmem:[%s15 + $0x98] sm:$0xf]
        %v2328 = vld [vmem:[%s15 + $0x9c] sm:$0xf]
        %v2329 = vld [vmem:[%s15 + $0xa0] sm:$0xf]
        %v2330 = vld [vmem:[%s15 + $0xa4] sm:$0xf]
        %v2331 = vld [vmem:[%s15 + $0xa8] sm:$0xf]
        %v2332 = vld [vmem:[%s15 + $0xac] sm:$0xf]
        %v2333 = vld [vmem:[%s15 + $0xb0] sm:$0xf]
        %v2334 = vld [vmem:[%s15 + $0xb4] sm:$0xf]
        %v2335 = vld [vmem:[%s15 + $0xb8] sm:$0xf]
        %v2336 = vld [vmem:[%s15 + $0xbc] sm:$0xf]
        %v2337 = vld [vmem:[%s15 + $0xc0] sm:$0xf]
        %v2338 = vld [vmem:[%s15 + $0xc4] sm:$0xf]
        %v2339 = vld [vmem:[%s15 + $0xc8] sm:$0xf]
        %v2340 = vld [vmem:[%s15 + $0xcc] sm:$0xf]
        %v2341 = vld [vmem:[%s15 + $0xd0] sm:$0xf]
        %v2342 = vld [vmem:[%s15 + $0xd4] sm:$0xf]
        %v2343 = vld [vmem:[%s15 + $0xd8] sm:$0xf]
        %v2344 = vld [vmem:[%s15 + $0xdc] sm:$0xf]
        %v2345 = vld [vmem:[%s15 + $0xe0] sm:$0xf]
        %v2346 = vld [vmem:[%s15 + $0xe4] sm:$0xf]
        %v2347 = vld [vmem:[%s15 + $0xe8] sm:$0xf]
        %v2348 = vld [vmem:[%s15 + $0xec] sm:$0xf]
        %v2349 = vld [vmem:[%s15 + $0xf0] sm:$0xf]
        %v2350 = vld [vmem:[%s15 + $0xf4] sm:$0xf]
        %v2351 = vld [vmem:[%s15 + $0xf8] sm:$0xf]
        %v2352 = vld [vmem:[%s15 + $0xfc] sm:$0xf]
        %v2353 = vpack.c.bf16 %v2285, %v2285
        %v2354 = vpack.c.bf16 %v2286, %v2286
        %v2355 = vpack.c.bf16 %v2287, %v2287
        %v2356 = vpack.c.bf16 %v2288, %v2288
        %v2357 = vld [vmem:[%s16] sm:$0x1]
        %v2359 = vperm.slane %v2357, 0
        %v2425 = vunpack.c.l.b16 %v2289
        %v2426 = vunpack.c.l.b16 %v2290
        %v2427 = vunpack.c.l.b16 %v2291
        %v2428 = vunpack.c.l.b16 %v2292
        %v2429 = vunpack.c.l.b16 %v2293
        %v2430 = vunpack.c.l.b16 %v2294
        %v2431 = vunpack.c.l.b16 %v2295
        %v2432 = vunpack.c.l.b16 %v2296
        %v2433 = vunpack.c.l.b16 %v2297
        %v2434 = vunpack.c.l.b16 %v2298
        %v2435 = vunpack.c.l.b16 %v2299
        %v2436 = vunpack.c.l.b16 %v2300
        %v2437 = vunpack.c.l.b16 %v2301
        %v2438 = vunpack.c.l.b16 %v2302
        %v2439 = vunpack.c.l.b16 %v2303
        %v2440 = vunpack.c.l.b16 %v2304
        %v2441 = vunpack.c.l.b16 %v2305
        %v2442 = vunpack.c.l.b16 %v2306
        %v2443 = vunpack.c.l.b16 %v2307
        %v2444 = vunpack.c.l.b16 %v2308
        %v2445 = vunpack.c.l.b16 %v2309
        %v2446 = vunpack.c.l.b16 %v2310
        %v2447 = vunpack.c.l.b16 %v2311
        %v2448 = vunpack.c.l.b16 %v2312
        %v2449 = vunpack.c.l.b16 %v2313
        %v2450 = vunpack.c.l.b16 %v2314
        %v2451 = vunpack.c.l.b16 %v2315
        %v2452 = vunpack.c.l.b16 %v2316
        %v2453 = vunpack.c.l.b16 %v2317
        %v2454 = vunpack.c.l.b16 %v2318
        %v2455 = vunpack.c.l.b16 %v2319
        %v2456 = vunpack.c.l.b16 %v2320
        %v2457 = vunpack.c.l.b16 %v2321
        %v2458 = vunpack.c.l.b16 %v2322
        %v2459 = vunpack.c.l.b16 %v2323
        %v2460 = vunpack.c.l.b16 %v2324
        %v2461 = vunpack.c.l.b16 %v2325
        %v2462 = vunpack.c.l.b16 %v2326
        %v2463 = vunpack.c.l.b16 %v2327
        %v2464 = vunpack.c.l.b16 %v2328
        %v2465 = vunpack.c.l.b16 %v2329
        %v2466 = vunpack.c.l.b16 %v2330
        %v2467 = vunpack.c.l.b16 %v2331
        %v2468 = vunpack.c.l.b16 %v2332
        %v2469 = vunpack.c.l.b16 %v2333
        %v2470 = vunpack.c.l.b16 %v2334
        %v2471 = vunpack.c.l.b16 %v2335
        %v2472 = vunpack.c.l.b16 %v2336
        %v2473 = vunpack.c.l.b16 %v2337
        %v2474 = vunpack.c.l.b16 %v2338
        %v2475 = vunpack.c.l.b16 %v2339
        %v2476 = vunpack.c.l.b16 %v2340
        %v2477 = vunpack.c.l.b16 %v2341
        %v2478 = vunpack.c.l.b16 %v2342
        %v2479 = vunpack.c.l.b16 %v2343
        %v2480 = vunpack.c.l.b16 %v2344
        %v2481 = vunpack.c.l.b16 %v2345
        %v2482 = vunpack.c.l.b16 %v2346
        %v2483 = vunpack.c.l.b16 %v2347
        %v2484 = vunpack.c.l.b16 %v2348
        %v2485 = vunpack.c.l.b16 %v2349
        %v2486 = vunpack.c.l.b16 %v2350
        %v2487 = vunpack.c.l.b16 %v2351
        %v2488 = vunpack.c.l.b16 %v2352
        %v2489 = vpack.c.b16 %v2426, %v2425
        %v2490 = vpack.c.b16 %v2428, %v2427
        %v2491 = vpack.c.b16 %v2430, %v2429
        %v2492 = vpack.c.b16 %v2432, %v2431
        %v2493 = vpack.c.b16 %v2434, %v2433
        %v2494 = vpack.c.b16 %v2436, %v2435
        %v2495 = vpack.c.b16 %v2438, %v2437
        %v2496 = vpack.c.b16 %v2440, %v2439
        %v2497 = vpack.c.b16 %v2442, %v2441
        %v2498 = vpack.c.b16 %v2444, %v2443
        %v2499 = vpack.c.b16 %v2446, %v2445
        %v2500 = vpack.c.b16 %v2448, %v2447
        %v2501 = vpack.c.b16 %v2450, %v2449
        %v2502 = vpack.c.b16 %v2452, %v2451
        %v2503 = vpack.c.b16 %v2454, %v2453
        %v2504 = vpack.c.b16 %v2456, %v2455
        %v2505 = vpack.c.b16 %v2458, %v2457
        %v2506 = vpack.c.b16 %v2460, %v2459
        %v2507 = vpack.c.b16 %v2462, %v2461
        %v2508 = vpack.c.b16 %v2464, %v2463
        %v2509 = vpack.c.b16 %v2466, %v2465
        %v2510 = vpack.c.b16 %v2468, %v2467
        %v2511 = vpack.c.b16 %v2470, %v2469
        %v2512 = vpack.c.b16 %v2472, %v2471
        %v2513 = vpack.c.b16 %v2474, %v2473
        %v2514 = vpack.c.b16 %v2476, %v2475
        %v2515 = vpack.c.b16 %v2478, %v2477
        %v2516 = vpack.c.b16 %v2480, %v2479
        %v2517 = vpack.c.b16 %v2482, %v2481
        %v2518 = vpack.c.b16 %v2484, %v2483
        %v2519 = vpack.c.b16 %v2486, %v2485
        %v2520 = vpack.c.b16 %v2488, %v2487
        %2553 = vmatpush.bf16.msra.mxu0 %v2496
        %2554 = vmatpush.bf16.msra.mxu0 %v2495
        %2555 = vmatpush.bf16.msra.mxu0 %v2494
        %2556 = vmatpush.bf16.msra.mxu0 %v2493
        %2557 = vmatpush.bf16.msra.mxu0 %v2492
        %2558 = vmatpush.bf16.msra.mxu0 %v2491
        %2559 = vmatpush.bf16.msra.mxu0 %v2490
        %2560 = vmatpush.bf16.msra.mxu0 %v2489
        %2561 = vmatmul.bf16.gmra.mxu0 %v2353
        %v2562 = vpop.f32.mrf.mxu0
        %v2563 = vadd.f32 %v2359, %v2562
        %v2564 = vpop.f32.mrf.mxu0
        %2565 = vdwg.mxu0
        %2566 = vmatpush.bf16.msra.mxu0 %v2504
        %2567 = vmatpush.bf16.msra.mxu0 %v2503
        %2568 = vmatpush.bf16.msra.mxu0 %v2502
        %2569 = vmatpush.bf16.msra.mxu0 %v2501
        %2570 = vmatpush.bf16.msra.mxu0 %v2500
        %2571 = vmatpush.bf16.msra.mxu0 %v2499
        %2572 = vmatpush.bf16.msra.mxu0 %v2498
        %2573 = vmatpush.bf16.msra.mxu0 %v2497
        %2574 = vmatmul.bf16.gmra.mxu0 %v2354
        %v2575 = vpop.f32.mrf.mxu0
        %v2576 = vadd.f32 %v2563, %v2575
        %v2577 = vpop.f32.mrf.mxu0
        %2578 = vdwg.mxu0
        %2579 = vmatpush.bf16.msra.mxu0 %v2512
        %2580 = vmatpush.bf16.msra.mxu0 %v2511
        %2581 = vmatpush.bf16.msra.mxu0 %v2510
        %2582 = vmatpush.bf16.msra.mxu0 %v2509
        %2583 = vmatpush.bf16.msra.mxu0 %v2508
        %2584 = vmatpush.bf16.msra.mxu0 %v2507
        %2585 = vmatpush.bf16.msra.mxu0 %v2506
        %2586 = vmatpush.bf16.msra.mxu0 %v2505
        %2587 = vmatmul.bf16.gmra.mxu0 %v2355
        %v2588 = vpop.f32.mrf.mxu0
        %v2589 = vadd.f32 %v2576, %v2588
        %v2590 = vpop.f32.mrf.mxu0
        %2591 = vdwg.mxu0
        %2592 = vmatpush.bf16.msra.mxu0 %v2520
        %2593 = vmatpush.bf16.msra.mxu0 %v2519
        %2594 = vmatpush.bf16.msra.mxu0 %v2518
        %2595 = vmatpush.bf16.msra.mxu0 %v2517
        %2596 = vmatpush.bf16.msra.mxu0 %v2516
        %2597 = vmatpush.bf16.msra.mxu0 %v2515
        %2598 = vmatpush.bf16.msra.mxu0 %v2514
        %2599 = vmatpush.bf16.msra.mxu0 %v2513
        %2600 = vmatmul.bf16.gmra.mxu0 %v2356
        %v2601 = vpop.f32.mrf.mxu0
        %v2602 = vadd.f32 %v2589, %v2601
        %v2603 = vpop.f32.mrf.mxu0
        %2604 = vdwg.mxu0
        %v2605 = vadd.f32 %v1997, %v2602
        %2606 = vst [vmem:[%s539] sm:$0xff] %v2605
        %s2607 = sand.u32 %s401, 1
        %s2608 = scalar_lea.sflag [#allocation3], %s2607
        %s2609 = sand.u32 %s401, 1
        %s2610 = smul.addr %s2609, 8
        %s2611 = scalar_lea.vmem [#allocation2], %s2610
        // Predicated region
        $region89: #{tpu_custom_call.1} parent=87 // pred_check
          %p2612 = pneg %p411
        $region90: #{tpu_custom_call.1} parent=87 // pred_check_branch
          %2614 = sbr.rel (%p2612) target = $region92
        $region91: #{tpu_custom_call.1} parent=87 // pred_region
          %2616 = vsyncadd %s2608, 0
          %s2617 = smul.addr %s31, 8
          %s2618 = scalar_lea.hbm %s17, %s2617
          %s2620 = sshll.u32 %s2611, 4
          %s2621 = int_to_ptr.vmem [resolvable:$true] %s2620
          %s2622 = sshll.u32 %s2618, 4
          %s2623 = int_to_ptr.hbm [resolvable:$true] %s2622
          %2625 = dma.vmem_to_hbm [thread:$0]  %s2621, 128, %s2623, %s2608
        $region92: #{tpu_custom_call.1} parent=87 // pred_fallthru
          _
      $region88: #{tpu_custom_call.1} parent=5 // pred_fallthru
        _
      %p2626 = scmp.le.s32.totalorder 2, %s26
      // Predicated region
      $region93: #{tpu_custom_call.1} parent=5 // pred_check
        %p2627 = pneg %p2626
      $region94: #{tpu_custom_call.1} parent=5 // pred_check_branch
        %2629 = sbr.rel (%p2627) target = $region96
      $region95: #{tpu_custom_call.1} parent=5 // pred_region
        %s2630 = ssub.s32 %s26, 2
        // Predicated region
        $region97: #{tpu_custom_call.1} parent=95 // pred_check
          %p2631 = pneg %p417
        $region98: #{tpu_custom_call.1} parent=95 // pred_check_branch
          %2633 = sbr.rel (%p2631) target = $region100
        $region99: #{tpu_custom_call.1} parent=95 // pred_region
          %s2634 = sand.u32 %s402, 1
          %s2635 = scalar_lea.sflag [#allocation3], %s2634
          %s2636 = sand.u32 %s402, 1
          %s2637 = smul.addr %s2636, 8
          %s2638 = scalar_lea.vmem [#allocation2], %s2637
          %2640 = dma.done %s2635, 128
        $region100: #{tpu_custom_call.1} parent=95 // pred_fallthru
          _
      $region96: #{tpu_custom_call.1} parent=5 // pred_fallthru
        _
    $region6: #{tpu_custom_call.1} parent=1 // loop_footer
      %s30 = sadd.s32 1, %s26
    $region7: #{tpu_custom_call.1} parent=1 // loop_footer_branch
      %25 = sbr.rel target = $region3
    $region8: #{tpu_custom_call.1} parent=1 // loop_exit
      _
    %2641 = vsyncpa [#allocation3], 1
    %s2642 = scalar_lea.sflag [#allocation3], 1
    %2643 = vsyncpa %s2642, 1

// kernel: tpu_custom_call.1
$region0: #{tpu_custom_call.1}
  #allocation0 [shape = 'u32[]', space=smem, size = 0x4, offset = 0x4, fixed_abs, tag = 'smem constant byte address 0x4 - core index']
  #allocation1 [shape = 'u32[72,128]{1,0:T(1,128)}', space=vmem, size = 0x9000, scoped, tag = 'internal scratch']
  %s0 = inlined_call_operand.vmem [shape: f32[2,8,128], index: 0, kind: input, shape index: {}]
  %s1 = inlined_call_operand.vmem [shape: f32[1,128], index: 1, kind: input, shape index: {}]
  %s2 = inlined_call_operand.vmem [shape: f32[1,128], index: 2, kind: input, shape index: {}]
  %s3 = inlined_call_operand.vmem [shape: bf16[4,128,32], index: 3, kind: input, shape index: {}]
  %s4 = inlined_call_operand.vmem [shape: f32[4,1,32], index: 4, kind: input, shape index: {}]
  %s5 = inlined_call_operand.vmem [shape: bf16[4,128,32], index: 5, kind: input, shape index: {}]
  %s6 = inlined_call_operand.vmem [shape: f32[4,1,32], index: 6, kind: input, shape index: {}]
  %s7 = inlined_call_operand.vmem [shape: bf16[4,128,32], index: 7, kind: input, shape index: {}]
  %s8 = inlined_call_operand.vmem [shape: f32[4,1,32], index: 8, kind: input, shape index: {}]
  %s9 = inlined_call_operand.vmem [shape: bf16[4,32,128], index: 9, kind: input, shape index: {}]
  %s10 = inlined_call_operand.vmem [shape: f32[1,128], index: 10, kind: input, shape index: {}]
  %s11 = inlined_call_operand.vmem [shape: f32[1,128], index: 11, kind: input, shape index: {}]
  %s12 = inlined_call_operand.vmem [shape: f32[1,128], index: 12, kind: input, shape index: {}]
  %s13 = inlined_call_operand.vmem [shape: bf16[128,512], index: 13, kind: input, shape index: {}]
  %s14 = inlined_call_operand.vmem [shape: f32[1,512], index: 14, kind: input, shape index: {}]
  %s15 = inlined_call_operand.vmem [shape: bf16[512,128], index: 15, kind: input, shape index: {}]
  %s16 = inlined_call_operand.vmem [shape: f32[1,128], index: 16, kind: input, shape index: {}]
  %s17 = inlined_call_operand.hbm [shape: f32[2,8,128], index: 17, kind: output, shape index: {}]
  %s18 = sld [smem:[#allocation0]]
  $region101: #{tpu_custom_call.1} parent=0
    _
  %s20 = ssub.s32 1, %s18
  %s21 = scalar_select 0, %s20, %s18
  $region1: #{tpu_custom_call.1} parent=0
    #allocation2 [shape = 'u8[8192]{0}', space=vmem, size = 0x2000, scoped, tag = 'output window, operand 0']
    #allocation3 [shape = 's32[2]{0}', space=sflag, size = 0x8, scoped, tag = 'scoped memory for tpu_custom_call.1']
    %22 = vsyncpa [#allocation3], 0
    %s23 = scalar_lea.sflag [#allocation3], 1
    %24 = vsyncpa %s23, 0
    loop: start=0, step=1, limit=4
    $region2: #{tpu_custom_call.1} parent=1 // loop_pre_header
      _
    $region3: #{tpu_custom_call.1} parent=1 // loop_header
      %s26 = sphi 0, %s30
      %p27 = scmp.ge.s32.totalorder %s26, 4
      %s36 = sphi 0, %s38
      %s39 = sphi 0, %s36
      %s40 = sphi 0, %s39
      %s56 = sphi 0, %s40
      %s60 = sphi 0, %s60
      %s62 = sphi 0, %s60
      %s63 = sphi 0, %s62
      %s77 = sphi 0, %s63
      %s81 = sphi 0, %s81
      %s83 = sphi 0, %s81
      %s84 = sphi 0, %s83
      %s98 = sphi 0, %s84
      %s102 = sphi 0, %s102
      %s104 = sphi 0, %s102
      %s105 = sphi 0, %s104
      %s119 = sphi 0, %s105
      %s123 = sphi 0, %s123
      %s125 = sphi 0, %s123
      %s126 = sphi 0, %s125
      %s140 = sphi 0, %s126
      %s144 = sphi 0, %s144
      %s146 = sphi 0, %s144
      %s147 = sphi 0, %s146
      %s161 = sphi 0, %s147
      %s165 = sphi 0, %s165
      %s167 = sphi 0, %s165
      %s168 = sphi 0, %s167
      %s182 = sphi 0, %s168
      %s186 = sphi 0, %s186
      %s188 = sphi 0, %s186
      %s189 = sphi 0, %s188
      %s203 = sphi 0, %s189
      %s207 = sphi 0, %s207
      %s209 = sphi 0, %s207
      %s210 = sphi 0, %s209
      %s224 = sphi 0, %s210
      %s228 = sphi 0, %s228
      %s230 = sphi 0, %s228
      %s231 = sphi 0, %s230
      %s245 = sphi 0, %s231
      %s249 = sphi 0, %s249
      %s251 = sphi 0, %s249
      %s252 = sphi 0, %s251
      %s266 = sphi 0, %s252
      %s270 = sphi 0, %s270
      %s272 = sphi 0, %s270
      %s273 = sphi 0, %s272
      %s287 = sphi 0, %s273
      %s291 = sphi 0, %s291
      %s293 = sphi 0, %s291
      %s294 = sphi 0, %s293
      %s308 = sphi 0, %s294
      %s312 = sphi 0, %s312
      %s314 = sphi 0, %s312
      %s315 = sphi 0, %s314
      %s329 = sphi 0, %s315
      %s333 = sphi 0, %s333
      %s335 = sphi 0, %s333
      %s336 = sphi 0, %s335
      %s350 = sphi 0, %s336
      %s354 = sphi 0, %s354
      %s356 = sphi 0, %s354
      %s357 = sphi 0, %s356
      %s371 = sphi 0, %s357
      %s375 = sphi 0, %s375
      %s377 = sphi 0, %s375
      %s378 = sphi 0, %s377
      %s392 = sphi 0, %s378
      %s398 = sphi 0, %s400
      %s401 = sphi 0, %s398
      %s402 = sphi 0, %s401
      %s418 = sphi 0, %s402
    $region4: #{tpu_custom_call.1} parent=1 // loop_header_branch
      %29 = sbr.rel (%p27) target = $region8
    $region5: #{tpu_custom_call.1} parent=1 // loop_body
      %s31 = ssub.s32 %s26, 1
      %s32 = ssub.s32 %s26, 2
      %s33 = sadd.s32 %s26, 1
      %s34 = ssub.s32 %s26, %s33
      %p35 = scmp.eq.s32.totalorder %s34, 0
      %s37 = sadd.s32 %s36, 1
      %s38 = scalar_select %p35, %s36, %s37
      %p41 = pneg %p35
      %p42 = scmp.eq.s32.totalorder %s26, 1
      %p43 = por %p41, %p42
      %p44 = scmp.ne.s32.totalorder %s36, %s39
      %p45 = scmp.eq.s32.totalorder %s26, 0
      %p46 = por %p44, %p45
      %p47 = scmp.ne.s32.totalorder %s36, %s39
      %p48 = scmp.eq.s32.totalorder %s31, 1
      %p49 = por %p47, %p48
      %p50 = scmp.ne.s32.totalorder %s39, %s40
      %p51 = scmp.eq.s32.totalorder %s31, 0
      %p52 = por %p50, %p51
      %p53 = scmp.ne.s32.totalorder %s39, %s40
      %p54 = scmp.eq.s32.totalorder %s32, 1
      %p55 = por %p53, %p54
      %p57 = scmp.ne.s32.totalorder %s40, %s56
      %p58 = scmp.eq.s32.totalorder %s32, 0
      %p59 = por %p57, %p58
      %s61 = sadd.s32 %s60, 1
      %p64 = scmp.eq.s32.totalorder %s26, 1
      %p65 = scmp.ne.s32.totalorder %s60, %s62
      %p66 = scmp.eq.s32.totalorder %s26, 0
      %p67 = por %p65, %p66
      %p68 = scmp.ne.s32.totalorder %s60, %s62
      %p69 = scmp.eq.s32.totalorder %s31, 1
      %p70 = por %p68, %p69
      %p71 = scmp.ne.s32.totalorder %s62, %s63
      %p72 = scmp.eq.s32.totalorder %s31, 0
      %p73 = por %p71, %p72
      %p74 = scmp.ne.s32.totalorder %s62, %s63
      %p75 = scmp.eq.s32.totalorder %s32, 1
      %p76 = por %p74, %p75
      %p78 = scmp.ne.s32.totalorder %s63, %s77
      %p79 = scmp.eq.s32.totalorder %s32, 0
      %p80 = por %p78, %p79
      %s82 = sadd.s32 %s81, 1
      %p85 = scmp.eq.s32.totalorder %s26, 1
      %p86 = scmp.ne.s32.totalorder %s81, %s83
      %p87 = scmp.eq.s32.totalorder %s26, 0
      %p88 = por %p86, %p87
      %p89 = scmp.ne.s32.totalorder %s81, %s83
      %p90 = scmp.eq.s32.totalorder %s31, 1
      %p91 = por %p89, %p90
      %p92 = scmp.ne.s32.totalorder %s83, %s84
      %p93 = scmp.eq.s32.totalorder %s31, 0
      %p94 = por %p92, %p93
      %p95 = scmp.ne.s32.totalorder %s83, %s84
      %p96 = scmp.eq.s32.totalorder %s32, 1
      %p97 = por %p95, %p96
      %p99 = scmp.ne.s32.totalorder %s84, %s98
      %p100 = scmp.eq.s32.totalorder %s32, 0
      %p101 = por %p99, %p100
      %s103 = sadd.s32 %s102, 1
      %p106 = scmp.eq.s32.totalorder %s26, 1
      %p107 = scmp.ne.s32.totalorder %s102, %s104
      %p108 = scmp.eq.s32.totalorder %s26, 0
      %p109 = por %p107, %p108
      %p110 = scmp.ne.s32.totalorder %s102, %s104
      %p111 = scmp.eq.s32.totalorder %s31, 1
      %p112 = por %p110, %p111
      %p113 = scmp.ne.s32.totalorder %s104, %s105
      %p114 = scmp.eq.s32.totalorder %s31, 0
      %p115 = por %p113, %p114
      %p116 = scmp.ne.s32.totalorder %s104, %s105
      %p117 = scmp.eq.s32.totalorder %s32, 1
      %p118 = por %p116, %p117
      %p120 = scmp.ne.s32.totalorder %s105, %s119
      %p121 = scmp.eq.s32.totalorder %s32, 0
      %p122 = por %p120, %p121
      %s124 = sadd.s32 %s123, 1
      %p127 = scmp.eq.s32.totalorder %s26, 1
      %p128 = scmp.ne.s32.totalorder %s123, %s125
      %p129 = scmp.eq.s32.totalorder %s26, 0
      %p130 = por %p128, %p129
      %p131 = scmp.ne.s32.totalorder %s123, %s125
      %p132 = scmp.eq.s32.totalorder %s31, 1
      %p133 = por %p131, %p132
      %p134 = scmp.ne.s32.totalorder %s125, %s126
      %p135 = scmp.eq.s32.totalorder %s31, 0
      %p136 = por %p134, %p135
      %p137 = scmp.ne.s32.totalorder %s125, %s126
      %p138 = scmp.eq.s32.totalorder %s32, 1
      %p139 = por %p137, %p138
      %p141 = scmp.ne.s32.totalorder %s126, %s140
      %p142 = scmp.eq.s32.totalorder %s32, 0
      %p143 = por %p141, %p142
      %s145 = sadd.s32 %s144, 1
      %p148 = scmp.eq.s32.totalorder %s26, 1
      %p149 = scmp.ne.s32.totalorder %s144, %s146
      %p150 = scmp.eq.s32.totalorder %s26, 0
      %p151 = por %p149, %p150
      %p152 = scmp.ne.s32.totalorder %s144, %s146
      %p153 = scmp.eq.s32.totalorder %s31, 1
      %p154 = por %p152, %p153
      %p155 = scmp.ne.s32.totalorder %s146, %s147
      %p156 = scmp.eq.s32.totalorder %s31, 0
      %p157 = por %p155, %p156
      %p158 = scmp.ne.s32.totalorder %s146, %s147
      %p159 = scmp.eq.s32.totalorder %s32, 1
      %p160 = por %p158, %p159
      %p162 = scmp.ne.s32.totalorder %s147, %s161
      %p163 = scmp.eq.s32.totalorder %s32, 0
      %p164 = por %p162, %p163
      %s166 = sadd.s32 %s165, 1
      %p169 = scmp.eq.s32.totalorder %s26, 1
      %p170 = scmp.ne.s32.totalorder %s165, %s167
      %p171 = scmp.eq.s32.totalorder %s26, 0
      %p172 = por %p170, %p171
      %p173 = scmp.ne.s32.totalorder %s165, %s167
      %p174 = scmp.eq.s32.totalorder %s31, 1
      %p175 = por %p173, %p174
      %p176 = scmp.ne.s32.totalorder %s167, %s168
      %p177 = scmp.eq.s32.totalorder %s31, 0
      %p178 = por %p176, %p177
      %p179 = scmp.ne.s32.totalorder %s167, %s168
      %p180 = scmp.eq.s32.totalorder %s32, 1
      %p181 = por %p179, %p180
      %p183 = scmp.ne.s32.totalorder %s168, %s182
      %p184 = scmp.eq.s32.totalorder %s32, 0
      %p185 = por %p183, %p184
      %s187 = sadd.s32 %s186, 1
      %p190 = scmp.eq.s32.totalorder %s26, 1
      %p191 = scmp.ne.s32.totalorder %s186, %s188
      %p192 = scmp.eq.s32.totalorder %s26, 0
      %p193 = por %p191, %p192
      %p194 = scmp.ne.s32.totalorder %s186, %s188
      %p195 = scmp.eq.s32.totalorder %s31, 1
      %p196 = por %p194, %p195
      %p197 = scmp.ne.s32.totalorder %s188, %s189
      %p198 = scmp.eq.s32.totalorder %s31, 0
      %p199 = por %p197, %p198
      %p200 = scmp.ne.s32.totalorder %s188, %s189
      %p201 = scmp.eq.s32.totalorder %s32, 1
      %p202 = por %p200, %p201
      %p204 = scmp.ne.s32.totalorder %s189, %s203
      %p205 = scmp.eq.s32.totalorder %s32, 0
      %p206 = por %p204, %p205
      %s208 = sadd.s32 %s207, 1
      %p211 = scmp.eq.s32.totalorder %s26, 1
      %p212 = scmp.ne.s32.totalorder %s207, %s209
      %p213 = scmp.eq.s32.totalorder %s26, 0
      %p214 = por %p212, %p213
      %p215 = scmp.ne.s32.totalorder %s207, %s209
      %p216 = scmp.eq.s32.totalorder %s31, 1
      %p217 = por %p215, %p216
      %p218 = scmp.ne.s32.totalorder %s209, %s210
      %p219 = scmp.eq.s32.totalorder %s31, 0
      %p220 = por %p218, %p219
      %p221 = scmp.ne.s32.totalorder %s209, %s210
      %p222 = scmp.eq.s32.totalorder %s32, 1
      %p223 = por %p221, %p222
      %p225 = scmp.ne.s32.totalorder %s210, %s224
      %p226 = scmp.eq.s32.totalorder %s32, 0
      %p227 = por %p225, %p226
      %s229 = sadd.s32 %s228, 1
      %p232 = scmp.eq.s32.totalorder %s26, 1
      %p233 = scmp.ne.s32.totalorder %s228, %s230
      %p234 = scmp.eq.s32.totalorder %s26, 0
      %p235 = por %p233, %p234
      %p236 = scmp.ne.s32.totalorder %s228, %s230
      %p237 = scmp.eq.s32.totalorder %s31, 1
      %p238 = por %p236, %p237
      %p239 = scmp.ne.s32.totalorder %s230, %s231
      %p240 = scmp.eq.s32.totalorder %s31, 0
      %p241 = por %p239, %p240
      %p242 = scmp.ne.s32.totalorder %s230, %s231
      %p243 = scmp.eq.s32.totalorder %s32, 1
      %p244 = por %p242, %p243
      %p246 = scmp.ne.s32.totalorder %s231, %s245
      %p247 = scmp.eq.s32.totalorder %s32, 0
      %p248 = por %p246, %p247
      %s250 = sadd.s32 %s249, 1
      %p253 = scmp.eq.s32.totalorder %s26, 1
      %p254 = scmp.ne.s32.totalorder %s249, %s251
      %p255 = scmp.eq.s32.totalorder %s26, 0
      %p256 = por %p254, %p255
      %p257 = scmp.ne.s32.totalorder %s249, %s251
      %p258 = scmp.eq.s32.totalorder %s31, 1
      %p259 = por %p257, %p258
      %p260 = scmp.ne.s32.totalorder %s251, %s252
      %p261 = scmp.eq.s32.totalorder %s31, 0
      %p262 = por %p260, %p261
      %p263 = scmp.ne.s32.totalorder %s251, %s252
      %p264 = scmp.eq.s32.totalorder %s32, 1
      %p265 = por %p263, %p264
      %p267 = scmp.ne.s32.totalorder %s252, %s266
      %p268 = scmp.eq.s32.totalorder %s32, 0
      %p269 = por %p267, %p268
      %s271 = sadd.s32 %s270, 1
      %p274 = scmp.eq.s32.totalorder %s26, 1
      %p275 = scmp.ne.s32.totalorder %s270, %s272
      %p276 = scmp.eq.s32.totalorder %s26, 0
      %p277 = por %p275, %p276
      %p278 = scmp.ne.s32.totalorder %s270, %s272
      %p279 = scmp.eq.s32.totalorder %s31, 1
      %p280 = por %p278, %p279
      %p281 = scmp.ne.s32.totalorder %s272, %s273
      %p282 = scmp.eq.s32.totalorder %s31, 0
      %p283 = por %p281, %p282
      %p284 = scmp.ne.s32.totalorder %s272, %s273
      %p285 = scmp.eq.s32.totalorder %s32, 1
      %p286 = por %p284, %p285
      %p288 = scmp.ne.s32.totalorder %s273, %s287
      %p289 = scmp.eq.s32.totalorder %s32, 0
      %p290 = por %p288, %p289
      %s292 = sadd.s32 %s291, 1
      %p295 = scmp.eq.s32.totalorder %s26, 1
      %p296 = scmp.ne.s32.totalorder %s291, %s293
      %p297 = scmp.eq.s32.totalorder %s26, 0
      %p298 = por %p296, %p297
      %p299 = scmp.ne.s32.totalorder %s291, %s293
      %p300 = scmp.eq.s32.totalorder %s31, 1
      %p301 = por %p299, %p300
      %p302 = scmp.ne.s32.totalorder %s293, %s294
      %p303 = scmp.eq.s32.totalorder %s31, 0
      %p304 = por %p302, %p303
      %p305 = scmp.ne.s32.totalorder %s293, %s294
      %p306 = scmp.eq.s32.totalorder %s32, 1
      %p307 = por %p305, %p306
      %p309 = scmp.ne.s32.totalorder %s294, %s308
      %p310 = scmp.eq.s32.totalorder %s32, 0
      %p311 = por %p309, %p310
      %s313 = sadd.s32 %s312, 1
      %p316 = scmp.eq.s32.totalorder %s26, 1
      %p317 = scmp.ne.s32.totalorder %s312, %s314
      %p318 = scmp.eq.s32.totalorder %s26, 0
      %p319 = por %p317, %p318
      %p320 = scmp.ne.s32.totalorder %s312, %s314
      %p321 = scmp.eq.s32.totalorder %s31, 1
      %p322 = por %p320, %p321
      %p323 = scmp.ne.s32.totalorder %s314, %s315
      %p324 = scmp.eq.s32.totalorder %s31, 0
      %p325 = por %p323, %p324
      %p326 = scmp.ne.s32.totalorder %s314, %s315
      %p327 = scmp.eq.s32.totalorder %s32, 1
      %p328 = por %p326, %p327
      %p330 = scmp.ne.s32.totalorder %s315, %s329
      %p331 = scmp.eq.s32.totalorder %s32, 0
      %p332 = por %p330, %p331
      %s334 = sadd.s32 %s333, 1
      %p337 = scmp.eq.s32.totalorder %s26, 1
      %p338 = scmp.ne.s32.totalorder %s333, %s335
      %p339 = scmp.eq.s32.totalorder %s26, 0
      %p340 = por %p338, %p339
      %p341 = scmp.ne.s32.totalorder %s333, %s335
      %p342 = scmp.eq.s32.totalorder %s31, 1
      %p343 = por %p341, %p342
      %p344 = scmp.ne.s32.totalorder %s335, %s336
      %p345 = scmp.eq.s32.totalorder %s31, 0
      %p346 = por %p344, %p345
      %p347 = scmp.ne.s32.totalorder %s335, %s336
      %p348 = scmp.eq.s32.totalorder %s32, 1
      %p349 = por %p347, %p348
      %p351 = scmp.ne.s32.totalorder %s336, %s350
      %p352 = scmp.eq.s32.totalorder %s32, 0
      %p353 = por %p351, %p352
      %s355 = sadd.s32 %s354, 1
      %p358 = scmp.eq.s32.totalorder %s26, 1
      %p359 = scmp.ne.s32.totalorder %s354, %s356
      %p360 = scmp.eq.s32.totalorder %s26, 0
      %p361 = por %p359, %p360
      %p362 = scmp.ne.s32.totalorder %s354, %s356
      %p363 = scmp.eq.s32.totalorder %s31, 1
      %p364 = por %p362, %p363
      %p365 = scmp.ne.s32.totalorder %s356, %s357
      %p366 = scmp.eq.s32.totalorder %s31, 0
      %p367 = por %p365, %p366
      %p368 = scmp.ne.s32.totalorder %s356, %s357
      %p369 = scmp.eq.s32.totalorder %s32, 1
      %p370 = por %p368, %p369
      %p372 = scmp.ne.s32.totalorder %s357, %s371
      %p373 = scmp.eq.s32.totalorder %s32, 0
      %p374 = por %p372, %p373
      %s376 = sadd.s32 %s375, 1
      %p379 = scmp.eq.s32.totalorder %s26, 1
      %p380 = scmp.ne.s32.totalorder %s375, %s377
      %p381 = scmp.eq.s32.totalorder %s26, 0
      %p382 = por %p380, %p381
      %p383 = scmp.ne.s32.totalorder %s375, %s377
      %p384 = scmp.eq.s32.totalorder %s31, 1
      %p385 = por %p383, %p384
      %p386 = scmp.ne.s32.totalorder %s377, %s378
      %p387 = scmp.eq.s32.totalorder %s31, 0
      %p388 = por %p386, %p387
      %p389 = scmp.ne.s32.totalorder %s377, %s378
      %p390 = scmp.eq.s32.totalorder %s32, 1
      %p391 = por %p389, %p390
      %p393 = scmp.ne.s32.totalorder %s378, %s392
      %p394 = scmp.eq.s32.totalorder %s32, 0
      %p395 = por %p393, %p394
      %s396 = ssub.s32 %s26, %s33
      %p397 = scmp.eq.s32.totalorder %s396, 0
      %s399 = sadd.s32 %s398, 1
      %s400 = scalar_select %p397, %s398, %s399
      %p403 = pneg %p397
      %p404 = scmp.eq.s32.totalorder %s26, 1
      %p405 = por %p403, %p404
      %p406 = scmp.ne.s32.totalorder %s398, %s401
      %p407 = scmp.eq.s32.totalorder %s26, 0
      %p408 = por %p406, %p407
      %p409 = scmp.ne.s32.totalorder %s398, %s401
      %p410 = scmp.eq.s32.totalorder %s31, 1
      %p411 = por %p409, %p410
      %p412 = scmp.ne.s32.totalorder %s401, %s402
      %p413 = scmp.eq.s32.totalorder %s31, 0
      %p414 = por %p412, %p413
      %p415 = scmp.ne.s32.totalorder %s401, %s402
      %p416 = scmp.eq.s32.totalorder %s32, 1
      %p417 = por %p415, %p416
      %p419 = scmp.ne.s32.totalorder %s402, %s418
      %p420 = scmp.eq.s32.totalorder %s32, 0
      %p421 = por %p419, %p420
      %p422 = scmp.le.s32.totalorder 1, %s26
      %p423 = scmp.lt.s32.totalorder %s26, 3
      %p424 = pnand %p422, %p423
      %p425 = pneg %p424
      // Predicated region
      $region9: #{tpu_custom_call.1} parent=5 // pred_check
        _
      $region10: #{tpu_custom_call.1} parent=5 // pred_check_branch
        %427 = sbr.rel (%p424) target = $region12
      $region11: #{tpu_custom_call.1} parent=5 // pred_region
        %s428 = ssub.s32 %s26, 1
        // Predicated region
        $region13: #{tpu_custom_call.1} parent=11 // pred_check
          %p429 = pneg %p73
        $region14: #{tpu_custom_call.1} parent=11 // pred_check_branch
          %431 = sbr.rel (%p429) target = $region16
        $region15: #{tpu_custom_call.1} parent=11 // pred_region
          _
        $region16: #{tpu_custom_call.1} parent=11 // pred_fallthru
          _
        // Predicated region
        $region17: #{tpu_custom_call.1} parent=11 // pred_check
          %p432 = pneg %p94
        $region18: #{tpu_custom_call.1} parent=11 // pred_check_branch
          %434 = sbr.rel (%p432) target = $region20
        $region19: #{tpu_custom_call.1} parent=11 // pred_region
          _
        $region20: #{tpu_custom_call.1} parent=11 // pred_fallthru
          _
        // Predicated region
        $region21: #{tpu_custom_call.1} parent=11 // pred_check
          %p435 = pneg %p115
        $region22: #{tpu_custom_call.1} parent=11 // pred_check_branch
          %437 = sbr.rel (%p435) target = $region24
        $region23: #{tpu_custom_call.1} parent=11 // pred_region
          _
        $region24: #{tpu_custom_call.1} parent=11 // pred_fallthru
          _
        // Predicated region
        $region25: #{tpu_custom_call.1} parent=11 // pred_check
          %p438 = pneg %p136
        $region26: #{tpu_custom_call.1} parent=11 // pred_check_branch
          %440 = sbr.rel (%p438) target = $region28
        $region27: #{tpu_custom_call.1} parent=11 // pred_region
          _
        $region28: #{tpu_custom_call.1} parent=11 // pred_fallthru
          _
        // Predicated region
        $region29: #{tpu_custom_call.1} parent=11 // pred_check
          %p441 = pneg %p157
        $region30: #{tpu_custom_call.1} parent=11 // pred_check_branch
          %443 = sbr.rel (%p441) target = $region32
        $region31: #{tpu_custom_call.1} parent=11 // pred_region
          _
        $region32: #{tpu_custom_call.1} parent=11 // pred_fallthru
          _
        // Predicated region
        $region33: #{tpu_custom_call.1} parent=11 // pred_check
          %p444 = pneg %p178
        $region34: #{tpu_custom_call.1} parent=11 // pred_check_branch
          %446 = sbr.rel (%p444) target = $region36
        $region35: #{tpu_custom_call.1} parent=11 // pred_region
          _
        $region36: #{tpu_custom_call.1} parent=11 // pred_fallthru
          _
        // Predicated region
        $region37: #{tpu_custom_call.1} parent=11 // pred_check
          %p447 = pneg %p199
        $region38: #{tpu_custom_call.1} parent=11 // pred_check_branch
          %449 = sbr.rel (%p447) target = $region40
        $region39: #{tpu_custom_call.1} parent=11 // pred_region
          _
        $region40: #{tpu_custom_call.1} parent=11 // pred_fallthru
          _
        // Predicated region
        $region41: #{tpu_custom_call.1} parent=11 // pred_check
          %p450 = pneg %p220
        $region42: #{tpu_custom_call.1} parent=11 // pred_check_branch
          %452 = sbr.rel (%p450) target = $region44
        $region43: #{tpu_custom_call.1} parent=11 // pred_region
          _
        $region44: #{tpu_custom_call.1} parent=11 // pred_fallthru
          _
        // Predicated region
        $region45: #{tpu_custom_call.1} parent=11 // pred_check
          %p453 = pneg %p241
        $region46: #{tpu_custom_call.1} parent=11 // pred_check_branch
          %455 = sbr.rel (%p453) target = $region48
        $region47: #{tpu_custom_call.1} parent=11 // pred_region
          _
        $region48: #{tpu_custom_call.1} parent=11 // pred_fallthru
          _
        // Predicated region
        $region49: #{tpu_custom_call.1} parent=11 // pred_check
          %p456 = pneg %p262
        $region50: #{tpu_custom_call.1} parent=11 // pred_check_branch
          %458 = sbr.rel (%p456) target = $region52
        $region51: #{tpu_custom_call.1} parent=11 // pred_region
          _
        $region52: #{tpu_custom_call.1} parent=11 // pred_fallthru
          _
        // Predicated region
        $region53: #{tpu_custom_call.1} parent=11 // pred_check
          %p459 = pneg %p283
        $region54: #{tpu_custom_call.1} parent=11 // pred_check_branch
          %461 = sbr.rel (%p459) target = $region56
        $region55: #{tpu_custom_call.1} parent=11 // pred_region
          _
        $region56: #{tpu_custom_call.1} parent=11 // pred_fallthru
          _
        // Predicated region
        $region57: #{tpu_custom_call.1} parent=11 // pred_check
          %p462 = pneg %p304
        $region58: #{tpu_custom_call.1} parent=11 // pred_check_branch
          %464 = sbr.rel (%p462) target = $region60
        $region59: #{tpu_custom_call.1} parent=11 // pred_region
          _
        $region60: #{tpu_custom_call.1} parent=11 // pred_fallthru
          _
        // Predicated region
        $region61: #{tpu_custom_call.1} parent=11 // pred_check
          %p465 = pneg %p325
        $region62: #{tpu_custom_call.1} parent=11 // pred_check_branch
          %467 = sbr.rel (%p465) target = $region64
        $region63: #{tpu_custom_call.1} parent=11 // pred_region
          _
        $region64: #{tpu_custom_call.1} parent=11 // pred_fallthru
          _
        // Predicated region
        $region65: #{tpu_custom_call.1} parent=11 // pred_check
          %p468 = pneg %p346
        $region66: #{tpu_custom_call.1} parent=11 // pred_check_branch
          %470 = sbr.rel (%p468) target = $region68
        $region67: #{tpu_custom_call.1} parent=11 // pred_region
          _
        $region68: #{tpu_custom_call.1} parent=11 // pred_fallthru
          _
        // Predicated region
        $region69: #{tpu_custom_call.1} parent=11 // pred_check
          %p471 = pneg %p367
        $region70: #{tpu_custom_call.1} parent=11 // pred_check_branch
          %473 = sbr.rel (%p471) target = $region72
        $region71: #{tpu_custom_call.1} parent=11 // pred_region
          _
        $region72: #{tpu_custom_call.1} parent=11 // pred_fallthru
          _
        // Predicated region
        $region73: #{tpu_custom_call.1} parent=11 // pred_check
          %p474 = pneg %p388
        $region74: #{tpu_custom_call.1} parent=11 // pred_check_branch
          %476 = sbr.rel (%p474) target = $region76
        $region75: #{tpu_custom_call.1} parent=11 // pred_region
          _
        $region76: #{tpu_custom_call.1} parent=11 // pred_fallthru
          _
      $region12: #{tpu_custom_call.1} parent=5 // pred_fallthru
        _
      %p477 = scmp.lt.s32.totalorder %s26, 2
      // Predicated region
      $region77: #{tpu_custom_call.1} parent=5 // pred_check
        %p478 = pneg %p477
      $region78: #{tpu_custom_call.1} parent=5 // pred_check_branch
        %480 = sbr.rel (%p478) target = $region80
      $region79: #{tpu_custom_call.1} parent=5 // pred_region
        // Predicated region
        $region81: #{tpu_custom_call.1} parent=79 // pred_check
          %p481 = pneg %p46
        $region82: #{tpu_custom_call.1} parent=79 // pred_check_branch
          %483 = sbr.rel (%p481) target = $region84
        $region83: #{tpu_custom_call.1} parent=79 // pred_region
          %p484 = scmp.lt.s32.totalorder %s26, 1
          %s485 = scalar_select %p484, %s26, 1
          %s486 = smul.addr %s485, 8
          %s487 = scalar_lea.vmem %s0, %s486
        $region84: #{tpu_custom_call.1} parent=79 // pred_fallthru
          _
      $region80: #{tpu_custom_call.1} parent=5 // pred_fallthru
        _
      %p488 = scmp.le.s32.totalorder 1, %s26
      %p489 = scmp.lt.s32.totalorder %s26, 3
      %p490 = pnand %p488, %p489
      %p491 = pneg %p490
      // Predicated region
      $region85: #{tpu_custom_call.1} parent=5 // pred_check
        _
      $region86: #{tpu_custom_call.1} parent=5 // pred_check_branch
        %493 = sbr.rel (%p490) target = $region88
      $region87: #{tpu_custom_call.1} parent=5 // pred_region
        %s494 = ssub.s32 %s26, 1
        %p495 = scmp.lt.s32.totalorder %s31, 1
        %s496 = scalar_select %p495, %s31, 1
        %s497 = smul.addr %s496, 8
        %s498 = scalar_lea.vmem %s0, %s497
        %p499 = pneg %p52
        %p500 = pneg %p49
        %p501 = pneg %p73
        %p502 = pneg %p70
        %p503 = pneg %p94
        %p504 = pneg %p91
        %p505 = pneg %p115
        %p506 = pneg %p112
        %p507 = pneg %p136
        %p508 = pneg %p133
        %p509 = pneg %p157
        %p510 = pneg %p154
        %p511 = pneg %p178
        %p512 = pneg %p175
        %p513 = pneg %p199
        %p514 = pneg %p196
        %p515 = pneg %p220
        %p516 = pneg %p217
        %p517 = pneg %p241
        %p518 = pneg %p238
        %p519 = pneg %p262
        %p520 = pneg %p259
        %p521 = pneg %p283
        %p522 = pneg %p280
        %p523 = pneg %p304
        %p524 = pneg %p301
        %p525 = pneg %p325
        %p526 = pneg %p322
        %p527 = pneg %p346
        %p528 = pneg %p343
        %p529 = pneg %p367
        %p530 = pneg %p364
        %p531 = pneg %p388
        %p532 = pneg %p385
        %p533 = pneg %p414
        %p534 = pneg %p411
        %s535 = sand.u32 %s401, 1
        %s536 = scalar_lea.sflag [#allocation3], %s535
        %s537 = sand.u32 %s401, 1
        %s538 = smul.addr %s537, 8
        %s539 = scalar_lea.vmem [#allocation2], %s538
        %p540 = scmp.lt.s32.totalorder %s31, 1
        %s541 = scalar_select %p540, %s31, 1
        %s542 = smul.addr %s541, 8
        %s543 = scalar_lea.vmem %s0, %s542
        %v545 = vld [vmem:[%s543] sm:$0xff]
        %v546 = vld [vmem:[%s1] sm:$0x1]
        %v547 = vld [vmem:[%s2] sm:$0x1]
        %548 = vadd.xlane.f32.xlu0 %v545
        %v549 = vpop.xlane.xlu0 %548
        %v550 = vrcp.pop 128.0
        %v551 = vmul.f32 128.0, %v550
        %v552 = vsub.f32 1.0, %v551
        %v553 = vmul.f32 %v550, %v552
        %v554 = vadd.f32 %v550, %v553
        %vm555 = vweird.f32 %v550
        %v556 = vsel %vm555, %v550, %v554
        %v557 = vmul.f32 %v549, %v556
        %v558 = vsub.f32 %v545, %v557
        %v559 = vmul.f32 %v558, %v558
        %560 = vadd.xlane.f32.xlu0 %v559
        %v561 = vpop.xlane.xlu0 %560
        %v562 = vmul.f32 %v561, %v556
        %v563 = vadd.f32 %v562, 1e-05
        %v564 = vrsqrt.pop %v563
        %v565 = vmul.f32 %v564, %v563
        %v566 = vmul.f32 %v565, %v564
        %v567 = vmul.f32 0.5, %v566
        %v568 = vsub.f32 1.5, %v567
        %v569 = vmul.f32 %v564, %v568
        %vm570 = vweird.f32 %v563
        %vm571 = vweird.f32 %v564
        %vm572 = vmor %vm570, %vm571
        %v573 = vsel %vm572, %v564, %v569
        %v574 = vmul.f32 %v558, %v573
        %v576 = vperm.slane %v546, 0
        %v578 = vmul.f32 %v574, %v576
        %v580 = vperm.slane %v547, 0
        %v582 = vadd.f32 %v578, %v580
        %v583 = vpack.c.bf16 %v582, %v582
        %v584 = vld [vmem:[%s3] sm:$0xf]
        %v585 = vld [vmem:[%s3 + $0x4] sm:$0xf]
        %v586 = vld [vmem:[%s3 + $0x8] sm:$0xf]
        %v587 = vld [vmem:[%s3 + $0xc] sm:$0xf]
        %v588 = vld [vmem:[%s3 + $0x10] sm:$0xf]
        %v589 = vld [vmem:[%s3 + $0x14] sm:$0xf]
        %v590 = vld [vmem:[%s3 + $0x18] sm:$0xf]
        %v591 = vld [vmem:[%s3 + $0x1c] sm:$0xf]
        %v592 = vld [vmem:[%s3 + $0x20] sm:$0xf]
        %v593 = vld [vmem:[%s3 + $0x24] sm:$0xf]
        %v594 = vld [vmem:[%s3 + $0x28] sm:$0xf]
        %v595 = vld [vmem:[%s3 + $0x2c] sm:$0xf]
        %v596 = vld [vmem:[%s3 + $0x30] sm:$0xf]
        %v597 = vld [vmem:[%s3 + $0x34] sm:$0xf]
        %v598 = vld [vmem:[%s3 + $0x38] sm:$0xf]
        %v599 = vld [vmem:[%s3 + $0x3c] sm:$0xf]
        %v600 = vld [vmem:[%s3 + $0x40] sm:$0xf]
        %v601 = vld [vmem:[%s3 + $0x44] sm:$0xf]
        %v602 = vld [vmem:[%s3 + $0x48] sm:$0xf]
        %v603 = vld [vmem:[%s3 + $0x4c] sm:$0xf]
        %v604 = vld [vmem:[%s3 + $0x50] sm:$0xf]
        %v605 = vld [vmem:[%s3 + $0x54] sm:$0xf]
        %v606 = vld [vmem:[%s3 + $0x58] sm:$0xf]
        %v607 = vld [vmem:[%s3 + $0x5c] sm:$0xf]
        %v608 = vld [vmem:[%s3 + $0x60] sm:$0xf]
        %v609 = vld [vmem:[%s3 + $0x64] sm:$0xf]
        %v610 = vld [vmem:[%s3 + $0x68] sm:$0xf]
        %v611 = vld [vmem:[%s3 + $0x6c] sm:$0xf]
        %v612 = vld [vmem:[%s3 + $0x70] sm:$0xf]
        %v613 = vld [vmem:[%s3 + $0x74] sm:$0xf]
        %v614 = vld [vmem:[%s3 + $0x78] sm:$0xf]
        %v615 = vld [vmem:[%s3 + $0x7c] sm:$0xf]
        %v616 = vld [vmem:[%s3 + $0x80] sm:$0xf]
        %v617 = vld [vmem:[%s3 + $0x84] sm:$0xf]
        %v618 = vld [vmem:[%s3 + $0x88] sm:$0xf]
        %v619 = vld [vmem:[%s3 + $0x8c] sm:$0xf]
        %v620 = vld [vmem:[%s3 + $0x90] sm:$0xf]
        %v621 = vld [vmem:[%s3 + $0x94] sm:$0xf]
        %v622 = vld [vmem:[%s3 + $0x98] sm:$0xf]
        %v623 = vld [vmem:[%s3 + $0x9c] sm:$0xf]
        %v624 = vld [vmem:[%s3 + $0xa0] sm:$0xf]
        %v625 = vld [vmem:[%s3 + $0xa4] sm:$0xf]
        %v626 = vld [vmem:[%s3 + $0xa8] sm:$0xf]
        %v627 = vld [vmem:[%s3 + $0xac] sm:$0xf]
        %v628 = vld [vmem:[%s3 + $0xb0] sm:$0xf]
        %v629 = vld [vmem:[%s3 + $0xb4] sm:$0xf]
        %v630 = vld [vmem:[%s3 + $0xb8] sm:$0xf]
        %v631 = vld [vmem:[%s3 + $0xbc] sm:$0xf]
        %v632 = vld [vmem:[%s3 + $0xc0] sm:$0xf]
        %v633 = vld [vmem:[%s3 + $0xc4] sm:$0xf]
        %v634 = vld [vmem:[%s3 + $0xc8] sm:$0xf]
        %v635 = vld [vmem:[%s3 + $0xcc] sm:$0xf]
        %v636 = vld [vmem:[%s3 + $0xd0] sm:$0xf]
        %v637 = vld [vmem:[%s3 + $0xd4] sm:$0xf]
        %v638 = vld [vmem:[%s3 + $0xd8] sm:$0xf]
        %v639 = vld [vmem:[%s3 + $0xdc] sm:$0xf]
        %v640 = vld [vmem:[%s3 + $0xe0] sm:$0xf]
        %v641 = vld [vmem:[%s3 + $0xe4] sm:$0xf]
        %v642 = vld [vmem:[%s3 + $0xe8] sm:$0xf]
        %v643 = vld [vmem:[%s3 + $0xec] sm:$0xf]
        %v644 = vld [vmem:[%s3 + $0xf0] sm:$0xf]
        %v645 = vld [vmem:[%s3 + $0xf4] sm:$0xf]
        %v646 = vld [vmem:[%s3 + $0xf8] sm:$0xf]
        %v647 = vld [vmem:[%s3 + $0xfc] sm:$0xf]
        %v648 = vld [vmem:[%s4] sm:$0x1]
        %v649 = vld [vmem:[%s4 + $0x1] sm:$0x1]
        %v650 = vld [vmem:[%s4 + $0x2] sm:$0x1]
        %v651 = vld [vmem:[%s4 + $0x3] sm:$0x1]
        %v656 = vperm.slane %v648, 0
        %v657 = vperm.slane %v649, 0
        %v658 = vperm.slane %v650, 0
        %v659 = vperm.slane %v651, 0
        %v680 = vunpack.c.l.b16 %v584
        %v681 = vunpack.c.l.b16 %v585
        %v682 = vunpack.c.l.b16 %v586
        %v683 = vunpack.c.l.b16 %v587
        %v684 = vunpack.c.l.b16 %v588
        %v685 = vunpack.c.l.b16 %v589
        %v686 = vunpack.c.l.b16 %v590
        %v687 = vunpack.c.l.b16 %v591
        %v688 = vunpack.c.l.b16 %v592
        %v689 = vunpack.c.l.b16 %v593
        %v690 = vunpack.c.l.b16 %v594
        %v691 = vunpack.c.l.b16 %v595
        %v692 = vunpack.c.l.b16 %v596
        %v693 = vunpack.c.l.b16 %v597
        %v694 = vunpack.c.l.b16 %v598
        %v695 = vunpack.c.l.b16 %v599
        %v696 = vpack.c.b16 %v681, %v680
        %v697 = vpack.c.b16 %v683, %v682
        %v698 = vpack.c.b16 %v685, %v684
        %v699 = vpack.c.b16 %v687, %v686
        %v700 = vpack.c.b16 %v689, %v688
        %v701 = vpack.c.b16 %v691, %v690
        %v702 = vpack.c.b16 %v693, %v692
        %v703 = vpack.c.b16 %v695, %v694
        %712 = vmatpush.bf16.msra.mxu0 %v703
        %713 = vmatpush.bf16.msra.mxu0 %v702
        %714 = vmatpush.bf16.msra.mxu0 %v701
        %715 = vmatpush.bf16.msra.mxu0 %v700
        %716 = vmatpush.bf16.msra.mxu0 %v699
        %717 = vmatpush.bf16.msra.mxu0 %v698
        %718 = vmatpush.bf16.msra.mxu0 %v697
        %719 = vmatpush.bf16.msra.mxu0 %v696
        %720 = vmatmul.bf16.gmra.mxu0 %v583
        %v721 = vpop.f32.mrf.mxu0
        %v722 = vadd.f32 %v656, %v721
        %v723 = vpop.f32.mrf.mxu0
        %724 = vdwg.mxu0
        %v741 = vunpack.c.l.b16 %v600
        %v742 = vunpack.c.l.b16 %v601
        %v743 = vunpack.c.l.b16 %v602
        %v744 = vunpack.c.l.b16 %v603
        %v745 = vunpack.c.l.b16 %v604
        %v746 = vunpack.c.l.b16 %v605
        %v747 = vunpack.c.l.b16 %v606
        %v748 = vunpack.c.l.b16 %v607
        %v749 = vunpack.c.l.b16 %v608
        %v750 = vunpack.c.l.b16 %v609
        %v751 = vunpack.c.l.b16 %v610
        %v752 = vunpack.c.l.b16 %v611
        %v753 = vunpack.c.l.b16 %v612
        %v754 = vunpack.c.l.b16 %v613
        %v755 = vunpack.c.l.b16 %v614
        %v756 = vunpack.c.l.b16 %v615
        %v757 = vpack.c.b16 %v742, %v741
        %v758 = vpack.c.b16 %v744, %v743
        %v759 = vpack.c.b16 %v746, %v745
        %v760 = vpack.c.b16 %v748, %v747
        %v761 = vpack.c.b16 %v750, %v749
        %v762 = vpack.c.b16 %v752, %v751
        %v763 = vpack.c.b16 %v754, %v753
        %v764 = vpack.c.b16 %v756, %v755
        %773 = vmatpush.bf16.msra.mxu0 %v764
        %774 = vmatpush.bf16.msra.mxu0 %v763
        %775 = vmatpush.bf16.msra.mxu0 %v762
        %776 = vmatpush.bf16.msra.mxu0 %v761
        %777 = vmatpush.bf16.msra.mxu0 %v760
        %778 = vmatpush.bf16.msra.mxu0 %v759
        %779 = vmatpush.bf16.msra.mxu0 %v758
        %780 = vmatpush.bf16.msra.mxu0 %v757
        %781 = vmatmul.bf16.gmra.mxu0 %v583
        %v782 = vpop.f32.mrf.mxu0
        %v783 = vadd.f32 %v657, %v782
        %v784 = vpop.f32.mrf.mxu0
        %785 = vdwg.mxu0
        %v802 = vunpack.c.l.b16 %v616
        %v803 = vunpack.c.l.b16 %v617
        %v804 = vunpack.c.l.b16 %v618
        %v805 = vunpack.c.l.b16 %v619
        %v806 = vunpack.c.l.b16 %v620
        %v807 = vunpack.c.l.b16 %v621
        %v808 = vunpack.c.l.b16 %v622
        %v809 = vunpack.c.l.b16 %v623
        %v810 = vunpack.c.l.b16 %v624
        %v811 = vunpack.c.l.b16 %v625
        %v812 = vunpack.c.l.b16 %v626
        %v813 = vunpack.c.l.b16 %v627
        %v814 = vunpack.c.l.b16 %v628
        %v815 = vunpack.c.l.b16 %v629
        %v816 = vunpack.c.l.b16 %v630
        %v817 = vunpack.c.l.b16 %v631
        %v818 = vpack.c.b16 %v803, %v802
        %v819 = vpack.c.b16 %v805, %v804
        %v820 = vpack.c.b16 %v807, %v806
        %v821 = vpack.c.b16 %v809, %v808
        %v822 = vpack.c.b16 %v811, %v810
        %v823 = vpack.c.b16 %v813, %v812
        %v824 = vpack.c.b16 %v815, %v814
        %v825 = vpack.c.b16 %v817, %v816
        %834 = vmatpush.bf16.msra.mxu0 %v825
        %835 = vmatpush.bf16.msra.mxu0 %v824
        %836 = vmatpush.bf16.msra.mxu0 %v823
        %837 = vmatpush.bf16.msra.mxu0 %v822
        %838 = vmatpush.bf16.msra.mxu0 %v821
        %839 = vmatpush.bf16.msra.mxu0 %v820
        %840 = vmatpush.bf16.msra.mxu0 %v819
        %841 = vmatpush.bf16.msra.mxu0 %v818
        %842 = vmatmul.bf16.gmra.mxu0 %v583
        %v843 = vpop.f32.mrf.mxu0
        %v844 = vadd.f32 %v658, %v843
        %v845 = vpop.f32.mrf.mxu0
        %846 = vdwg.mxu0
        %v863 = vunpack.c.l.b16 %v632
        %v864 = vunpack.c.l.b16 %v633
        %v865 = vunpack.c.l.b16 %v634
        %v866 = vunpack.c.l.b16 %v635
        %v867 = vunpack.c.l.b16 %v636
        %v868 = vunpack.c.l.b16 %v637
        %v869 = vunpack.c.l.b16 %v638
        %v870 = vunpack.c.l.b16 %v639
        %v871 = vunpack.c.l.b16 %v640
        %v872 = vunpack.c.l.b16 %v641
        %v873 = vunpack.c.l.b16 %v642
        %v874 = vunpack.c.l.b16 %v643
        %v875 = vunpack.c.l.b16 %v644
        %v876 = vunpack.c.l.b16 %v645
        %v877 = vunpack.c.l.b16 %v646
        %v878 = vunpack.c.l.b16 %v647
        %v879 = vpack.c.b16 %v864, %v863
        %v880 = vpack.c.b16 %v866, %v865
        %v881 = vpack.c.b16 %v868, %v867
        %v882 = vpack.c.b16 %v870, %v869
        %v883 = vpack.c.b16 %v872, %v871
        %v884 = vpack.c.b16 %v874, %v873
        %v885 = vpack.c.b16 %v876, %v875
        %v886 = vpack.c.b16 %v878, %v877
        %895 = vmatpush.bf16.msra.mxu0 %v886
        %896 = vmatpush.bf16.msra.mxu0 %v885
        %897 = vmatpush.bf16.msra.mxu0 %v884
        %898 = vmatpush.bf16.msra.mxu0 %v883
        %899 = vmatpush.bf16.msra.mxu0 %v882
        %900 = vmatpush.bf16.msra.mxu0 %v881
        %901 = vmatpush.bf16.msra.mxu0 %v880
        %902 = vmatpush.bf16.msra.mxu0 %v879
        %903 = vmatmul.bf16.gmra.mxu0 %v583
        %v904 = vpop.f32.mrf.mxu0
        %v905 = vadd.f32 %v659, %v904
        %v906 = vpop.f32.mrf.mxu0
        %907 = vdwg.mxu0
        %v908 = vmul.f32 %v722, 0.17677669
        %v909 = vmul.f32 %v783, 0.17677669
        %v910 = vmul.f32 %v844, 0.17677669
        %v911 = vmul.f32 %v905, 0.17677669
        %v912 = vld [vmem:[%s5] sm:$0xf]
        %v913 = vld [vmem:[%s5 + $0x4] sm:$0xf]
        %v914 = vld [vmem:[%s5 + $0x8] sm:$0xf]
        %v915 = vld [vmem:[%s5 + $0xc] sm:$0xf]
        %v916 = vld [vmem:[%s5 + $0x10] sm:$0xf]
        %v917 = vld [vmem:[%s5 + $0x14] sm:$0xf]
        %v918 = vld [vmem:[%s5 + $0x18] sm:$0xf]
        %v919 = vld [vmem:[%s5 + $0x1c] sm:$0xf]
        %v920 = vld [vmem:[%s5 + $0x20] sm:$0xf]
        %v921 = vld [vmem:[%s5 + $0x24] sm:$0xf]
        %v922 = vld [vmem:[%s5 + $0x28] sm:$0xf]
        %v923 = vld [vmem:[%s5 + $0x2c] sm:$0xf]
        %v924 = vld [vmem:[%s5 + $0x30] sm:$0xf]
        %v925 = vld [vmem:[%s5 + $0x34] sm:$0xf]
        %v926 = vld [vmem:[%s5 + $0x38] sm:$0xf]
        %v927 = vld [vmem:[%s5 + $0x3c] sm:$0xf]
        %v928 = vld [vmem:[%s5 + $0x40] sm:$0xf]
        %v929 = vld [vmem:[%s5 + $0x44] sm:$0xf]
        %v930 = vld [vmem:[%s5 + $0x48] sm:$0xf]
        %v931 = vld [vmem:[%s5 + $0x4c] sm:$0xf]
        %v932 = vld [vmem:[%s5 + $0x50] sm:$0xf]
        %v933 = vld [vmem:[%s5 + $0x54] sm:$0xf]
        %v934 = vld [vmem:[%s5 + $0x58] sm:$0xf]
        %v935 = vld [vmem:[%s5 + $0x5c] sm:$0xf]
        %v936 = vld [vmem:[%s5 + $0x60] sm:$0xf]
        %v937 = vld [vmem:[%s5 + $0x64] sm:$0xf]
        %v938 = vld [vmem:[%s5 + $0x68] sm:$0xf]
        %v939 = vld [vmem:[%s5 + $0x6c] sm:$0xf]
        %v940 = vld [vmem:[%s5 + $0x70] sm:$0xf]
        %v941 = vld [vmem:[%s5 + $0x74] sm:$0xf]
        %v942 = vld [vmem:[%s5 + $0x78] sm:$0xf]
        %v943 = vld [vmem:[%s5 + $0x7c] sm:$0xf]
        %v944 = vld [vmem:[%s5 + $0x80] sm:$0xf]
        %v945 = vld [vmem:[%s5 + $0x84] sm:$0xf]
        %v946 = vld [vmem:[%s5 + $0x88] sm:$0xf]
        %v947 = vld [vmem:[%s5 + $0x8c] sm:$0xf]
        %v948 = vld [vmem:[%s5 + $0x90] sm:$0xf]
        %v949 = vld [vmem:[%s5 + $0x94] sm:$0xf]
        %v950 = vld [vmem:[%s5 + $0x98] sm:$0xf]
        %v951 = vld [vmem:[%s5 + $0x9c] sm:$0xf]
        %v952 = vld [vmem:[%s5 + $0xa0] sm:$0xf]
        %v953 = vld [vmem:[%s5 + $0xa4] sm:$0xf]
        %v954 = vld [vmem:[%s5 + $0xa8] sm:$0xf]
        %v955 = vld [vmem:[%s5 + $0xac] sm:$0xf]
        %v956 = vld [vmem:[%s5 + $0xb0] sm:$0xf]
        %v957 = vld [vmem:[%s5 + $0xb4] sm:$0xf]
        %v958 = vld [vmem:[%s5 + $0xb8] sm:$0xf]
        %v959 = vld [vmem:[%s5 + $0xbc] sm:$0xf]
        %v960 = vld [vmem:[%s5 + $0xc0] sm:$0xf]
        %v961 = vld [vmem:[%s5 + $0xc4] sm:$0xf]
        %v962 = vld [vmem:[%s5 + $0xc8] sm:$0xf]
        %v963 = vld [vmem:[%s5 + $0xcc] sm:$0xf]
        %v964 = vld [vmem:[%s5 + $0xd0] sm:$0xf]
        %v965 = vld [vmem:[%s5 + $0xd4] sm:$0xf]
        %v966 = vld [vmem:[%s5 + $0xd8] sm:$0xf]
        %v967 = vld [vmem:[%s5 + $0xdc] sm:$0xf]
        %v968 = vld [vmem:[%s5 + $0xe0] sm:$0xf]
        %v969 = vld [vmem:[%s5 + $0xe4] sm:$0xf]
        %v970 = vld [vmem:[%s5 + $0xe8] sm:$0xf]
        %v971 = vld [vmem:[%s5 + $0xec] sm:$0xf]
        %v972 = vld [vmem:[%s5 + $0xf0] sm:$0xf]
        %v973 = vld [vmem:[%s5 + $0xf4] sm:$0xf]
        %v974 = vld [vmem:[%s5 + $0xf8] sm:$0xf]
        %v975 = vld [vmem:[%s5 + $0xfc] sm:$0xf]
        %v976 = vld [vmem:[%s6] sm:$0x1]
        %v977 = vld [vmem:[%s6 + $0x1] sm:$0x1]
        %v978 = vld [vmem:[%s6 + $0x2] sm:$0x1]
        %v979 = vld [vmem:[%s6 + $0x3] sm:$0x1]
        %v984 = vperm.slane %v976, 0
        %v985 = vperm.slane %v977, 0
        %v986 = vperm.slane %v978, 0
        %v987 = vperm.slane %v979, 0
        %v1008 = vunpack.c.l.b16 %v912
        %v1009 = vunpack.c.l.b16 %v913
        %v1010 = vunpack.c.l.b16 %v914
        %v1011 = vunpack.c.l.b16 %v915
        %v1012 = vunpack.c.l.b16 %v916
        %v1013 = vunpack.c.l.b16 %v917
        %v1014 = vunpack.c.l.b16 %v918
        %v1015 = vunpack.c.l.b16 %v919
        %v1016 = vunpack.c.l.b16 %v920
        %v1017 = vunpack.c.l.b16 %v921
        %v1018 = vunpack.c.l.b16 %v922
        %v1019 = vunpack.c.l.b16 %v923
        %v1020 = vunpack.c.l.b16 %v924
        %v1021 = vunpack.c.l.b16 %v925
        %v1022 = vunpack.c.l.b16 %v926
        %v1023 = vunpack.c.l.b16 %v927
        %v1024 = vpack.c.b16 %v1009, %v1008
        %v1025 = vpack.c.b16 %v1011, %v1010
        %v1026 = vpack.c.b16 %v1013, %v1012
        %v1027 = vpack.c.b16 %v1015, %v1014
        %v1028 = vpack.c.b16 %v1017, %v1016
        %v1029 = vpack.c.b16 %v1019, %v1018
        %v1030 = vpack.c.b16 %v1021, %v1020
        %v1031 = vpack.c.b16 %v1023, %v1022
        %1040 = vmatpush.bf16.msra.mxu0 %v1031
        %1041 = vmatpush.bf16.msra.mxu0 %v1030
        %1042 = vmatpush.bf16.msra.mxu0 %v1029
        %1043 = vmatpush.bf16.msra.mxu0 %v1028
        %1044 = vmatpush.bf16.msra.mxu0 %v1027
        %1045 = vmatpush.bf16.msra.mxu0 %v1026
        %1046 = vmatpush.bf16.msra.mxu0 %v1025
        %1047 = vmatpush.bf16.msra.mxu0 %v1024
        %1048 = vmatmul.bf16.gmra.mxu0 %v583
        %v1049 = vpop.f32.mrf.mxu0
        %v1050 = vadd.f32 %v984, %v1049
        %v1051 = vpop.f32.mrf.mxu0
        %1052 = vdwg.mxu0
        %v1069 = vunpack.c.l.b16 %v928
        %v1070 = vunpack.c.l.b16 %v929
        %v1071 = vunpack.c.l.b16 %v930
        %v1072 = vunpack.c.l.b16 %v931
        %v1073 = vunpack.c.l.b16 %v932
        %v1074 = vunpack.c.l.b16 %v933
        %v1075 = vunpack.c.l.b16 %v934
        %v1076 = vunpack.c.l.b16 %v935
        %v1077 = vunpack.c.l.b16 %v936
        %v1078 = vunpack.c.l.b16 %v937
        %v1079 = vunpack.c.l.b16 %v938
        %v1080 = vunpack.c.l.b16 %v939
        %v1081 = vunpack.c.l.b16 %v940
        %v1082 = vunpack.c.l.b16 %v941
        %v1083 = vunpack.c.l.b16 %v942
        %v1084 = vunpack.c.l.b16 %v943
        %v1085 = vpack.c.b16 %v1070, %v1069
        %v1086 = vpack.c.b16 %v1072, %v1071
        %v1087 = vpack.c.b16 %v1074, %v1073
        %v1088 = vpack.c.b16 %v1076, %v1075
        %v1089 = vpack.c.b16 %v1078, %v1077
        %v1090 = vpack.c.b16 %v1080, %v1079
        %v1091 = vpack.c.b16 %v1082, %v1081
        %v1092 = vpack.c.b16 %v1084, %v1083
        %1101 = vmatpush.bf16.msra.mxu0 %v1092
        %1102 = vmatpush.bf16.msra.mxu0 %v1091
        %1103 = vmatpush.bf16.msra.mxu0 %v1090
        %1104 = vmatpush.bf16.msra.mxu0 %v1089
        %1105 = vmatpush.bf16.msra.mxu0 %v1088
        %1106 = vmatpush.bf16.msra.mxu0 %v1087
        %1107 = vmatpush.bf16.msra.mxu0 %v1086
        %1108 = vmatpush.bf16.msra.mxu0 %v1085
        %1109 = vmatmul.bf16.gmra.mxu0 %v583
        %v1110 = vpop.f32.mrf.mxu0
        %v1111 = vadd.f32 %v985, %v1110
        %v1112 = vpop.f32.mrf.mxu0
        %1113 = vdwg.mxu0
        %v1130 = vunpack.c.l.b16 %v944
        %v1131 = vunpack.c.l.b16 %v945
        %v1132 = vunpack.c.l.b16 %v946
        %v1133 = vunpack.c.l.b16 %v947
        %v1134 = vunpack.c.l.b16 %v948
        %v1135 = vunpack.c.l.b16 %v949
        %v1136 = vunpack.c.l.b16 %v950
        %v1137 = vunpack.c.l.b16 %v951
        %v1138 = vunpack.c.l.b16 %v952
        %v1139 = vunpack.c.l.b16 %v953
        %v1140 = vunpack.c.l.b16 %v954
        %v1141 = vunpack.c.l.b16 %v955
        %v1142 = vunpack.c.l.b16 %v956
        %v1143 = vunpack.c.l.b16 %v957
        %v1144 = vunpack.c.l.b16 %v958
        %v1145 = vunpack.c.l.b16 %v959
        %v1146 = vpack.c.b16 %v1131, %v1130
        %v1147 = vpack.c.b16 %v1133, %v1132
        %v1148 = vpack.c.b16 %v1135, %v1134
        %v1149 = vpack.c.b16 %v1137, %v1136
        %v1150 = vpack.c.b16 %v1139, %v1138
        %v1151 = vpack.c.b16 %v1141, %v1140
        %v1152 = vpack.c.b16 %v1143, %v1142
        %v1153 = vpack.c.b16 %v1145, %v1144
        %1162 = vmatpush.bf16.msra.mxu0 %v1153
        %1163 = vmatpush.bf16.msra.mxu0 %v1152
        %1164 = vmatpush.bf16.msra.mxu0 %v1151
        %1165 = vmatpush.bf16.msra.mxu0 %v1150
        %1166 = vmatpush.bf16.msra.mxu0 %v1149
        %1167 = vmatpush.bf16.msra.mxu0 %v1148
        %1168 = vmatpush.bf16.msra.mxu0 %v1147
        %1169 = vmatpush.bf16.msra.mxu0 %v1146
        %1170 = vmatmul.bf16.gmra.mxu0 %v583
        %v1171 = vpop.f32.mrf.mxu0
        %v1172 = vadd.f32 %v986, %v1171
        %v1173 = vpop.f32.mrf.mxu0
        %1174 = vdwg.mxu0
        %v1191 = vunpack.c.l.b16 %v960
        %v1192 = vunpack.c.l.b16 %v961
        %v1193 = vunpack.c.l.b16 %v962
        %v1194 = vunpack.c.l.b16 %v963
        %v1195 = vunpack.c.l.b16 %v964
        %v1196 = vunpack.c.l.b16 %v965
        %v1197 = vunpack.c.l.b16 %v966
        %v1198 = vunpack.c.l.b16 %v967
        %v1199 = vunpack.c.l.b16 %v968
        %v1200 = vunpack.c.l.b16 %v969
        %v1201 = vunpack.c.l.b16 %v970
        %v1202 = vunpack.c.l.b16 %v971
        %v1203 = vunpack.c.l.b16 %v972
        %v1204 = vunpack.c.l.b16 %v973
        %v1205 = vunpack.c.l.b16 %v974
        %v1206 = vunpack.c.l.b16 %v975
        %v1207 = vpack.c.b16 %v1192, %v1191
        %v1208 = vpack.c.b16 %v1194, %v1193
        %v1209 = vpack.c.b16 %v1196, %v1195
        %v1210 = vpack.c.b16 %v1198, %v1197
        %v1211 = vpack.c.b16 %v1200, %v1199
        %v1212 = vpack.c.b16 %v1202, %v1201
        %v1213 = vpack.c.b16 %v1204, %v1203
        %v1214 = vpack.c.b16 %v1206, %v1205
        %1223 = vmatpush.bf16.msra.mxu0 %v1214
        %1224 = vmatpush.bf16.msra.mxu0 %v1213
        %1225 = vmatpush.bf16.msra.mxu0 %v1212
        %1226 = vmatpush.bf16.msra.mxu0 %v1211
        %1227 = vmatpush.bf16.msra.mxu0 %v1210
        %1228 = vmatpush.bf16.msra.mxu0 %v1209
        %1229 = vmatpush.bf16.msra.mxu0 %v1208
        %1230 = vmatpush.bf16.msra.mxu0 %v1207
        %1231 = vmatmul.bf16.gmra.mxu0 %v583
        %v1232 = vpop.f32.mrf.mxu0
        %v1233 = vadd.f32 %v987, %v1232
        %v1234 = vpop.f32.mrf.mxu0
        %1235 = vdwg.mxu0
        %v1236 = vld [vmem:[%s7] sm:$0xf]
        %v1237 = vld [vmem:[%s7 + $0x4] sm:$0xf]
        %v1238 = vld [vmem:[%s7 + $0x8] sm:$0xf]
        %v1239 = vld [vmem:[%s7 + $0xc] sm:$0xf]
        %v1240 = vld [vmem:[%s7 + $0x10] sm:$0xf]
        %v1241 = vld [vmem:[%s7 + $0x14] sm:$0xf]
        %v1242 = vld [vmem:[%s7 + $0x18] sm:$0xf]
        %v1243 = vld [vmem:[%s7 + $0x1c] sm:$0xf]
        %v1244 = vld [vmem:[%s7 + $0x20] sm:$0xf]
        %v1245 = vld [vmem:[%s7 + $0x24] sm:$0xf]
        %v1246 = vld [vmem:[%s7 + $0x28] sm:$0xf]
        %v1247 = vld [vmem:[%s7 + $0x2c] sm:$0xf]
        %v1248 = vld [vmem:[%s7 + $0x30] sm:$0xf]
        %v1249 = vld [vmem:[%s7 + $0x34] sm:$0xf]
        %v1250 = vld [vmem:[%s7 + $0x38] sm:$0xf]
        %v1251 = vld [vmem:[%s7 + $0x3c] sm:$0xf]
        %v1252 = vld [vmem:[%s7 + $0x40] sm:$0xf]
        %v1253 = vld [vmem:[%s7 + $0x44] sm:$0xf]
        %v1254 = vld [vmem:[%s7 + $0x48] sm:$0xf]
        %v1255 = vld [vmem:[%s7 + $0x4c] sm:$0xf]
        %v1256 = vld [vmem:[%s7 + $0x50] sm:$0xf]
        %v1257 = vld [vmem:[%s7 + $0x54] sm:$0xf]
        %v1258 = vld [vmem:[%s7 + $0x58] sm:$0xf]
        %v1259 = vld [vmem:[%s7 + $0x5c] sm:$0xf]
        %v1260 = vld [vmem:[%s7 + $0x60] sm:$0xf]
        %v1261 = vld [vmem:[%s7 + $0x64] sm:$0xf]
        %v1262 = vld [vmem:[%s7 + $0x68] sm:$0xf]
        %v1263 = vld [vmem:[%s7 + $0x6c] sm:$0xf]
        %v1264 = vld [vmem:[%s7 + $0x70] sm:$0xf]
        %v1265 = vld [vmem:[%s7 + $0x74] sm:$0xf]
        %v1266 = vld [vmem:[%s7 + $0x78] sm:$0xf]
        %v1267 = vld [vmem:[%s7 + $0x7c] sm:$0xf]
        %v1268 = vld [vmem:[%s7 + $0x80] sm:$0xf]
        %v1269 = vld [vmem:[%s7 + $0x84] sm:$0xf]
        %v1270 = vld [vmem:[%s7 + $0x88] sm:$0xf]
        %v1271 = vld [vmem:[%s7 + $0x8c] sm:$0xf]
        %v1272 = vld [vmem:[%s7 + $0x90] sm:$0xf]
        %v1273 = vld [vmem:[%s7 + $0x94] sm:$0xf]
        %v1274 = vld [vmem:[%s7 + $0x98] sm:$0xf]
        %v1275 = vld [vmem:[%s7 + $0x9c] sm:$0xf]
        %v1276 = vld [vmem:[%s7 + $0xa0] sm:$0xf]
        %v1277 = vld [vmem:[%s7 + $0xa4] sm:$0xf]
        %v1278 = vld [vmem:[%s7 + $0xa8] sm:$0xf]
        %v1279 = vld [vmem:[%s7 + $0xac] sm:$0xf]
        %v1280 = vld [vmem:[%s7 + $0xb0] sm:$0xf]
        %v1281 = vld [vmem:[%s7 + $0xb4] sm:$0xf]
        %v1282 = vld [vmem:[%s7 + $0xb8] sm:$0xf]
        %v1283 = vld [vmem:[%s7 + $0xbc] sm:$0xf]
        %v1284 = vld [vmem:[%s7 + $0xc0] sm:$0xf]
        %v1285 = vld [vmem:[%s7 + $0xc4] sm:$0xf]
        %v1286 = vld [vmem:[%s7 + $0xc8] sm:$0xf]
        %v1287 = vld [vmem:[%s7 + $0xcc] sm:$0xf]
        %v1288 = vld [vmem:[%s7 + $0xd0] sm:$0xf]
        %v1289 = vld [vmem:[%s7 + $0xd4] sm:$0xf]
        %v1290 = vld [vmem:[%s7 + $0xd8] sm:$0xf]
        %v1291 = vld [vmem:[%s7 + $0xdc] sm:$0xf]
        %v1292 = vld [vmem:[%s7 + $0xe0] sm:$0xf]
        %v1293 = vld [vmem:[%s7 + $0xe4] sm:$0xf]
        %v1294 = vld [vmem:[%s7 + $0xe8] sm:$0xf]
        %v1295 = vld [vmem:[%s7 + $0xec] sm:$0xf]
        %v1296 = vld [vmem:[%s7 + $0xf0] sm:$0xf]
        %v1297 = vld [vmem:[%s7 + $0xf4] sm:$0xf]
        %v1298 = vld [vmem:[%s7 + $0xf8] sm:$0xf]
        %v1299 = vld [vmem:[%s7 + $0xfc] sm:$0xf]
        %v1300 = vld [vmem:[%s8] sm:$0x1]
        %v1301 = vld [vmem:[%s8 + $0x1] sm:$0x1]
        %v1302 = vld [vmem:[%s8 + $0x2] sm:$0x1]
        %v1303 = vld [vmem:[%s8 + $0x3] sm:$0x1]
        %v1308 = vperm.slane %v1300, 0
        %v1309 = vperm.slane %v1301, 0
        %v1310 = vperm.slane %v1302, 0
        %v1311 = vperm.slane %v1303, 0
        %v1332 = vunpack.c.l.b16 %v1236
        %v1333 = vunpack.c.l.b16 %v1237
        %v1334 = vunpack.c.l.b16 %v1238
        %v1335 = vunpack.c.l.b16 %v1239
        %v1336 = vunpack.c.l.b16 %v1240
        %v1337 = vunpack.c.l.b16 %v1241
        %v1338 = vunpack.c.l.b16 %v1242
        %v1339 = vunpack.c.l.b16 %v1243
        %v1340 = vunpack.c.l.b16 %v1244
        %v1341 = vunpack.c.l.b16 %v1245
        %v1342 = vunpack.c.l.b16 %v1246
        %v1343 = vunpack.c.l.b16 %v1247
        %v1344 = vunpack.c.l.b16 %v1248
        %v1345 = vunpack.c.l.b16 %v1249
        %v1346 = vunpack.c.l.b16 %v1250
        %v1347 = vunpack.c.l.b16 %v1251
        %v1348 = vpack.c.b16 %v1333, %v1332
        %v1349 = vpack.c.b16 %v1335, %v1334
        %v1350 = vpack.c.b16 %v1337, %v1336
        %v1351 = vpack.c.b16 %v1339, %v1338
        %v1352 = vpack.c.b16 %v1341, %v1340
        %v1353 = vpack.c.b16 %v1343, %v1342
        %v1354 = vpack.c.b16 %v1345, %v1344
        %v1355 = vpack.c.b16 %v1347, %v1346
        %1364 = vmatpush.bf16.msra.mxu0 %v1355
        %1365 = vmatpush.bf16.msra.mxu0 %v1354
        %1366 = vmatpush.bf16.msra.mxu0 %v1353
        %1367 = vmatpush.bf16.msra.mxu0 %v1352
        %1368 = vmatpush.bf16.msra.mxu0 %v1351
        %1369 = vmatpush.bf16.msra.mxu0 %v1350
        %1370 = vmatpush.bf16.msra.mxu0 %v1349
        %1371 = vmatpush.bf16.msra.mxu0 %v1348
        %1372 = vmatmul.bf16.gmra.mxu0 %v583
        %v1373 = vpop.f32.mrf.mxu0
        %v1374 = vadd.f32 %v1308, %v1373
        %v1375 = vpop.f32.mrf.mxu0
        %1376 = vdwg.mxu0
        %v1393 = vunpack.c.l.b16 %v1252
        %v1394 = vunpack.c.l.b16 %v1253
        %v1395 = vunpack.c.l.b16 %v1254
        %v1396 = vunpack.c.l.b16 %v1255
        %v1397 = vunpack.c.l.b16 %v1256
        %v1398 = vunpack.c.l.b16 %v1257
        %v1399 = vunpack.c.l.b16 %v1258
        %v1400 = vunpack.c.l.b16 %v1259
        %v1401 = vunpack.c.l.b16 %v1260
        %v1402 = vunpack.c.l.b16 %v1261
        %v1403 = vunpack.c.l.b16 %v1262
        %v1404 = vunpack.c.l.b16 %v1263
        %v1405 = vunpack.c.l.b16 %v1264
        %v1406 = vunpack.c.l.b16 %v1265
        %v1407 = vunpack.c.l.b16 %v1266
        %v1408 = vunpack.c.l.b16 %v1267
        %v1409 = vpack.c.b16 %v1394, %v1393
        %v1410 = vpack.c.b16 %v1396, %v1395
        %v1411 = vpack.c.b16 %v1398, %v1397
        %v1412 = vpack.c.b16 %v1400, %v1399
        %v1413 = vpack.c.b16 %v1402, %v1401
        %v1414 = vpack.c.b16 %v1404, %v1403
        %v1415 = vpack.c.b16 %v1406, %v1405
        %v1416 = vpack.c.b16 %v1408, %v1407
        %1425 = vmatpush.bf16.msra.mxu0 %v1416
        %1426 = vmatpush.bf16.msra.mxu0 %v1415
        %1427 = vmatpush.bf16.msra.mxu0 %v1414
        %1428 = vmatpush.bf16.msra.mxu0 %v1413
        %1429 = vmatpush.bf16.msra.mxu0 %v1412
        %1430 = vmatpush.bf16.msra.mxu0 %v1411
        %1431 = vmatpush.bf16.msra.mxu0 %v1410
        %1432 = vmatpush.bf16.msra.mxu0 %v1409
        %1433 = vmatmul.bf16.gmra.mxu0 %v583
        %v1434 = vpop.f32.mrf.mxu0
        %v1435 = vadd.f32 %v1309, %v1434
        %v1436 = vpop.f32.mrf.mxu0
        %1437 = vdwg.mxu0
        %v1454 = vunpack.c.l.b16 %v1268
        %v1455 = vunpack.c.l.b16 %v1269
        %v1456 = vunpack.c.l.b16 %v1270
        %v1457 = vunpack.c.l.b16 %v1271
        %v1458 = vunpack.c.l.b16 %v1272
        %v1459 = vunpack.c.l.b16 %v1273
        %v1460 = vunpack.c.l.b16 %v1274
        %v1461 = vunpack.c.l.b16 %v1275
        %v1462 = vunpack.c.l.b16 %v1276
        %v1463 = vunpack.c.l.b16 %v1277
        %v1464 = vunpack.c.l.b16 %v1278
        %v1465 = vunpack.c.l.b16 %v1279
        %v1466 = vunpack.c.l.b16 %v1280
        %v1467 = vunpack.c.l.b16 %v1281
        %v1468 = vunpack.c.l.b16 %v1282
        %v1469 = vunpack.c.l.b16 %v1283
        %v1470 = vpack.c.b16 %v1455, %v1454
        %v1471 = vpack.c.b16 %v1457, %v1456
        %v1472 = vpack.c.b16 %v1459, %v1458
        %v1473 = vpack.c.b16 %v1461, %v1460
        %v1474 = vpack.c.b16 %v1463, %v1462
        %v1475 = vpack.c.b16 %v1465, %v1464
        %v1476 = vpack.c.b16 %v1467, %v1466
        %v1477 = vpack.c.b16 %v1469, %v1468
        %1486 = vmatpush.bf16.msra.mxu0 %v1477
        %1487 = vmatpush.bf16.msra.mxu0 %v1476
        %1488 = vmatpush.bf16.msra.mxu0 %v1475
        %1489 = vmatpush.bf16.msra.mxu0 %v1474
        %1490 = vmatpush.bf16.msra.mxu0 %v1473
        %1491 = vmatpush.bf16.msra.mxu0 %v1472
        %1492 = vmatpush.bf16.msra.mxu0 %v1471
        %1493 = vmatpush.bf16.msra.mxu0 %v1470
        %1494 = vmatmul.bf16.gmra.mxu0 %v583
        %v1495 = vpop.f32.mrf.mxu0
        %v1496 = vadd.f32 %v1310, %v1495
        %v1497 = vpop.f32.mrf.mxu0
        %1498 = vdwg.mxu0
        %v1515 = vunpack.c.l.b16 %v1284
        %v1516 = vunpack.c.l.b16 %v1285
        %v1517 = vunpack.c.l.b16 %v1286
        %v1518 = vunpack.c.l.b16 %v1287
        %v1519 = vunpack.c.l.b16 %v1288
        %v1520 = vunpack.c.l.b16 %v1289
        %v1521 = vunpack.c.l.b16 %v1290
        %v1522 = vunpack.c.l.b16 %v1291
        %v1523 = vunpack.c.l.b16 %v1292
        %v1524 = vunpack.c.l.b16 %v1293
        %v1525 = vunpack.c.l.b16 %v1294
        %v1526 = vunpack.c.l.b16 %v1295
        %v1527 = vunpack.c.l.b16 %v1296
        %v1528 = vunpack.c.l.b16 %v1297
        %v1529 = vunpack.c.l.b16 %v1298
        %v1530 = vunpack.c.l.b16 %v1299
        %v1531 = vpack.c.b16 %v1516, %v1515
        %v1532 = vpack.c.b16 %v1518, %v1517
        %v1533 = vpack.c.b16 %v1520, %v1519
        %v1534 = vpack.c.b16 %v1522, %v1521
        %v1535 = vpack.c.b16 %v1524, %v1523
        %v1536 = vpack.c.b16 %v1526, %v1525
        %v1537 = vpack.c.b16 %v1528, %v1527
        %v1538 = vpack.c.b16 %v1530, %v1529
        %1547 = vmatpush.bf16.msra.mxu0 %v1538
        %1548 = vmatpush.bf16.msra.mxu0 %v1537
        %1549 = vmatpush.bf16.msra.mxu0 %v1536
        %1550 = vmatpush.bf16.msra.mxu0 %v1535
        %1551 = vmatpush.bf16.msra.mxu0 %v1534
        %1552 = vmatpush.bf16.msra.mxu0 %v1533
        %1553 = vmatpush.bf16.msra.mxu0 %v1532
        %1554 = vmatpush.bf16.msra.mxu0 %v1531
        %1555 = vmatmul.bf16.gmra.mxu0 %v583
        %v1556 = vpop.f32.mrf.mxu0
        %v1557 = vadd.f32 %v1311, %v1556
        %v1558 = vpop.f32.mrf.mxu0
        %1559 = vdwg.mxu0
        %v1560 = vpack.c.bf16 %v908, %v908
        %v1561 = vpack.c.bf16 %v909, %v909
        %v1562 = vpack.c.bf16 %v910, %v910
        %v1563 = vpack.c.bf16 %v911, %v911
        %v1564 = vpack.c.bf16 %v1050, %v1050
        %v1565 = vpack.c.bf16 %v1111, %v1111
        %v1566 = vpack.c.bf16 %v1172, %v1172
        %v1567 = vpack.c.bf16 %v1233, %v1233
        %vm1568 = vcmask 261120
        %v1570 = vsel %vm1568, %v1560, 0
        %v1573 = vsel %vm1568, %v1564, 0
        %1575 = vmatpush.bf16.xpose.msra.mxu0 0
        %1576 = vmatpush.bf16.xpose.msra.mxu0 0
        %1577 = vmatpush.bf16.xpose.msra.mxu0 0
        %1578 = vmatpush.bf16.xpose.msra.mxu0 0
        %1579 = vmatpush.bf16.xpose.msra.mxu0 0
        %1580 = vmatpush.bf16.xpose.msra.mxu0 0
        %1581 = vmatpush.bf16.xpose.msra.mxu0 0
        %1582 = vmatpush.bf16.xpose.msra.mxu0 %v1573
        %1583 = vmatmul.bf16.gmra.mxu0 %v1570
        %v1584 = vpop.f32.mrf.mxu0
        %v1585 = vadd.f32 0.0, %v1584
        %v1586 = vpop.f32.mrf.mxu0
        %1587 = vdwg.mxu0
        %v1589 = vsel %vm1568, %v1561, 0
        %v1592 = vsel %vm1568, %v1565, 0
        %1594 = vmatpush.bf16.xpose.msra.mxu0 0
        %1595 = vmatpush.bf16.xpose.msra.mxu0 0
        %1596 = vmatpush.bf16.xpose.msra.mxu0 0
        %1597 = vmatpush.bf16.xpose.msra.mxu0 0
        %1598 = vmatpush.bf16.xpose.msra.mxu0 0
        %1599 = vmatpush.bf16.xpose.msra.mxu0 0
        %1600 = vmatpush.bf16.xpose.msra.mxu0 0
        %1601 = vmatpush.bf16.xpose.msra.mxu0 %v1592
        %1602 = vmatmul.bf16.gmra.mxu0 %v1589
        %v1603 = vpop.f32.mrf.mxu0
        %v1604 = vadd.f32 0.0, %v1603
        %v1605 = vpop.f32.mrf.mxu0
        %1606 = vdwg.mxu0
        %v1608 = vsel %vm1568, %v1562, 0
        %v1611 = vsel %vm1568, %v1566, 0
        %1613 = vmatpush.bf16.xpose.msra.mxu0 0
        %1614 = vmatpush.bf16.xpose.msra.mxu0 0
        %1615 = vmatpush.bf16.xpose.msra.mxu0 0
        %1616 = vmatpush.bf16.xpose.msra.mxu0 0
        %1617 = vmatpush.bf16.xpose.msra.mxu0 0
        %1618 = vmatpush.bf16.xpose.msra.mxu0 0
        %1619 = vmatpush.bf16.xpose.msra.mxu0 0
        %1620 = vmatpush.bf16.xpose.msra.mxu0 %v1611
        %1621 = vmatmul.bf16.gmra.mxu0 %v1608
        %v1622 = vpop.f32.mrf.mxu0
        %v1623 = vadd.f32 0.0, %v1622
        %v1624 = vpop.f32.mrf.mxu0
        %1625 = vdwg.mxu0
        %v1627 = vsel %vm1568, %v1563, 0
        %v1630 = vsel %vm1568, %v1567, 0
        %1632 = vmatpush.bf16.xpose.msra.mxu0 0
        %1633 = vmatpush.bf16.xpose.msra.mxu0 0
        %1634 = vmatpush.bf16.xpose.msra.mxu0 0
        %1635 = vmatpush.bf16.xpose.msra.mxu0 0
        %1636 = vmatpush.bf16.xpose.msra.mxu0 0
        %1637 = vmatpush.bf16.xpose.msra.mxu0 0
        %1638 = vmatpush.bf16.xpose.msra.mxu0 0
        %1639 = vmatpush.bf16.xpose.msra.mxu0 %v1630
        %1640 = vmatmul.bf16.gmra.mxu0 %v1627
        %v1641 = vpop.f32.mrf.mxu0
        %v1642 = vadd.f32 0.0, %v1641
        %v1643 = vpop.f32.mrf.mxu0
        %1644 = vdwg.mxu0
        %vm1645 = vcmask 64512
        %v1646 = vsel %vm1645, %v1585, -inf
        %1647 = vmax.xlane.f32.xlu0 %v1646
        %v1648 = vpop.xlane.xlu0 %1647
        %v1649 = vsel %vm1645, %v1604, -inf
        %1650 = vmax.xlane.f32.xlu0 %v1649
        %v1651 = vpop.xlane.xlu0 %1650
        %v1652 = vsel %vm1645, %v1623, -inf
        %1653 = vmax.xlane.f32.xlu0 %v1652
        %v1654 = vpop.xlane.xlu0 %1653
        %v1655 = vsel %vm1645, %v1642, -inf
        %1656 = vmax.xlane.f32.xlu0 %v1655
        %v1657 = vpop.xlane.xlu0 %1656
        %v1658 = vsub.f32 %v1585, %v1648
        %v1659 = vsub.f32 %v1604, %v1651
        %v1660 = vsub.f32 %v1623, %v1654
        %v1661 = vsub.f32 %v1642, %v1657
        %v1662 = vmul.f32 %v1658, 1.442695
        %v1663 = vpow.pop %v1662
        %v1664 = vmul.f32 %v1659, 1.442695
        %v1665 = vpow.pop %v1664
        %v1666 = vmul.f32 %v1660, 1.442695
        %v1667 = vpow.pop %v1666
        %v1668 = vmul.f32 %v1661, 1.442695
        %v1669 = vpow.pop %v1668
        %v1670 = vsel %vm1645, %v1663, 0.0
        %1671 = vadd.xlane.f32.xlu0 %v1670
        %v1672 = vpop.xlane.xlu0 %1671
        %v1673 = vsel %vm1645, %v1665, 0.0
        %1674 = vadd.xlane.f32.xlu0 %v1673
        %v1675 = vpop.xlane.xlu0 %1674
        %v1676 = vsel %vm1645, %v1667, 0.0
        %1677 = vadd.xlane.f32.xlu0 %v1676
        %v1678 = vpop.xlane.xlu0 %1677
        %v1679 = vsel %vm1645, %v1669, 0.0
        %1680 = vadd.xlane.f32.xlu0 %v1679
        %v1681 = vpop.xlane.xlu0 %1680
        %v1682 = vpack.c.bf16 %v1663, %v1663
        %v1683 = vpack.c.bf16 %v1665, %v1665
        %v1684 = vpack.c.bf16 %v1667, %v1667
        %v1685 = vpack.c.bf16 %v1669, %v1669
        %v1686 = vpack.c.bf16 %v1374, %v1374
        %v1687 = vpack.c.bf16 %v1435, %v1435
        %v1688 = vpack.c.bf16 %v1496, %v1496
        %v1689 = vpack.c.bf16 %v1557, %v1557
        %v1691 = vsel %vm1645, %v1682, 0
        %vm1693 = vcmask 1043456
        %v1695 = vsel %vm1693, %v1686, 0
        %1697 = vmatpush.bf16.msra.mxu0 0
        %1698 = vmatpush.bf16.msra.mxu0 0
        %1699 = vmatpush.bf16.msra.mxu0 0
        %1700 = vmatpush.bf16.msra.mxu0 0
        %1701 = vmatpush.bf16.msra.mxu0 0
        %1702 = vmatpush.bf16.msra.mxu0 0
        %1703 = vmatpush.bf16.msra.mxu0 0
        %1704 = vmatpush.bf16.msra.mxu0 %v1695
        %1705 = vmatmul.bf16.gmra.mxu0 %v1691
        %v1706 = vpop.f32.mrf.mxu0
        %v1707 = vadd.f32 0.0, %v1706
        %v1708 = vpop.f32.mrf.mxu0
        %1709 = vdwg.mxu0
        %v1711 = vsel %vm1645, %v1683, 0
        %v1714 = vsel %vm1693, %v1687, 0
        %1716 = vmatpush.bf16.msra.mxu0 0
        %1717 = vmatpush.bf16.msra.mxu0 0
        %1718 = vmatpush.bf16.msra.mxu0 0
        %1719 = vmatpush.bf16.msra.mxu0 0
        %1720 = vmatpush.bf16.msra.mxu0 0
        %1721 = vmatpush.bf16.msra.mxu0 0
        %1722 = vmatpush.bf16.msra.mxu0 0
        %1723 = vmatpush.bf16.msra.mxu0 %v1714
        %1724 = vmatmul.bf16.gmra.mxu0 %v1711
        %v1725 = vpop.f32.mrf.mxu0
        %v1726 = vadd.f32 0.0, %v1725
        %v1727 = vpop.f32.mrf.mxu0
        %1728 = vdwg.mxu0
        %v1730 = vsel %vm1645, %v1684, 0
        %v1733 = vsel %vm1693, %v1688, 0
        %1735 = vmatpush.bf16.msra.mxu0 0
        %1736 = vmatpush.bf16.msra.mxu0 0
        %1737 = vmatpush.bf16.msra.mxu0 0
        %1738 = vmatpush.bf16.msra.mxu0 0
        %1739 = vmatpush.bf16.msra.mxu0 0
        %1740 = vmatpush.bf16.msra.mxu0 0
        %1741 = vmatpush.bf16.msra.mxu0 0
        %1742 = vmatpush.bf16.msra.mxu0 %v1733
        %1743 = vmatmul.bf16.gmra.mxu0 %v1730
        %v1744 = vpop.f32.mrf.mxu0
        %v1745 = vadd.f32 0.0, %v1744
        %v1746 = vpop.f32.mrf.mxu0
        %1747 = vdwg.mxu0
        %v1749 = vsel %vm1645, %v1685, 0
        %v1752 = vsel %vm1693, %v1689, 0
        %1754 = vmatpush.bf16.msra.mxu0 0
        %1755 = vmatpush.bf16.msra.mxu0 0
        %1756 = vmatpush.bf16.msra.mxu0 0
        %1757 = vmatpush.bf16.msra.mxu0 0
        %1758 = vmatpush.bf16.msra.mxu0 0
        %1759 = vmatpush.bf16.msra.mxu0 0
        %1760 = vmatpush.bf16.msra.mxu0 0
        %1761 = vmatpush.bf16.msra.mxu0 %v1752
        %1762 = vmatmul.bf16.gmra.mxu0 %v1749
        %v1763 = vpop.f32.mrf.mxu0
        %v1764 = vadd.f32 0.0, %v1763
        %v1765 = vpop.f32.mrf.mxu0
        %1766 = vdwg.mxu0
        %v1767 = vrcp.pop %v1672
        %v1768 = vmul.f32 %v1672, %v1767
        %v1769 = vsub.f32 1.0, %v1768
        %v1770 = vmul.f32 %v1767, %v1769
        %v1771 = vadd.f32 %v1767, %v1770
        %vm1772 = vweird.f32 %v1672
        %vm1773 = vweird.f32 %v1767
        %vm1774 = vmor %vm1772, %vm1773
        %v1775 = vsel %vm1774, %v1767, %v1771
        %v1776 = vand.u32 2147483647, %v1672
        %vm1777 = vcmp.eq.f32.partialorder %v1776, 8.507059e+37
        %v1778 = vand.u32 %v1672, 2147483648
        %v1779 = vor.u32 1.1754944e-38, %v1778
        %v1780 = vsel %vm1777, %v1779, %v1775
        %v1781 = vmul.f32 %v1707, %v1780
        %v1782 = vrcp.pop %v1675
        %v1783 = vmul.f32 %v1675, %v1782
        %v1784 = vsub.f32 1.0, %v1783
        %v1785 = vmul.f32 %v1782, %v1784
        %v1786 = vadd.f32 %v1782, %v1785
        %vm1787 = vweird.f32 %v1675
        %vm1788 = vweird.f32 %v1782
        %vm1789 = vmor %vm1787, %vm1788
        %v1790 = vsel %vm1789, %v1782, %v1786
        %v1791 = vand.u32 2147483647, %v1675
        %vm1792 = vcmp.eq.f32.partialorder %v1791, 8.507059e+37
        %v1793 = vand.u32 %v1675, 2147483648
        %v1794 = vor.u32 1.1754944e-38, %v1793
        %v1795 = vsel %vm1792, %v1794, %v1790
        %v1796 = vmul.f32 %v1726, %v1795
        %v1797 = vrcp.pop %v1678
        %v1798 = vmul.f32 %v1678, %v1797
        %v1799 = vsub.f32 1.0, %v1798
        %v1800 = vmul.f32 %v1797, %v1799
        %v1801 = vadd.f32 %v1797, %v1800
        %vm1802 = vweird.f32 %v1678
        %vm1803 = vweird.f32 %v1797
        %vm1804 = vmor %vm1802, %vm1803
        %v1805 = vsel %vm1804, %v1797, %v1801
        %v1806 = vand.u32 2147483647, %v1678
        %vm1807 = vcmp.eq.f32.partialorder %v1806, 8.507059e+37
        %v1808 = vand.u32 %v1678, 2147483648
        %v1809 = vor.u32 1.1754944e-38, %v1808
        %v1810 = vsel %vm1807, %v1809, %v1805
        %v1811 = vmul.f32 %v1745, %v1810
        %v1812 = vrcp.pop %v1681
        %v1813 = vmul.f32 %v1681, %v1812
        %v1814 = vsub.f32 1.0, %v1813
        %v1815 = vmul.f32 %v1812, %v1814
        %v1816 = vadd.f32 %v1812, %v1815
        %vm1817 = vweird.f32 %v1681
        %vm1818 = vweird.f32 %v1812
        %vm1819 = vmor %vm1817, %vm1818
        %v1820 = vsel %vm1819, %v1812, %v1816
        %v1821 = vand.u32 2147483647, %v1681
        %vm1822 = vcmp.eq.f32.partialorder %v1821, 8.507059e+37
        %v1823 = vand.u32 %v1681, 2147483648
        %v1824 = vor.u32 1.1754944e-38, %v1823
        %v1825 = vsel %vm1822, %v1824, %v1820
        %v1826 = vmul.f32 %v1764, %v1825
        %v1827 = vpack.c.bf16 %v1781, %v1781
        %v1828 = vpack.c.bf16 %v1796, %v1796
        %v1829 = vpack.c.bf16 %v1811, %v1811
        %v1830 = vpack.c.bf16 %v1826, %v1826
        %v1831 = vld [vmem:[%s9] sm:$0xf]
        %v1832 = vld [vmem:[%s9 + $0x4] sm:$0xf]
        %v1833 = vld [vmem:[%s9 + $0x8] sm:$0xf]
        %v1834 = vld [vmem:[%s9 + $0xc] sm:$0xf]
        %v1835 = vld [vmem:[%s9 + $0x10] sm:$0xf]
        %v1836 = vld [vmem:[%s9 + $0x14] sm:$0xf]
        %v1837 = vld [vmem:[%s9 + $0x18] sm:$0xf]
        %v1838 = vld [vmem:[%s9 + $0x1c] sm:$0xf]
        %v1839 = vld [vmem:[%s9 + $0x20] sm:$0xf]
        %v1840 = vld [vmem:[%s9 + $0x24] sm:$0xf]
        %v1841 = vld [vmem:[%s9 + $0x28] sm:$0xf]
        %v1842 = vld [vmem:[%s9 + $0x2c] sm:$0xf]
        %v1843 = vld [vmem:[%s9 + $0x30] sm:$0xf]
        %v1844 = vld [vmem:[%s9 + $0x34] sm:$0xf]
        %v1845 = vld [vmem:[%s9 + $0x38] sm:$0xf]
        %v1846 = vld [vmem:[%s9 + $0x3c] sm:$0xf]
        %v1851 = vunpack.c.l.b16 %v1831
        %v1852 = vunpack.c.l.b16 %v1832
        %v1853 = vunpack.c.l.b16 %v1833
        %v1854 = vunpack.c.l.b16 %v1834
        %v1855 = vpack.c.b16 %v1852, %v1851
        %v1856 = vpack.c.b16 %v1854, %v1853
        %v1860 = vsel %vm1568, %v1827, 0
        %1862 = vmatpush.bf16.msra.mxu0 0
        %1863 = vmatpush.bf16.msra.mxu0 0
        %1864 = vmatpush.bf16.msra.mxu0 0
        %1865 = vmatpush.bf16.msra.mxu0 0
        %1866 = vmatpush.bf16.msra.mxu0 0
        %1867 = vmatpush.bf16.msra.mxu0 0
        %1868 = vmatpush.bf16.msra.mxu0 %v1856
        %1869 = vmatpush.bf16.msra.mxu0 %v1855
        %1870 = vmatmul.bf16.gmra.mxu0 %v1860
        %v1871 = vpop.f32.mrf.mxu0
        %v1872 = vadd.f32 0.0, %v1871
        %v1873 = vpop.f32.mrf.mxu0
        %1874 = vdwg.mxu0
        %v1879 = vunpack.c.l.b16 %v1835
        %v1880 = vunpack.c.l.b16 %v1836
        %v1881 = vunpack.c.l.b16 %v1837
        %v1882 = vunpack.c.l.b16 %v1838
        %v1883 = vpack.c.b16 %v1880, %v1879
        %v1884 = vpack.c.b16 %v1882, %v1881
        %v1888 = vsel %vm1568, %v1828, 0
        %1890 = vmatpush.bf16.msra.mxu0 0
        %1891 = vmatpush.bf16.msra.mxu0 0
        %1892 = vmatpush.bf16.msra.mxu0 0
        %1893 = vmatpush.bf16.msra.mxu0 0
        %1894 = vmatpush.bf16.msra.mxu0 0
        %1895 = vmatpush.bf16.msra.mxu0 0
        %1896 = vmatpush.bf16.msra.mxu0 %v1884
        %1897 = vmatpush.bf16.msra.mxu0 %v1883
        %1898 = vmatmul.bf16.gmra.mxu0 %v1888
        %v1899 = vpop.f32.mrf.mxu0
        %v1900 = vadd.f32 0.0, %v1899
        %v1901 = vpop.f32.mrf.mxu0
        %1902 = vdwg.mxu0
        %v1907 = vunpack.c.l.b16 %v1839
        %v1908 = vunpack.c.l.b16 %v1840
        %v1909 = vunpack.c.l.b16 %v1841
        %v1910 = vunpack.c.l.b16 %v1842
        %v1911 = vpack.c.b16 %v1908, %v1907
        %v1912 = vpack.c.b16 %v1910, %v1909
        %v1916 = vsel %vm1568, %v1829, 0
        %1918 = vmatpush.bf16.msra.mxu0 0
        %1919 = vmatpush.bf16.msra.mxu0 0
        %1920 = vmatpush.bf16.msra.mxu0 0
        %1921 = vmatpush.bf16.msra.mxu0 0
        %1922 = vmatpush.bf16.msra.mxu0 0
        %1923 = vmatpush.bf16.msra.mxu0 0
        %1924 = vmatpush.bf16.msra.mxu0 %v1912
        %1925 = vmatpush.bf16.msra.mxu0 %v1911
        %1926 = vmatmul.bf16.gmra.mxu0 %v1916
        %v1927 = vpop.f32.mrf.mxu0
        %v1928 = vadd.f32 0.0, %v1927
        %v1929 = vpop.f32.mrf.mxu0
        %1930 = vdwg.mxu0
        %v1935 = vunpack.c.l.b16 %v1843
        %v1936 = vunpack.c.l.b16 %v1844
        %v1937 = vunpack.c.l.b16 %v1845
        %v1938 = vunpack.c.l.b16 %v1846
        %v1939 = vpack.c.b16 %v1936, %v1935
        %v1940 = vpack.c.b16 %v1938, %v1937
        %v1944 = vsel %vm1568, %v1830, 0
        %1946 = vmatpush.bf16.msra.mxu0 0
        %1947 = vmatpush.bf16.msra.mxu0 0
        %1948 = vmatpush.bf16.msra.mxu0 0
        %1949 = vmatpush.bf16.msra.mxu0 0
        %1950 = vmatpush.bf16.msra.mxu0 0
        %1951 = vmatpush.bf16.msra.mxu0 0
        %1952 = vmatpush.bf16.msra.mxu0 %v1940
        %1953 = vmatpush.bf16.msra.mxu0 %v1939
        %1954 = vmatmul.bf16.gmra.mxu0 %v1944
        %v1955 = vpop.f32.mrf.mxu0
        %v1956 = vadd.f32 0.0, %v1955
        %v1957 = vpop.f32.mrf.mxu0
        %1958 = vdwg.mxu0
        %v1959 = vadd.f32 %v1872, %v1900
        %v1960 = vadd.f32 %v1959, %v1928
        %v1961 = vadd.f32 %v1960, %v1956
        %v1962 = vld [vmem:[%s10] sm:$0x1]
        %v1964 = vperm.slane %v1962, 0
        %v1966 = vadd.f32 %v1961, %v1964
        %v1967 = vadd.f32 %v582, %v1966
        %v1968 = vld [vmem:[%s11] sm:$0x1]
        %v1969 = vld [vmem:[%s12] sm:$0x1]
        %1970 = vadd.xlane.f32.xlu0 %v1967
        %v1971 = vpop.xlane.xlu0 %1970
        %v1972 = vmul.f32 %v1971, %v556
        %v1973 = vsub.f32 %v1967, %v1972
        %v1974 = vmul.f32 %v1973, %v1973
        %1975 = vadd.xlane.f32.xlu0 %v1974
        %v1976 = vpop.xlane.xlu0 %1975
        %v1977 = vmul.f32 %v1976, %v556
        %v1978 = vadd.f32 %v1977, 1e-05
        %v1979 = vrsqrt.pop %v1978
        %v1980 = vmul.f32 %v1979, %v1978
        %v1981 = vmul.f32 %v1980, %v1979
        %v1982 = vmul.f32 0.5, %v1981
        %v1983 = vsub.f32 1.5, %v1982
        %v1984 = vmul.f32 %v1979, %v1983
        %vm1985 = vweird.f32 %v1978
        %vm1986 = vweird.f32 %v1979
        %vm1987 = vmor %vm1985, %vm1986
        %v1988 = vsel %vm1987, %v1979, %v1984
        %v1989 = vmul.f32 %v1973, %v1988
        %v1991 = vperm.slane %v1968, 0
        %v1993 = vmul.f32 %v1989, %v1991
        %v1995 = vperm.slane %v1969, 0
        %v1997 = vadd.f32 %v1993, %v1995
        %v1998 = vld [vmem:[%s13] sm:$0xff]
        %v1999 = vld [vmem:[%s13 + $0x8] sm:$0xff]
        %v2000 = vld [vmem:[%s13 + $0x10] sm:$0xff]
        %v2001 = vld [vmem:[%s13 + $0x18] sm:$0xff]
        %v2002 = vld [vmem:[%s13 + $0x20] sm:$0xff]
        %v2003 = vld [vmem:[%s13 + $0x28] sm:$0xff]
        %v2004 = vld [vmem:[%s13 + $0x30] sm:$0xff]
        %v2005 = vld [vmem:[%s13 + $0x38] sm:$0xff]
        %v2006 = vld [vmem:[%s13 + $0x40] sm:$0xff]
        %v2007 = vld [vmem:[%s13 + $0x48] sm:$0xff]
        %v2008 = vld [vmem:[%s13 + $0x50] sm:$0xff]
        %v2009 = vld [vmem:[%s13 + $0x58] sm:$0xff]
        %v2010 = vld [vmem:[%s13 + $0x60] sm:$0xff]
        %v2011 = vld [vmem:[%s13 + $0x68] sm:$0xff]
        %v2012 = vld [vmem:[%s13 + $0x70] sm:$0xff]
        %v2013 = vld [vmem:[%s13 + $0x78] sm:$0xff]
        %v2014 = vld [vmem:[%s13 + $0x80] sm:$0xff]
        %v2015 = vld [vmem:[%s13 + $0x88] sm:$0xff]
        %v2016 = vld [vmem:[%s13 + $0x90] sm:$0xff]
        %v2017 = vld [vmem:[%s13 + $0x98] sm:$0xff]
        %v2018 = vld [vmem:[%s13 + $0xa0] sm:$0xff]
        %v2019 = vld [vmem:[%s13 + $0xa8] sm:$0xff]
        %v2020 = vld [vmem:[%s13 + $0xb0] sm:$0xff]
        %v2021 = vld [vmem:[%s13 + $0xb8] sm:$0xff]
        %v2022 = vld [vmem:[%s13 + $0xc0] sm:$0xff]
        %v2023 = vld [vmem:[%s13 + $0xc8] sm:$0xff]
        %v2024 = vld [vmem:[%s13 + $0xd0] sm:$0xff]
        %v2025 = vld [vmem:[%s13 + $0xd8] sm:$0xff]
        %v2026 = vld [vmem:[%s13 + $0xe0] sm:$0xff]
        %v2027 = vld [vmem:[%s13 + $0xe8] sm:$0xff]
        %v2028 = vld [vmem:[%s13 + $0xf0] sm:$0xff]
        %v2029 = vld [vmem:[%s13 + $0xf8] sm:$0xff]
        %v2030 = vpack.c.bf16 %v1997, %v1997
        %v2031 = vld [vmem:[%s14] sm:$0xf]
        %v2033 = vperm.slane %v2031, 0
        %v2034 = vperm.slane %v2031, 1
        %v2035 = vperm.slane %v2031, 2
        %v2036 = vperm.slane %v2031, 3
        %v2073 = vunpack.c.l.b16 %v1998
        %v2074 = vunpack.c.h.b16 %v1998
        %v2075 = vunpack.c.l.b16 %v1999
        %v2076 = vunpack.c.h.b16 %v1999
        %v2077 = vunpack.c.l.b16 %v2000
        %v2078 = vunpack.c.h.b16 %v2000
        %v2079 = vunpack.c.l.b16 %v2001
        %v2080 = vunpack.c.h.b16 %v2001
        %v2081 = vunpack.c.l.b16 %v2002
        %v2082 = vunpack.c.h.b16 %v2002
        %v2083 = vunpack.c.l.b16 %v2003
        %v2084 = vunpack.c.h.b16 %v2003
        %v2085 = vunpack.c.l.b16 %v2004
        %v2086 = vunpack.c.h.b16 %v2004
        %v2087 = vunpack.c.l.b16 %v2005
        %v2088 = vunpack.c.h.b16 %v2005
        %v2089 = vunpack.c.l.b16 %v2006
        %v2090 = vunpack.c.h.b16 %v2006
        %v2091 = vunpack.c.l.b16 %v2007
        %v2092 = vunpack.c.h.b16 %v2007
        %v2093 = vunpack.c.l.b16 %v2008
        %v2094 = vunpack.c.h.b16 %v2008
        %v2095 = vunpack.c.l.b16 %v2009
        %v2096 = vunpack.c.h.b16 %v2009
        %v2097 = vunpack.c.l.b16 %v2010
        %v2098 = vunpack.c.h.b16 %v2010
        %v2099 = vunpack.c.l.b16 %v2011
        %v2100 = vunpack.c.h.b16 %v2011
        %v2101 = vunpack.c.l.b16 %v2012
        %v2102 = vunpack.c.h.b16 %v2012
        %v2103 = vunpack.c.l.b16 %v2013
        %v2104 = vunpack.c.h.b16 %v2013
        %v2105 = vunpack.c.l.b16 %v2014
        %v2106 = vunpack.c.h.b16 %v2014
        %v2107 = vunpack.c.l.b16 %v2015
        %v2108 = vunpack.c.h.b16 %v2015
        %v2109 = vunpack.c.l.b16 %v2016
        %v2110 = vunpack.c.h.b16 %v2016
        %v2111 = vunpack.c.l.b16 %v2017
        %v2112 = vunpack.c.h.b16 %v2017
        %v2113 = vunpack.c.l.b16 %v2018
        %v2114 = vunpack.c.h.b16 %v2018
        %v2115 = vunpack.c.l.b16 %v2019
        %v2116 = vunpack.c.h.b16 %v2019
        %v2117 = vunpack.c.l.b16 %v2020
        %v2118 = vunpack.c.h.b16 %v2020
        %v2119 = vunpack.c.l.b16 %v2021
        %v2120 = vunpack.c.h.b16 %v2021
        %v2121 = vunpack.c.l.b16 %v2022
        %v2122 = vunpack.c.h.b16 %v2022
        %v2123 = vunpack.c.l.b16 %v2023
        %v2124 = vunpack.c.h.b16 %v2023
        %v2125 = vunpack.c.l.b16 %v2024
        %v2126 = vunpack.c.h.b16 %v2024
        %v2127 = vunpack.c.l.b16 %v2025
        %v2128 = vunpack.c.h.b16 %v2025
        %v2129 = vunpack.c.l.b16 %v2026
        %v2130 = vunpack.c.h.b16 %v2026
        %v2131 = vunpack.c.l.b16 %v2027
        %v2132 = vunpack.c.h.b16 %v2027
        %v2133 = vunpack.c.l.b16 %v2028
        %v2134 = vunpack.c.h.b16 %v2028
        %v2135 = vunpack.c.l.b16 %v2029
        %v2136 = vunpack.c.h.b16 %v2029
        %v2137 = vpack.c.b16 %v2077, %v2073
        %v2138 = vpack.c.b16 %v2078, %v2074
        %v2139 = vpack.c.b16 %v2079, %v2075
        %v2140 = vpack.c.b16 %v2080, %v2076
        %v2141 = vpack.c.b16 %v2085, %v2081
        %v2142 = vpack.c.b16 %v2086, %v2082
        %v2143 = vpack.c.b16 %v2087, %v2083
        %v2144 = vpack.c.b16 %v2088, %v2084
        %v2145 = vpack.c.b16 %v2093, %v2089
        %v2146 = vpack.c.b16 %v2094, %v2090
        %v2147 = vpack.c.b16 %v2095, %v2091
        %v2148 = vpack.c.b16 %v2096, %v2092
        %v2149 = vpack.c.b16 %v2101, %v2097
        %v2150 = vpack.c.b16 %v2102, %v2098
        %v2151 = vpack.c.b16 %v2103, %v2099
        %v2152 = vpack.c.b16 %v2104, %v2100
        %v2153 = vpack.c.b16 %v2109, %v2105
        %v2154 = vpack.c.b16 %v2110, %v2106
        %v2155 = vpack.c.b16 %v2111, %v2107
        %v2156 = vpack.c.b16 %v2112, %v2108
        %v2157 = vpack.c.b16 %v2117, %v2113
        %v2158 = vpack.c.b16 %v2118, %v2114
        %v2159 = vpack.c.b16 %v2119, %v2115
        %v2160 = vpack.c.b16 %v2120, %v2116
        %v2161 = vpack.c.b16 %v2125, %v2121
        %v2162 = vpack.c.b16 %v2126, %v2122
        %v2163 = vpack.c.b16 %v2127, %v2123
        %v2164 = vpack.c.b16 %v2128, %v2124
        %v2165 = vpack.c.b16 %v2133, %v2129
        %v2166 = vpack.c.b16 %v2134, %v2130
        %v2167 = vpack.c.b16 %v2135, %v2131
        %v2168 = vpack.c.b16 %v2136, %v2132
        %2201 = vmatpush.bf16.msra.mxu0 %v2165
        %2202 = vmatpush.bf16.msra.mxu0 %v2161
        %2203 = vmatpush.bf16.msra.mxu0 %v2157
        %2204 = vmatpush.bf16.msra.mxu0 %v2153
        %2205 = vmatpush.bf16.msra.mxu0 %v2149
        %2206 = vmatpush.bf16.msra.mxu0 %v2145
        %2207 = vmatpush.bf16.msra.mxu0 %v2141
        %2208 = vmatpush.bf16.msra.mxu0 %v2137
        %2209 = vmatmul.bf16.gmra.mxu0 %v2030
        %v2210 = vpop.f32.mrf.mxu0
        %v2211 = vadd.f32 %v2033, %v2210
        %v2212 = vpop.f32.mrf.mxu0
        %2213 = vdwg.mxu0
        %2214 = vmatpush.bf16.msra.mxu0 %v2166
        %2215 = vmatpush.bf16.msra.mxu0 %v2162
        %2216 = vmatpush.bf16.msra.mxu0 %v2158
        %2217 = vmatpush.bf16.msra.mxu0 %v2154
        %2218 = vmatpush.bf16.msra.mxu0 %v2150
        %2219 = vmatpush.bf16.msra.mxu0 %v2146
        %2220 = vmatpush.bf16.msra.mxu0 %v2142
        %2221 = vmatpush.bf16.msra.mxu0 %v2138
        %2222 = vmatmul.bf16.gmra.mxu0 %v2030
        %v2223 = vpop.f32.mrf.mxu0
        %v2224 = vadd.f32 %v2034, %v2223
        %v2225 = vpop.f32.mrf.mxu0
        %2226 = vdwg.mxu0
        %2227 = vmatpush.bf16.msra.mxu0 %v2167
        %2228 = vmatpush.bf16.msra.mxu0 %v2163
        %2229 = vmatpush.bf16.msra.mxu0 %v2159
        %2230 = vmatpush.bf16.msra.mxu0 %v2155
        %2231 = vmatpush.bf16.msra.mxu0 %v2151
        %2232 = vmatpush.bf16.msra.mxu0 %v2147
        %2233 = vmatpush.bf16.msra.mxu0 %v2143
        %2234 = vmatpush.bf16.msra.mxu0 %v2139
        %2235 = vmatmul.bf16.gmra.mxu0 %v2030
        %v2236 = vpop.f32.mrf.mxu0
        %v2237 = vadd.f32 %v2035, %v2236
        %v2238 = vpop.f32.mrf.mxu0
        %2239 = vdwg.mxu0
        %2240 = vmatpush.bf16.msra.mxu0 %v2168
        %2241 = vmatpush.bf16.msra.mxu0 %v2164
        %2242 = vmatpush.bf16.msra.mxu0 %v2160
        %2243 = vmatpush.bf16.msra.mxu0 %v2156
        %2244 = vmatpush.bf16.msra.mxu0 %v2152
        %2245 = vmatpush.bf16.msra.mxu0 %v2148
        %2246 = vmatpush.bf16.msra.mxu0 %v2144
        %2247 = vmatpush.bf16.msra.mxu0 %v2140
        %2248 = vmatmul.bf16.gmra.mxu0 %v2030
        %v2249 = vpop.f32.mrf.mxu0
        %v2250 = vadd.f32 %v2036, %v2249
        %v2251 = vpop.f32.mrf.mxu0
        %2252 = vdwg.mxu0
        %v2253 = vmul.f32 %v2211, %v2211
        %v2254 = vmul.f32 %v2224, %v2224
        %v2255 = vmul.f32 %v2237, %v2237
        %v2256 = vmul.f32 %v2250, %v2250
        %v2257 = vmul.f32 %v2211, %v2253
        %v2258 = vmul.f32 %v2224, %v2254
        %v2259 = vmul.f32 %v2237, %v2255
        %v2260 = vmul.f32 %v2250, %v2256
        %v2261 = vmul.f32 %v2257, 0.044715
        %v2262 = vmul.f32 %v2258, 0.044715
        %v2263 = vmul.f32 %v2259, 0.044715
        %v2264 = vmul.f32 %v2260, 0.044715
        %v2265 = vadd.f32 %v2211, %v2261
        %v2266 = vadd.f32 %v2224, %v2262
        %v2267 = vadd.f32 %v2237, %v2263
        %v2268 = vadd.f32 %v2250, %v2264
        %v2269 = vmul.f32 %v2265, 0.7978846
        %v2270 = vmul.f32 %v2266, 0.7978846
        %v2271 = vmul.f32 %v2267, 0.7978846
        %v2272 = vmul.f32 %v2268, 0.7978846
        %v2273 = vtanh.pop %v2269
        %v2274 = vtanh.pop %v2270
        %v2275 = vtanh.pop %v2271
        %v2276 = vtanh.pop %v2272
        %v2277 = vadd.f32 %v2273, 1.0
        %v2278 = vadd.f32 %v2274, 1.0
        %v2279 = vadd.f32 %v2275, 1.0
        %v2280 = vadd.f32 %v2276, 1.0
        %v2281 = vmul.f32 %v2277, 0.5
        %v2282 = vmul.f32 %v2278, 0.5
        %v2283 = vmul.f32 %v2279, 0.5
        %v2284 = vmul.f32 %v2280, 0.5
        %v2285 = vmul.f32 %v2211, %v2281
        %v2286 = vmul.f32 %v2224, %v2282
        %v2287 = vmul.f32 %v2237, %v2283
        %v2288 = vmul.f32 %v2250, %v2284
        %v2289 = vld [vmem:[%s15] sm:$0xf]
        %v2290 = vld [vmem:[%s15 + $0x4] sm:$0xf]
        %v2291 = vld [vmem:[%s15 + $0x8] sm:$0xf]
        %v2292 = vld [vmem:[%s15 + $0xc] sm:$0xf]
        %v2293 = vld [vmem:[%s15 + $0x10] sm:$0xf]
        %v2294 = vld [vmem:[%s15 + $0x14] sm:$0xf]
        %v2295 = vld [vmem:[%s15 + $0x18] sm:$0xf]
        %v2296 = vld [vmem:[%s15 + $0x1c] sm:$0xf]
        %v2297 = vld [vmem:[%s15 + $0x20] sm:$0xf]
        %v2298 = vld [vmem:[%s15 + $0x24] sm:$0xf]
        %v2299 = vld [vmem:[%s15 + $0x28] sm:$0xf]
        %v2300 = vld [vmem:[%s15 + $0x2c] sm:$0xf]
        %v2301 = vld [vmem:[%s15 + $0x30] sm:$0xf]
        %v2302 = vld [vmem:[%s15 + $0x34] sm:$0xf]
        %v2303 = vld [vmem:[%s15 + $0x38] sm:$0xf]
        %v2304 = vld [vmem:[%s15 + $0x3c] sm:$0xf]
        %v2305 = vld [vmem:[%s15 + $0x40] sm:$0xf]
        %v2306 = vld [vmem:[%s15 + $0x44] sm:$0xf]
        %v2307 = vld [vmem:[%s15 + $0x48] sm:$0xf]
        %v2308 = vld [vmem:[%s15 + $0x4c] sm:$0xf]
        %v2309 = vld [vmem:[%s15 + $0x50] sm:$0xf]
        %v2310 = vld [vmem:[%s15 + $0x54] sm:$0xf]
        %v2311 = vld [vmem:[%s15 + $0x58] sm:$0xf]
        %v2312 = vld [vmem:[%s15 + $0x5c] sm:$0xf]
        %v2313 = vld [vmem:[%s15 + $0x60] sm:$0xf]
        %v2314 = vld [vmem:[%s15 + $0x64] sm:$0xf]
        %v2315 = vld [vmem:[%s15 + $0x68] sm:$0xf]
        %v2316 = vld [vmem:[%s15 + $0x6c] sm:$0xf]
        %v2317 = vld [vmem:[%s15 + $0x70] sm:$0xf]
        %v2318 = vld [vmem:[%s15 + $0x74] sm:$0xf]
        %v2319 = vld [vmem:[%s15 + $0x78] sm:$0xf]
        %v2320 = vld [vmem:[%s15 + $0x7c] sm:$0xf]
        %v2321 = vld [vmem:[%s15 + $0x80] sm:$0xf]
        %v2322 = vld [vmem:[%s15 + $0x84] sm:$0xf]
        %v2323 = vld [vmem:[%s15 + $0x88] sm:$0xf]
        %v2324 = vld [vmem:[%s15 + $0x8c] sm:$0xf]
        %v2325 = vld [vmem:[%s15 + $0x90] sm:$0xf]
        %v2326 = vld [vmem:[%s15 + $0x94] sm:$0xf]
        %v2327 = vld [vmem:[%s15 + $0x98] sm:$0xf]
        %v2328 = vld [vmem:[%s15 + $0x9c] sm:$0xf]
        %v2329 = vld [vmem:[%s15 + $0xa0] sm:$0xf]
        %v2330 = vld [vmem:[%s15 + $0xa4] sm:$0xf]
        %v2331 = vld [vmem:[%s15 + $0xa8] sm:$0xf]
        %v2332 = vld [vmem:[%s15 + $0xac] sm:$0xf]
        %v2333 = vld [vmem:[%s15 + $0xb0] sm:$0xf]
        %v2334 = vld [vmem:[%s15 + $0xb4] sm:$0xf]
        %v2335 = vld [vmem:[%s15 + $0xb8] sm:$0xf]
        %v2336 = vld [vmem:[%s15 + $0xbc] sm:$0xf]
        %v2337 = vld [vmem:[%s15 + $0xc0] sm:$0xf]
        %v2338 = vld [vmem:[%s15 + $0xc4] sm:$0xf]
        %v2339 = vld [vmem:[%s15 + $0xc8] sm:$0xf]
        %v2340 = vld [vmem:[%s15 + $0xcc] sm:$0xf]
        %v2341 = vld [vmem:[%s15 + $0xd0] sm:$0xf]
        %v2342 = vld [vmem:[%s15 + $0xd4] sm:$0xf]
        %v2343 = vld [vmem:[%s15 + $0xd8] sm:$0xf]
        %v2344 = vld [vmem:[%s15 + $0xdc] sm:$0xf]
        %v2345 = vld [vmem:[%s15 + $0xe0] sm:$0xf]
        %v2346 = vld [vmem:[%s15 + $0xe4] sm:$0xf]
        %v2347 = vld [vmem:[%s15 + $0xe8] sm:$0xf]
        %v2348 = vld [vmem:[%s15 + $0xec] sm:$0xf]
        %v2349 = vld [vmem:[%s15 + $0xf0] sm:$0xf]
        %v2350 = vld [vmem:[%s15 + $0xf4] sm:$0xf]
        %v2351 = vld [vmem:[%s15 + $0xf8] sm:$0xf]
        %v2352 = vld [vmem:[%s15 + $0xfc] sm:$0xf]
        %v2353 = vpack.c.bf16 %v2285, %v2285
        %v2354 = vpack.c.bf16 %v2286, %v2286
        %v2355 = vpack.c.bf16 %v2287, %v2287
        %v2356 = vpack.c.bf16 %v2288, %v2288
        %v2357 = vld [vmem:[%s16] sm:$0x1]
        %v2359 = vperm.slane %v2357, 0
        %v2425 = vunpack.c.l.b16 %v2289
        %v2426 = vunpack.c.l.b16 %v2290
        %v2427 = vunpack.c.l.b16 %v2291
        %v2428 = vunpack.c.l.b16 %v2292
        %v2429 = vunpack.c.l.b16 %v2293
        %v2430 = vunpack.c.l.b16 %v2294
        %v2431 = vunpack.c.l.b16 %v2295
        %v2432 = vunpack.c.l.b16 %v2296
        %v2433 = vunpack.c.l.b16 %v2297
        %v2434 = vunpack.c.l.b16 %v2298
        %v2435 = vunpack.c.l.b16 %v2299
        %v2436 = vunpack.c.l.b16 %v2300
        %v2437 = vunpack.c.l.b16 %v2301
        %v2438 = vunpack.c.l.b16 %v2302
        %v2439 = vunpack.c.l.b16 %v2303
        %v2440 = vunpack.c.l.b16 %v2304
        %v2441 = vunpack.c.l.b16 %v2305
        %v2442 = vunpack.c.l.b16 %v2306
        %v2443 = vunpack.c.l.b16 %v2307
        %v2444 = vunpack.c.l.b16 %v2308
        %v2445 = vunpack.c.l.b16 %v2309
        %v2446 = vunpack.c.l.b16 %v2310
        %v2447 = vunpack.c.l.b16 %v2311
        %v2448 = vunpack.c.l.b16 %v2312
        %v2449 = vunpack.c.l.b16 %v2313
        %v2450 = vunpack.c.l.b16 %v2314
        %v2451 = vunpack.c.l.b16 %v2315
        %v2452 = vunpack.c.l.b16 %v2316
        %v2453 = vunpack.c.l.b16 %v2317
        %v2454 = vunpack.c.l.b16 %v2318
        %v2455 = vunpack.c.l.b16 %v2319
        %v2456 = vunpack.c.l.b16 %v2320
        %v2457 = vunpack.c.l.b16 %v2321
        %v2458 = vunpack.c.l.b16 %v2322
        %v2459 = vunpack.c.l.b16 %v2323
        %v2460 = vunpack.c.l.b16 %v2324
        %v2461 = vunpack.c.l.b16 %v2325
        %v2462 = vunpack.c.l.b16 %v2326
        %v2463 = vunpack.c.l.b16 %v2327
        %v2464 = vunpack.c.l.b16 %v2328
        %v2465 = vunpack.c.l.b16 %v2329
        %v2466 = vunpack.c.l.b16 %v2330
        %v2467 = vunpack.c.l.b16 %v2331
        %v2468 = vunpack.c.l.b16 %v2332
        %v2469 = vunpack.c.l.b16 %v2333
        %v2470 = vunpack.c.l.b16 %v2334
        %v2471 = vunpack.c.l.b16 %v2335
        %v2472 = vunpack.c.l.b16 %v2336
        %v2473 = vunpack.c.l.b16 %v2337
        %v2474 = vunpack.c.l.b16 %v2338
        %v2475 = vunpack.c.l.b16 %v2339
        %v2476 = vunpack.c.l.b16 %v2340
        %v2477 = vunpack.c.l.b16 %v2341
        %v2478 = vunpack.c.l.b16 %v2342
        %v2479 = vunpack.c.l.b16 %v2343
        %v2480 = vunpack.c.l.b16 %v2344
        %v2481 = vunpack.c.l.b16 %v2345
        %v2482 = vunpack.c.l.b16 %v2346
        %v2483 = vunpack.c.l.b16 %v2347
        %v2484 = vunpack.c.l.b16 %v2348
        %v2485 = vunpack.c.l.b16 %v2349
        %v2486 = vunpack.c.l.b16 %v2350
        %v2487 = vunpack.c.l.b16 %v2351
        %v2488 = vunpack.c.l.b16 %v2352
        %v2489 = vpack.c.b16 %v2426, %v2425
        %v2490 = vpack.c.b16 %v2428, %v2427
        %v2491 = vpack.c.b16 %v2430, %v2429
        %v2492 = vpack.c.b16 %v2432, %v2431
        %v2493 = vpack.c.b16 %v2434, %v2433
        %v2494 = vpack.c.b16 %v2436, %v2435
        %v2495 = vpack.c.b16 %v2438, %v2437
        %v2496 = vpack.c.b16 %v2440, %v2439
        %v2497 = vpack.c.b16 %v2442, %v2441
        %v2498 = vpack.c.b16 %v2444, %v2443
        %v2499 = vpack.c.b16 %v2446, %v2445
        %v2500 = vpack.c.b16 %v2448, %v2447
        %v2501 = vpack.c.b16 %v2450, %v2449
        %v2502 = vpack.c.b16 %v2452, %v2451
        %v2503 = vpack.c.b16 %v2454, %v2453
        %v2504 = vpack.c.b16 %v2456, %v2455
        %v2505 = vpack.c.b16 %v2458, %v2457
        %v2506 = vpack.c.b16 %v2460, %v2459
        %v2507 = vpack.c.b16 %v2462, %v2461
        %v2508 = vpack.c.b16 %v2464, %v2463
        %v2509 = vpack.c.b16 %v2466, %v2465
        %v2510 = vpack.c.b16 %v2468, %v2467
        %v2511 = vpack.c.b16 %v2470, %v2469
        %v2512 = vpack.c.b16 %v2472, %v2471
        %v2513 = vpack.c.b16 %v2474, %v2473
        %v2514 = vpack.c.b16 %v2476, %v2475
        %v2515 = vpack.c.b16 %v2478, %v2477
        %v2516 = vpack.c.b16 %v2480, %v2479
        %v2517 = vpack.c.b16 %v2482, %v2481
        %v2518 = vpack.c.b16 %v2484, %v2483
        %v2519 = vpack.c.b16 %v2486, %v2485
        %v2520 = vpack.c.b16 %v2488, %v2487
        %2553 = vmatpush.bf16.msra.mxu0 %v2496
        %2554 = vmatpush.bf16.msra.mxu0 %v2495
        %2555 = vmatpush.bf16.msra.mxu0 %v2494
        %2556 = vmatpush.bf16.msra.mxu0 %v2493
        %2557 = vmatpush.bf16.msra.mxu0 %v2492
        %2558 = vmatpush.bf16.msra.mxu0 %v2491
        %2559 = vmatpush.bf16.msra.mxu0 %v2490
        %2560 = vmatpush.bf16.msra.mxu0 %v2489
        %2561 = vmatmul.bf16.gmra.mxu0 %v2353
        %v2562 = vpop.f32.mrf.mxu0
        %v2563 = vadd.f32 %v2359, %v2562
        %v2564 = vpop.f32.mrf.mxu0
        %2565 = vdwg.mxu0
        %2566 = vmatpush.bf16.msra.mxu0 %v2504
        %2567 = vmatpush.bf16.msra.mxu0 %v2503
        %2568 = vmatpush.bf16.msra.mxu0 %v2502
        %2569 = vmatpush.bf16.msra.mxu0 %v2501
        %2570 = vmatpush.bf16.msra.mxu0 %v2500
        %2571 = vmatpush.bf16.msra.mxu0 %v2499
        %2572 = vmatpush.bf16.msra.mxu0 %v2498
        %2573 = vmatpush.bf16.msra.mxu0 %v2497
        %2574 = vmatmul.bf16.gmra.mxu0 %v2354
        %v2575 = vpop.f32.mrf.mxu0
        %v2576 = vadd.f32 %v2563, %v2575
        %v2577 = vpop.f32.mrf.mxu0
        %2578 = vdwg.mxu0
        %2579 = vmatpush.bf16.msra.mxu0 %v2512
        %2580 = vmatpush.bf16.msra.mxu0 %v2511
        %2581 = vmatpush.bf16.msra.mxu0 %v2510
        %2582 = vmatpush.bf16.msra.mxu0 %v2509
        %2583 = vmatpush.bf16.msra.mxu0 %v2508
        %2584 = vmatpush.bf16.msra.mxu0 %v2507
        %2585 = vmatpush.bf16.msra.mxu0 %v2506
        %2586 = vmatpush.bf16.msra.mxu0 %v2505
        %2587 = vmatmul.bf16.gmra.mxu0 %v2355
        %v2588 = vpop.f32.mrf.mxu0
        %v2589 = vadd.f32 %v2576, %v2588
        %v2590 = vpop.f32.mrf.mxu0
        %2591 = vdwg.mxu0
        %2592 = vmatpush.bf16.msra.mxu0 %v2520
        %2593 = vmatpush.bf16.msra.mxu0 %v2519
        %2594 = vmatpush.bf16.msra.mxu0 %v2518
        %2595 = vmatpush.bf16.msra.mxu0 %v2517
        %2596 = vmatpush.bf16.msra.mxu0 %v2516
        %2597 = vmatpush.bf16.msra.mxu0 %v2515
        %2598 = vmatpush.bf16.msra.mxu0 %v2514
        %2599 = vmatpush.bf16.msra.mxu0 %v2513
        %2600 = vmatmul.bf16.gmra.mxu0 %v2356
        %v2601 = vpop.f32.mrf.mxu0
        %v2602 = vadd.f32 %v2589, %v2601
        %v2603 = vpop.f32.mrf.mxu0
        %2604 = vdwg.mxu0
        %v2605 = vadd.f32 %v1997, %v2602
        %2606 = vst [vmem:[%s539] sm:$0xff] %v2605
        %s2607 = sand.u32 %s401, 1
        %s2608 = scalar_lea.sflag [#allocation3], %s2607
        %s2609 = sand.u32 %s401, 1
        %s2610 = smul.addr %s2609, 8
        %s2611 = scalar_lea.vmem [#allocation2], %s2610
        // Predicated region
        $region89: #{tpu_custom_call.1} parent=87 // pred_check
          %p2612 = pneg %p411
        $region90: #{tpu_custom_call.1} parent=87 // pred_check_branch
          %2614 = sbr.rel (%p2612) target = $region92
        $region91: #{tpu_custom_call.1} parent=87 // pred_region
          %2616 = vsyncadd %s2608, 0
          %s2617 = smul.addr %s31, 8
          %s2618 = scalar_lea.hbm %s17, %s2617
          %s2620 = sshll.u32 %s2611, 4
          %s2621 = int_to_ptr.vmem [resolvable:$true] %s2620
          %s2622 = sshll.u32 %s2618, 4
          %s2623 = int_to_ptr.hbm [resolvable:$true] %s2622
          %2625 = dma.vmem_to_hbm [thread:$0]  %s2621, 128, %s2623, %s2608
        $region92: #{tpu_custom_call.1} parent=87 // pred_fallthru
          _
      $region88: #{tpu_custom_call.1} parent=5 // pred_fallthru
        _
      %p2626 = scmp.le.s32.totalorder 2, %s26
      // Predicated region
      $region93: #{tpu_custom_call.1} parent=5 // pred_check
        %p2627 = pneg %p2626
      $region94: #{tpu_custom_call.1} parent=5 // pred_check_branch
        %2629 = sbr.rel (%p2627) target = $region96
      $region95: #{tpu_custom_call.1} parent=5 // pred_region
        %s2630 = ssub.s32 %s26, 2
        // Predicated region
        $region97: #{tpu_custom_call.1} parent=95 // pred_check
          %p2631 = pneg %p417
        $region98: #{tpu_custom_call.1} parent=95 // pred_check_branch
          %2633 = sbr.rel (%p2631) target = $region100
        $region99: #{tpu_custom_call.1} parent=95 // pred_region
          %s2634 = sand.u32 %s402, 1
          %s2635 = scalar_lea.sflag [#allocation3], %s2634
          %s2636 = sand.u32 %s402, 1
          %s2637 = smul.addr %s2636, 8
          %s2638 = scalar_lea.vmem [#allocation2], %s2637
          %2640 = dma.done %s2635, 128
        $region100: #{tpu_custom_call.1} parent=95 // pred_fallthru
          _
      $region96: #{tpu_custom_call.1} parent=5 // pred_fallthru
        _
    $region6: #{tpu_custom_call.1} parent=1 // loop_footer
      %s30 = sadd.s32 1, %s26
    $region7: #{tpu_custom_call.1} parent=1 // loop_footer_branch
      %25 = sbr.rel target = $region3
    $region8: #{tpu_custom_call.1} parent=1 // loop_exit
      _
    %2641 = vsyncpa [#allocation3], 1
    %s2642 = scalar_lea.sflag [#allocation3], 1
    %2643 = vsyncpa %s2642, 1

</llo_original>
